<compile_context>
chip_gen: v7x
topology: tpu7x:2x2x1
jax: 0.10.0
libtpu: 0.0.40
codegen_flags: <defaults>
</compile_context>

<pallas_src>
import jax
import jax.numpy as jnp
from jax.experimental import pallas as pl
from jax.experimental.pallas import tpu as pltpu


def _round_up(x, m):
    return ((x + m - 1) // m) * m


def _padded_vmem_bytes(shape, dtype):
    """VMEM footprint with the minor two dims padded to the native (sublane, lane) tile."""
    itemsize = jnp.dtype(dtype).itemsize
    sub = 8 * max(1, 4 // itemsize)          # f32 -> 8 sublanes, bf16 -> 16
    if len(shape) == 0:
        return 4
    if len(shape) == 1:
        return _round_up(shape[0] * itemsize, 512)
    lead = 1
    for s in shape[:-2]:
        lead *= s
    return lead * _round_up(shape[-2], sub) * _round_up(shape[-1], 128) * itemsize


def _conv_bn_relu_kernel(x_main_ref, x_h1_ref, x_h2_ref, w_ref,
                         scale_ref, shift_ref, o_ref):
    # x_main_ref: (1, TD,  H+2, W+2, Cin) bf16  padded-input depth rows [d0, d0+TD)
    # x_h1_ref:   (1, 1,   H+2, W+2, Cin) bf16  padded-input depth row  d0+TD
    # x_h2_ref:   (1, 1,   H+2, W+2, Cin) bf16  padded-input depth row  d0+TD+1
    # w_ref:      (Cout, 27*Cin)          bf16  K ordered as (kd, kh, kw, ci)
    # scale_ref:  (Cout, 1)               f32   gamma / sqrt(var + eps)
    # shift_ref:  (Cout, 1)               f32   beta - mean * scale
    # o_ref:      (1, Cout, TD*H*W)       bf16  lane-dense output tile
    td = x_main_ref.shape[1]
    h = x_main_ref.shape[2] - 2
    w = x_main_ref.shape[3] - 2
    cin = x_main_ref.shape[4]
    cout = w_ref.shape[0]
    rows = td * h * w

    # Depth window including the 2-row halo: (TD+2, H+2, W+2, Cin).
    x_win = jnp.concatenate([x_main_ref[0], x_h1_ref[0], x_h2_ref[0]], axis=0)

    # im2col: 9 spatial (kh, kw) taps concatenated on channels, then the 3 kd taps.
    spat = jnp.concatenate(
        [x_win[:, kh:kh + h, kw:kw + w, :]
         for kh in range(3) for kw in range(3)],
        axis=-1)                                              # (TD+2, H, W, 9*Cin)
    cube = jnp.concatenate([spat[kd:kd + td] for kd in range(3)],
                           axis=-1)                           # (TD, H, W, 27*Cin)
    lhs = cube.reshape(rows, 27 * cin)                        # (rows, 27*Cin)

    # One MXU matmul (q @ k^T form), K = 27*Cin, f32 accumulation (no VMEM RMW):
    #   acc[co, r] = sum_k w_ref[co, k] * lhs[r, k]
    acc = jax.lax.dot_general(
        w_ref[...], lhs,
        dimension_numbers=(((1,), (1,)), ((), ())),
        preferred_element_type=jnp.float32)                   # (Cout, rows)

    # Fused eval-mode BatchNorm + ReLU in f32, then a lane-dense bf16 store.
    y = jnp.maximum(acc * scale_ref[...] + shift_ref[...], 0.0)
    o_ref[...] = y.astype(o_ref.dtype).reshape(1, cout, rows)


def _pick_depth_tile(d, h, w, cin, cout, vmem_cap):
    """Largest depth tile whose (double-buffered) blocks + in-kernel temporaries fit
    a per-core VMEM budget, using padded (sublane x lane tiled) footprints."""
    budget = int(0.40 * vmem_cap)
    bf16, f32 = jnp.bfloat16, jnp.float32

    def footprint(td):
        rows = td * h * w
        blocks = 2 * (  # double-buffered pipeline blocks
            _padded_vmem_bytes((1, td, h + 2, w + 2, cin), bf16)
            + 2 * _padded_vmem_bytes((1, 1, h + 2, w + 2, cin), bf16)
            + _padded_vmem_bytes((cout, 27 * cin), bf16)
            + 2 * _padded_vmem_bytes((cout, 1), f32)
            + _padded_vmem_bytes((1, cout, rows), bf16))
        tmp = (  # in-kernel temporaries: x_win, spat, cube, im2col lhs, f32 epilogue
            _padded_vmem_bytes((td + 2, h + 2, w + 2, cin), bf16)
            + _padded_vmem_bytes((td + 2, h, w, 9 * cin), bf16)
            + _padded_vmem_bytes((td, h, w, 27 * cin), bf16)
            + _padded_vmem_bytes((rows, 27 * cin), bf16)
            + 2 * _padded_vmem_bytes((cout, rows), f32))
        return blocks + 2 * tmp          # 2x headroom for Mosaic-internal copies

    if footprint(d) <= budget:
        return d                          # whole depth in one tile (block == full dim)
    for td in range(d - 1, 0, -1):
        # when TD < D the output block's last dim (TD*H*W) must be a multiple of 128
        if (td * h * w) % 128 == 0 and footprint(td) <= budget:
            return td
    # No legal smaller tile found: fall back to full depth and rely on the raised
    # vmem_limit_bytes (the 2x headroom above is conservative).
    return d


def conv_bn_relu_3d(x_ncdhw, weight_oidhw, gamma, beta, running_mean,
                    running_var, eps=1e-5, out_dtype=jnp.bfloat16):
    """Eval-mode ConvBnReLU3D forward.  Input NCDHW f32/bf16; output NCDHW out_dtype."""
    n, cin, d, h, w = x_ncdhw.shape
    cout = weight_oidhw.shape[0]
    k27 = 27 * cin

    try:
        vmem_cap = int(pltpu.get_tpu_info().vmem_capacity_bytes)
    except Exception:
        vmem_cap = 64 * 1024 * 1024        # v7x per-TensorCore physical VMEM
    vmem_cap = min(vmem_cap, 128 * 1024 * 1024)

    td = _pick_depth_tile(d, h, w, cin, cout, vmem_cap)
    d_pad = _round_up(d, td)
    dt = d_pad // td
    rows = td * h * w

    # --- wrapper glue (single pass; a real pipeline would keep channels-last bf16
    #     activations between layers and skip the transpose / cast entirely) ---
    x_ndhwc = jnp.transpose(x_ncdhw, (0, 2, 3, 4, 1)).astype(jnp.bfloat16)
    # conv halo (1 voxel each side of D/H/W) + round D up to a multiple of TD.
    x_hbm = jnp.pad(
        x_ndhwc, ((0, 0), (1, 1 + d_pad - d), (1, 1), (1, 1), (0, 0)))
    # TODO(synk): the H/W zero halo could be applied in-kernel (masked edge rows) so the
    # padded copy is never materialized in HBM; likewise a fused (W*Cin)-last layout
    # would cut HBM lane padding for very small Cin.

    # (Cout, Cin, kd, kh, kw) -> (Cout, kd, kh, kw, Cin) -> (Cout, 27*Cin)
    w_t = jnp.transpose(weight_oidhw, (0, 2, 3, 4, 1)).reshape(cout, k27)
    w_t = w_t.astype(jnp.bfloat16)

    # Fold eval-mode BatchNorm into an affine epilogue (f32).
    scale = (gamma / jnp.sqrt(running_var + eps)).astype(jnp.float32)
    shift = beta.astype(jnp.float32) - running_mean.astype(jnp.float32) * scale
    scale_col = scale.reshape(cout, 1)
    shift_col = shift.reshape(cout, 1)

    in_specs = [
        # main depth rows [di*TD, di*TD + TD) of the padded input
        pl.BlockSpec((1, td, h + 2, w + 2, cin),
                     lambda ni, di: (ni, di, 0, 0, 0)),
        # depth halo rows di*TD + TD and di*TD + TD + 1 (block size 1 on depth,
        # so the block index IS the element index)
        pl.BlockSpec((1, 1, h + 2, w + 2, cin),
                     lambda ni, di: (ni, di * td + td, 0, 0, 0)),
        pl.BlockSpec((1, 1, h + 2, w + 2, cin),
                     lambda ni, di: (ni, di * td + td + 1, 0, 0, 0)),
        pl.BlockSpec((cout, k27), lambda ni, di: (0, 0)),
        pl.BlockSpec((cout, 1), lambda ni, di: (0, 0)),
        pl.BlockSpec((cout, 1), lambda ni, di: (0, 0)),
    ]
    out_specs = pl.BlockSpec((1, cout, rows), lambda ni, di: (ni, 0, di))

    out_flat = pl.pallas_call(
        _conv_bn_relu_kernel,
        out_shape=jax.ShapeDtypeStruct((n, cout, d_pad * h * w), out_dtype),
        grid=(n, dt),
        in_specs=in_specs,
        out_specs=out_specs,
        compiler_params=pltpu.CompilerParams(
            # disjoint output blocks, no cross-step state -> both axes parallel
            # (megacore-shardable; for N=1 the depth axis still provides parallelism)
            dimension_semantics=("parallel", "parallel"),
            vmem_limit_bytes=int(vmem_cap * 0.9)),
    )(x_hbm, x_hbm, x_hbm, w_t, scale_col, shift_col)

    # (N, Cout, D_pad*H*W) is already NCDHW up to a metadata reshape.
    out = out_flat.reshape(n, cout, d_pad, h, w)
    if d_pad != d:
        out = out[:, :, :d]
    return out


def _reference(x_ncdhw, weight_oidhw, gamma, beta, running_mean, running_var,
               eps=1e-5):
    y = jax.lax.conv_general_dilated(
        x_ncdhw.astype(jnp.float32), weight_oidhw.astype(jnp.float32),
        window_strides=(1, 1, 1), padding=[(1, 1)] * 3,
        dimension_numbers=("NCDHW", "OIDHW", "NCDHW"),
        precision=jax.lax.Precision.HIGHEST)
    scale = gamma / jnp.sqrt(running_var + eps)
    shift = beta - running_mean * scale
    y = y * scale[None, :, None, None, None] + shift[None, :, None, None, None]
    return jnp.maximum(y, 0.0)


if __name__ == "__main__":
    key = jax.random.PRNGKey(0)
    k_x, k_w, k_g, k_b, k_m, k_v = jax.random.split(key, 6)

    # small shapes: batch=2, in_channels=4, out_channels=8, D=H=W=8
    N, Cin, Cout, D, H, W = 2, 4, 8, 8, 8, 8

    x = jax.random.normal(k_x, (N, Cin, D, H, W), dtype=jnp.float32)
    weight = jax.random.normal(k_w, (Cout, Cin, 3, 3, 3), dtype=jnp.float32) * 0.1
    gamma = jax.random.uniform(k_g, (Cout,), minval=0.5, maxval=1.5)
    beta = jax.random.normal(k_b, (Cout,)) * 0.1
    running_mean = jax.random.normal(k_m, (Cout,)) * 0.1
    running_var = jax.random.uniform(k_v, (Cout,), minval=0.5, maxval=1.5)
    # NOTE: BatchNorm3d is applied in eval mode (running stats) — the deterministic
    # inference semantics of the module.
    # TODO(synk): training-mode BN (batch statistics + running-stat update) not implemented.

    out = conv_bn_relu_3d(x, weight, gamma, beta, running_mean, running_var)
    out = jax.block_until_ready(out)

    ref = _reference(x, weight, gamma, beta, running_mean, running_var)
    assert out.shape == (N, Cout, D, H, W)
    out_f32 = out.astype(jnp.float32)
    max_err = float(jnp.max(jnp.abs(out_f32 - ref)))
    # bf16 matmul operands + bf16 output (f32 accumulation) vs a pure-f32 reference
    # -> loose tolerance (inference precision)
    assert bool(jnp.allclose(out_f32, ref, atol=1e-1, rtol=5e-2)), max_err
    print("KERNEL_OK")
</pallas_src>

<mosaic_0001>
module attributes {stable_mosaic.version = 11 : i64} {
  func.func @_conv_bn_relu_kernel(%arg0: i32, %arg1: i32, %arg2: memref<1x8x10x10x4xbf16, #tpu.memory_space<vmem>>, %arg3: memref<1x1x10x10x4xbf16, #tpu.memory_space<vmem>>, %arg4: memref<1x1x10x10x4xbf16, #tpu.memory_space<vmem>>, %arg5: memref<8x108xbf16, #tpu.memory_space<vmem>>, %arg6: memref<8x1xf32, #tpu.memory_space<vmem>>, %arg7: memref<8x1xf32, #tpu.memory_space<vmem>>, %arg8: memref<1x8x512xbf16, #tpu.memory_space<vmem>>) attributes {dimension_semantics = [#tpu.dimension_semantics<parallel>, #tpu.dimension_semantics<parallel>], iteration_bounds = array<i64: 2, 1>, scalar_prefetch = 0 : i64, scratch_operands = 0 : i64, tpu.core_type = #tpu.core_type<tc>, window_params = [{transform_indices = @transform_0, window_bounds = array<i64: 1, 8, 10, 10, 4>}, {transform_indices = @transform_1, window_bounds = array<i64: 1, 1, 10, 10, 4>}, {transform_indices = @transform_2, window_bounds = array<i64: 1, 1, 10, 10, 4>}, {pipeline_mode = #tpu.pipeline_mode<synchronous>, transform_indices = @transform_3, window_bounds = array<i64: 8, 108>}, {pipeline_mode = #tpu.pipeline_mode<synchronous>, transform_indices = @transform_4, window_bounds = array<i64: 8, 1>}, {pipeline_mode = #tpu.pipeline_mode<synchronous>, transform_indices = @transform_5, window_bounds = array<i64: 8, 1>}, {transform_indices = @transform_6, window_bounds = array<i64: 1, 8, 512>}]} {
    %c0 = arith.constant 0 : index
    %c0_0 = arith.constant 0 : index
    %c0_1 = arith.constant 0 : index
    %c0_2 = arith.constant 0 : index
    %c0_3 = arith.constant 0 : index
    %0 = vector.load %arg2[%c0, %c0_0, %c0_1, %c0_2, %c0_3] : memref<1x8x10x10x4xbf16, #tpu.memory_space<vmem>>, vector<1x8x10x10x4xbf16>
    %1 = vector.shape_cast %0 : vector<1x8x10x10x4xbf16> to vector<8x10x10x4xbf16>
    %c0_4 = arith.constant 0 : index
    %c0_5 = arith.constant 0 : index
    %c0_6 = arith.constant 0 : index
    %c0_7 = arith.constant 0 : index
    %c0_8 = arith.constant 0 : index
    %2 = vector.load %arg3[%c0_4, %c0_5, %c0_6, %c0_7, %c0_8] : memref<1x1x10x10x4xbf16, #tpu.memory_space<vmem>>, vector<1x1x10x10x4xbf16>
    %3 = vector.shape_cast %2 : vector<1x1x10x10x4xbf16> to vector<1x10x10x4xbf16>
    %c0_9 = arith.constant 0 : index
    %c0_10 = arith.constant 0 : index
    %c0_11 = arith.constant 0 : index
    %c0_12 = arith.constant 0 : index
    %c0_13 = arith.constant 0 : index
    %4 = vector.load %arg4[%c0_9, %c0_10, %c0_11, %c0_12, %c0_13] : memref<1x1x10x10x4xbf16, #tpu.memory_space<vmem>>, vector<1x1x10x10x4xbf16>
    %5 = vector.shape_cast %4 : vector<1x1x10x10x4xbf16> to vector<1x10x10x4xbf16>
    %6 = tpu.concatenate %1, %3, %5 in 0 : vector<8x10x10x4xbf16>, vector<1x10x10x4xbf16>, vector<1x10x10x4xbf16> -> vector<10x10x10x4xbf16>
    %7 = vector.extract_strided_slice %6 {offsets = [0, 0, 0, 0], sizes = [10, 8, 8, 4], strides = [1, 1, 1, 1]} : vector<10x10x10x4xbf16> to vector<10x8x8x4xbf16>
    %8 = vector.extract_strided_slice %6 {offsets = [0, 0, 1, 0], sizes = [10, 8, 8, 4], strides = [1, 1, 1, 1]} : vector<10x10x10x4xbf16> to vector<10x8x8x4xbf16>
    %9 = vector.extract_strided_slice %6 {offsets = [0, 0, 2, 0], sizes = [10, 8, 8, 4], strides = [1, 1, 1, 1]} : vector<10x10x10x4xbf16> to vector<10x8x8x4xbf16>
    %10 = vector.extract_strided_slice %6 {offsets = [0, 1, 0, 0], sizes = [10, 8, 8, 4], strides = [1, 1, 1, 1]} : vector<10x10x10x4xbf16> to vector<10x8x8x4xbf16>
    %11 = vector.extract_strided_slice %6 {offsets = [0, 1, 1, 0], sizes = [10, 8, 8, 4], strides = [1, 1, 1, 1]} : vector<10x10x10x4xbf16> to vector<10x8x8x4xbf16>
    %12 = vector.extract_strided_slice %6 {offsets = [0, 1, 2, 0], sizes = [10, 8, 8, 4], strides = [1, 1, 1, 1]} : vector<10x10x10x4xbf16> to vector<10x8x8x4xbf16>
    %13 = vector.extract_strided_slice %6 {offsets = [0, 2, 0, 0], sizes = [10, 8, 8, 4], strides = [1, 1, 1, 1]} : vector<10x10x10x4xbf16> to vector<10x8x8x4xbf16>
    %14 = vector.extract_strided_slice %6 {offsets = [0, 2, 1, 0], sizes = [10, 8, 8, 4], strides = [1, 1, 1, 1]} : vector<10x10x10x4xbf16> to vector<10x8x8x4xbf16>
    %15 = vector.extract_strided_slice %6 {offsets = [0, 2, 2, 0], sizes = [10, 8, 8, 4], strides = [1, 1, 1, 1]} : vector<10x10x10x4xbf16> to vector<10x8x8x4xbf16>
    %16 = tpu.concatenate %7, %8, %9, %10, %11, %12, %13, %14, %15 in 3 : vector<10x8x8x4xbf16>, vector<10x8x8x4xbf16>, vector<10x8x8x4xbf16>, vector<10x8x8x4xbf16>, vector<10x8x8x4xbf16>, vector<10x8x8x4xbf16>, vector<10x8x8x4xbf16>, vector<10x8x8x4xbf16>, vector<10x8x8x4xbf16> -> vector<10x8x8x36xbf16>
    %17 = vector.extract_strided_slice %16 {offsets = [0, 0, 0, 0], sizes = [8, 8, 8, 36], strides = [1, 1, 1, 1]} : vector<10x8x8x36xbf16> to vector<8x8x8x36xbf16>
    %18 = vector.extract_strided_slice %16 {offsets = [1, 0, 0, 0], sizes = [8, 8, 8, 36], strides = [1, 1, 1, 1]} : vector<10x8x8x36xbf16> to vector<8x8x8x36xbf16>
    %19 = vector.extract_strided_slice %16 {offsets = [2, 0, 0, 0], sizes = [8, 8, 8, 36], strides = [1, 1, 1, 1]} : vector<10x8x8x36xbf16> to vector<8x8x8x36xbf16>
    %20 = tpu.concatenate %17, %18, %19 in 3 : vector<8x8x8x36xbf16>, vector<8x8x8x36xbf16>, vector<8x8x8x36xbf16> -> vector<8x8x8x108xbf16>
    %21 = vector.shape_cast %20 : vector<8x8x8x108xbf16> to vector<512x108xbf16>
    %c0_14 = arith.constant 0 : index
    %c0_15 = arith.constant 0 : index
    %22 = vector.load %arg5[%c0_14, %c0_15] : memref<8x108xbf16, #tpu.memory_space<vmem>>, vector<8x108xbf16>
    %cst = arith.constant dense<0.000000e+00> : vector<8x512xf32>
    %23 = tpu.matmul %22, %21, %cst {dimension_numbers = #tpu.dot_dimension_numbers<[1], [1], [0], [0], [0, 0, 1, 0], [], []>} : vector<8x108xbf16>, vector<512x108xbf16>, vector<8x512xf32> -> vector<8x512xf32>
    %c0_16 = arith.constant 0 : index
    %c0_17 = arith.constant 0 : index
    %24 = vector.load %arg6[%c0_16, %c0_17] : memref<8x1xf32, #tpu.memory_space<vmem>>, vector<8x1xf32>
    %25 = vector.broadcast %24 : vector<8x1xf32> to vector<8x512xf32>
    %26 = arith.mulf %23, %25 : vector<8x512xf32>
    %c0_18 = arith.constant 0 : index
    %c0_19 = arith.constant 0 : index
    %27 = vector.load %arg7[%c0_18, %c0_19] : memref<8x1xf32, #tpu.memory_space<vmem>>, vector<8x1xf32>
    %28 = vector.broadcast %27 : vector<8x1xf32> to vector<8x512xf32>
    %29 = arith.addf %26, %28 : vector<8x512xf32>
    %cst_20 = arith.constant 0.000000e+00 : f32
    %30 = vector.broadcast %cst_20 : f32 to vector<8x512xf32>
    %31 = arith.maximumf %29, %30 : vector<8x512xf32>
    %32 = arith.truncf %31 : vector<8x512xf32> to vector<8x512xbf16>
    %33 = vector.shape_cast %32 : vector<8x512xbf16> to vector<1x8x512xbf16>
    %c0_21 = arith.constant 0 : index
    %c0_22 = arith.constant 0 : index
    %c0_23 = arith.constant 0 : index
    %34 = vector.load %arg8[%c0_21, %c0_22, %c0_23] : memref<1x8x512xbf16, #tpu.memory_space<vmem>>, vector<1x8x512xbf16>
    tpu.vector_store %arg8[%c0_21, %c0_22, %c0_23], %33 {strides = array<i32>} : memref<1x8x512xbf16, #tpu.memory_space<vmem>>, vector<1x8x512xbf16>,
    return
  }
  func.func @transform_0(%arg0: i32, %arg1: i32) -> (i32, i32, i32, i32, i32) {
    %c0_i32 = arith.constant 0 : i32
    %c0_i32_0 = arith.constant 0 : i32
    %c0_i32_1 = arith.constant 0 : i32
    %c0_i32_2 = arith.constant 0 : i32
    return %arg0, %arg1, %c0_i32, %c0_i32_0, %c0_i32_1 : i32, i32, i32, i32, i32
  }
  func.func @transform_1(%arg0: i32, %arg1: i32) -> (i32, i32, i32, i32, i32) {
    %c8_i32 = arith.constant 8 : i32
    %0 = arith.muli %arg1, %c8_i32 : i32
    %c8_i32_0 = arith.constant 8 : i32
    %1 = arith.addi %0, %c8_i32_0 : i32
    %c0_i32 = arith.constant 0 : i32
    %c0_i32_1 = arith.constant 0 : i32
    %c0_i32_2 = arith.constant 0 : i32
    %c0_i32_3 = arith.constant 0 : i32
    return %arg0, %1, %c0_i32, %c0_i32_1, %c0_i32_2 : i32, i32, i32, i32, i32
  }
  func.func @transform_2(%arg0: i32, %arg1: i32) -> (i32, i32, i32, i32, i32) {
    %c8_i32 = arith.constant 8 : i32
    %0 = arith.muli %arg1, %c8_i32 : i32
    %c8_i32_0 = arith.constant 8 : i32
    %1 = arith.addi %0, %c8_i32_0 : i32
    %c1_i32 = arith.constant 1 : i32
    %2 = arith.addi %1, %c1_i32 : i32
    %c0_i32 = arith.constant 0 : i32
    %c0_i32_1 = arith.constant 0 : i32
    %c0_i32_2 = arith.constant 0 : i32
    %c0_i32_3 = arith.constant 0 : i32
    return %arg0, %2, %c0_i32, %c0_i32_1, %c0_i32_2 : i32, i32, i32, i32, i32
  }
  func.func @transform_3(%arg0: i32, %arg1: i32) -> (i32, i32) {
    %c0_i32 = arith.constant 0 : i32
    %c0_i32_0 = arith.constant 0 : i32
    %c0_i32_1 = arith.constant 0 : i32
    return %c0_i32, %c0_i32_0 : i32, i32
  }
  func.func @transform_4(%arg0: i32, %arg1: i32) -> (i32, i32) {
    %c0_i32 = arith.constant 0 : i32
    %c0_i32_0 = arith.constant 0 : i32
    %c0_i32_1 = arith.constant 0 : i32
    return %c0_i32, %c0_i32_0 : i32, i32
  }
  func.func @transform_5(%arg0: i32, %arg1: i32) -> (i32, i32) {
    %c0_i32 = arith.constant 0 : i32
    %c0_i32_0 = arith.constant 0 : i32
    %c0_i32_1 = arith.constant 0 : i32
    return %c0_i32, %c0_i32_0 : i32, i32
  }
  func.func @transform_6(%arg0: i32, %arg1: i32) -> (i32, i32, i32) {
    %c0_i32 = arith.constant 0 : i32
    %c0_i32_0 = arith.constant 0 : i32
    return %arg0, %c0_i32, %arg1 : i32, i32, i32
  }
}

</mosaic_0001>

<llo_original>
// kernel: tpu_custom_call.1
$region0: #{tpu_custom_call.1}
  #allocation0 [shape = 'u32[]', space=smem, size = 0x4, offset = 0x4, fixed_abs, tag = 'smem constant byte address 0x4 - core index']
  #allocation1 [shape = 'u32[144,128]{1,0:T(1,128)}', space=vmem, size = 0x12000, scoped, tag = 'internal scratch']
  %s0 = inlined_call_operand.vmem [shape: bf16[2,10,10,10,4], index: 0, kind: input, shape index: {}]
  %s1 = inlined_call_operand.vmem [shape: bf16[2,10,10,10,4], index: 1, kind: input, shape index: {}]
  %s2 = inlined_call_operand.vmem [shape: bf16[2,10,10,10,4], index: 2, kind: input, shape index: {}]
  %s3 = inlined_call_operand.vmem [shape: bf16[8,108], index: 3, kind: input, shape index: {}]
  %s4 = inlined_call_operand.vmem [shape: f32[8,1], index: 4, kind: input, shape index: {}]
  %s5 = inlined_call_operand.vmem [shape: f32[8,1], index: 5, kind: input, shape index: {}]
  %s6 = inlined_call_operand.hbm [shape: bf16[2,8,512], index: 6, kind: output, shape index: {}]
  %s7 = sld [smem:[#allocation0]]
  $region57: #{tpu_custom_call.1} parent=0
    _
  %s9 = ssub.s32 1, %s7
  %s10 = scalar_select 0, %s9, %s7
  $region1: #{tpu_custom_call.1} parent=0
    #allocation2 [shape = 'u8[16384]{0}', space=vmem, size = 0x4000, scoped, tag = 'output window, operand 0']
    #allocation3 [shape = 's32[2]{0}', space=sflag, size = 0x8, scoped, tag = 'scoped memory for tpu_custom_call.1']
    %11 = vsyncpa [#allocation3], 0
    %s12 = scalar_lea.sflag [#allocation3], 1
    %13 = vsyncpa %s12, 0
    loop: start=0, step=1, limit=4
    $region2: #{tpu_custom_call.1} parent=1 // loop_pre_header
      _
    $region3: #{tpu_custom_call.1} parent=1 // loop_header
      %s15 = sphi 0, %s19
      %p16 = scmp.ge.s32.totalorder %s15, 4
      %s22 = sphi 0, %s34
      %s23 = sphi 0, %s30
      %s24 = sphi 0, %s22
      %s25 = sphi 0, %s23
      %s26 = sphi 0, %s24
      %s27 = sphi 0, %s25
      %s39 = sphi 0, %s41
      %s42 = sphi 0, %s39
      %s43 = sphi 0, %s42
      %s59 = sphi 0, %s43
      %s71 = sphi 0, %s73
      %s74 = sphi 0, %s71
      %s75 = sphi 0, %s74
      %s91 = sphi 0, %s75
      %s103 = sphi 0, %s105
      %s106 = sphi 0, %s103
      %s107 = sphi 0, %s106
      %s123 = sphi 0, %s107
      %s127 = sphi 0, %s127
      %s129 = sphi 0, %s127
      %s130 = sphi 0, %s129
      %s144 = sphi 0, %s130
      %s148 = sphi 0, %s148
      %s150 = sphi 0, %s148
      %s151 = sphi 0, %s150
      %s165 = sphi 0, %s151
      %s169 = sphi 0, %s169
      %s171 = sphi 0, %s169
      %s172 = sphi 0, %s171
      %s186 = sphi 0, %s172
      %s194 = sphi 0, %s196
      %s197 = sphi 0, %s194
      %s198 = sphi 0, %s197
      %s214 = sphi 0, %s198
    $region4: #{tpu_custom_call.1} parent=1 // loop_header_branch
      %18 = sbr.rel (%p16) target = $region8
    $region5: #{tpu_custom_call.1} parent=1 // loop_body
      %s20 = ssub.s32 %s15, 1
      %s21 = ssub.s32 %s15, 2
      %s28 = sadd.s32 1, %s23
      %p29 = scmp.ge.s32.totalorder %s28, 1
      %s30 = scalar_select %p29, 0, %s28
      %s31 = sadd.s32 1, %s22
      %s32 = scalar_select %p29, %s31, %s22
      %p33 = scmp.ge.s32.totalorder %s32, 2
      %s34 = scalar_select %p33, 0, %s32
      %s35 = ssub.s32 %s22, %s34
      %s36 = ssub.s32 %s23, %s30
      %s37 = sor.u32 %s35, %s36
      %p38 = scmp.eq.s32.totalorder %s37, 0
      %s40 = sadd.s32 %s39, 1
      %s41 = scalar_select %p38, %s39, %s40
      %p44 = pneg %p38
      %p45 = scmp.eq.s32.totalorder %s15, 1
      %p46 = por %p44, %p45
      %p47 = scmp.ne.s32.totalorder %s39, %s42
      %p48 = scmp.eq.s32.totalorder %s15, 0
      %p49 = por %p47, %p48
      %p50 = scmp.ne.s32.totalorder %s39, %s42
      %p51 = scmp.eq.s32.totalorder %s20, 1
      %p52 = por %p50, %p51
      %p53 = scmp.ne.s32.totalorder %s42, %s43
      %p54 = scmp.eq.s32.totalorder %s20, 0
      %p55 = por %p53, %p54
      %p56 = scmp.ne.s32.totalorder %s42, %s43
      %p57 = scmp.eq.s32.totalorder %s21, 1
      %p58 = por %p56, %p57
      %p60 = scmp.ne.s32.totalorder %s43, %s59
      %p61 = scmp.eq.s32.totalorder %s21, 0
      %p62 = por %p60, %p61
      %s63 = smul.u32 %s23, 8
      %s64 = sadd.s32 %s63, 8
      %s65 = smul.u32 %s30, 8
      %s66 = sadd.s32 %s65, 8
      %s67 = ssub.s32 %s22, %s34
      %s68 = ssub.s32 %s64, %s66
      %s69 = sor.u32 %s67, %s68
      %p70 = scmp.eq.s32.totalorder %s69, 0
      %s72 = sadd.s32 %s71, 1
      %s73 = scalar_select %p70, %s71, %s72
      %p76 = pneg %p70
      %p77 = scmp.eq.s32.totalorder %s15, 1
      %p78 = por %p76, %p77
      %p79 = scmp.ne.s32.totalorder %s71, %s74
      %p80 = scmp.eq.s32.totalorder %s15, 0
      %p81 = por %p79, %p80
      %p82 = scmp.ne.s32.totalorder %s71, %s74
      %p83 = scmp.eq.s32.totalorder %s20, 1
      %p84 = por %p82, %p83
      %p85 = scmp.ne.s32.totalorder %s74, %s75
      %p86 = scmp.eq.s32.totalorder %s20, 0
      %p87 = por %p85, %p86
      %p88 = scmp.ne.s32.totalorder %s74, %s75
      %p89 = scmp.eq.s32.totalorder %s21, 1
      %p90 = por %p88, %p89
      %p92 = scmp.ne.s32.totalorder %s75, %s91
      %p93 = scmp.eq.s32.totalorder %s21, 0
      %p94 = por %p92, %p93
      %s95 = smul.u32 %s23, 8
      %s96 = sadd.s32 %s95, 9
      %s97 = smul.u32 %s30, 8
      %s98 = sadd.s32 %s97, 9
      %s99 = ssub.s32 %s22, %s34
      %s100 = ssub.s32 %s96, %s98
      %s101 = sor.u32 %s99, %s100
      %p102 = scmp.eq.s32.totalorder %s101, 0
      %s104 = sadd.s32 %s103, 1
      %s105 = scalar_select %p102, %s103, %s104
      %p108 = pneg %p102
      %p109 = scmp.eq.s32.totalorder %s15, 1
      %p110 = por %p108, %p109
      %p111 = scmp.ne.s32.totalorder %s103, %s106
      %p112 = scmp.eq.s32.totalorder %s15, 0
      %p113 = por %p111, %p112
      %p114 = scmp.ne.s32.totalorder %s103, %s106
      %p115 = scmp.eq.s32.totalorder %s20, 1
      %p116 = por %p114, %p115
      %p117 = scmp.ne.s32.totalorder %s106, %s107
      %p118 = scmp.eq.s32.totalorder %s20, 0
      %p119 = por %p117, %p118
      %p120 = scmp.ne.s32.totalorder %s106, %s107
      %p121 = scmp.eq.s32.totalorder %s21, 1
      %p122 = por %p120, %p121
      %p124 = scmp.ne.s32.totalorder %s107, %s123
      %p125 = scmp.eq.s32.totalorder %s21, 0
      %p126 = por %p124, %p125
      %s128 = sadd.s32 %s127, 1
      %p131 = scmp.eq.s32.totalorder %s15, 1
      %p132 = scmp.ne.s32.totalorder %s127, %s129
      %p133 = scmp.eq.s32.totalorder %s15, 0
      %p134 = por %p132, %p133
      %p135 = scmp.ne.s32.totalorder %s127, %s129
      %p136 = scmp.eq.s32.totalorder %s20, 1
      %p137 = por %p135, %p136
      %p138 = scmp.ne.s32.totalorder %s129, %s130
      %p139 = scmp.eq.s32.totalorder %s20, 0
      %p140 = por %p138, %p139
      %p141 = scmp.ne.s32.totalorder %s129, %s130
      %p142 = scmp.eq.s32.totalorder %s21, 1
      %p143 = por %p141, %p142
      %p145 = scmp.ne.s32.totalorder %s130, %s144
      %p146 = scmp.eq.s32.totalorder %s21, 0
      %p147 = por %p145, %p146
      %s149 = sadd.s32 %s148, 1
      %p152 = scmp.eq.s32.totalorder %s15, 1
      %p153 = scmp.ne.s32.totalorder %s148, %s150
      %p154 = scmp.eq.s32.totalorder %s15, 0
      %p155 = por %p153, %p154
      %p156 = scmp.ne.s32.totalorder %s148, %s150
      %p157 = scmp.eq.s32.totalorder %s20, 1
      %p158 = por %p156, %p157
      %p159 = scmp.ne.s32.totalorder %s150, %s151
      %p160 = scmp.eq.s32.totalorder %s20, 0
      %p161 = por %p159, %p160
      %p162 = scmp.ne.s32.totalorder %s150, %s151
      %p163 = scmp.eq.s32.totalorder %s21, 1
      %p164 = por %p162, %p163
      %p166 = scmp.ne.s32.totalorder %s151, %s165
      %p167 = scmp.eq.s32.totalorder %s21, 0
      %p168 = por %p166, %p167
      %s170 = sadd.s32 %s169, 1
      %p173 = scmp.eq.s32.totalorder %s15, 1
      %p174 = scmp.ne.s32.totalorder %s169, %s171
      %p175 = scmp.eq.s32.totalorder %s15, 0
      %p176 = por %p174, %p175
      %p177 = scmp.ne.s32.totalorder %s169, %s171
      %p178 = scmp.eq.s32.totalorder %s20, 1
      %p179 = por %p177, %p178
      %p180 = scmp.ne.s32.totalorder %s171, %s172
      %p181 = scmp.eq.s32.totalorder %s20, 0
      %p182 = por %p180, %p181
      %p183 = scmp.ne.s32.totalorder %s171, %s172
      %p184 = scmp.eq.s32.totalorder %s21, 1
      %p185 = por %p183, %p184
      %p187 = scmp.ne.s32.totalorder %s172, %s186
      %p188 = scmp.eq.s32.totalorder %s21, 0
      %p189 = por %p187, %p188
      %s190 = ssub.s32 %s22, %s34
      %s191 = ssub.s32 %s23, %s30
      %s192 = sor.u32 %s190, %s191
      %p193 = scmp.eq.s32.totalorder %s192, 0
      %s195 = sadd.s32 %s194, 1
      %s196 = scalar_select %p193, %s194, %s195
      %p199 = pneg %p193
      %p200 = scmp.eq.s32.totalorder %s15, 1
      %p201 = por %p199, %p200
      %p202 = scmp.ne.s32.totalorder %s194, %s197
      %p203 = scmp.eq.s32.totalorder %s15, 0
      %p204 = por %p202, %p203
      %p205 = scmp.ne.s32.totalorder %s194, %s197
      %p206 = scmp.eq.s32.totalorder %s20, 1
      %p207 = por %p205, %p206
      %p208 = scmp.ne.s32.totalorder %s197, %s198
      %p209 = scmp.eq.s32.totalorder %s20, 0
      %p210 = por %p208, %p209
      %p211 = scmp.ne.s32.totalorder %s197, %s198
      %p212 = scmp.eq.s32.totalorder %s21, 1
      %p213 = por %p211, %p212
      %p215 = scmp.ne.s32.totalorder %s198, %s214
      %p216 = scmp.eq.s32.totalorder %s21, 0
      %p217 = por %p215, %p216
      %p218 = scmp.le.s32.totalorder 1, %s15
      %p219 = scmp.lt.s32.totalorder %s15, 3
      %p220 = pnand %p218, %p219
      %p221 = pneg %p220
      // Predicated region
      $region9: #{tpu_custom_call.1} parent=5 // pred_check
        _
      $region10: #{tpu_custom_call.1} parent=5 // pred_check_branch
        %223 = sbr.rel (%p220) target = $region12
      $region11: #{tpu_custom_call.1} parent=5 // pred_region
        %s224 = ssub.s32 %s15, 1
        // Predicated region
        $region13: #{tpu_custom_call.1} parent=11 // pred_check
          %p225 = pneg %p140
        $region14: #{tpu_custom_call.1} parent=11 // pred_check_branch
          %227 = sbr.rel (%p225) target = $region16
        $region15: #{tpu_custom_call.1} parent=11 // pred_region
          _
        $region16: #{tpu_custom_call.1} parent=11 // pred_fallthru
          _
        // Predicated region
        $region17: #{tpu_custom_call.1} parent=11 // pred_check
          %p228 = pneg %p161
        $region18: #{tpu_custom_call.1} parent=11 // pred_check_branch
          %230 = sbr.rel (%p228) target = $region20
        $region19: #{tpu_custom_call.1} parent=11 // pred_region
          _
        $region20: #{tpu_custom_call.1} parent=11 // pred_fallthru
          _
        // Predicated region
        $region21: #{tpu_custom_call.1} parent=11 // pred_check
          %p231 = pneg %p182
        $region22: #{tpu_custom_call.1} parent=11 // pred_check_branch
          %233 = sbr.rel (%p231) target = $region24
        $region23: #{tpu_custom_call.1} parent=11 // pred_region
          _
        $region24: #{tpu_custom_call.1} parent=11 // pred_fallthru
          _
      $region12: #{tpu_custom_call.1} parent=5 // pred_fallthru
        _
      %p234 = scmp.lt.s32.totalorder %s15, 2
      // Predicated region
      $region25: #{tpu_custom_call.1} parent=5 // pred_check
        %p235 = pneg %p234
      $region26: #{tpu_custom_call.1} parent=5 // pred_check_branch
        %237 = sbr.rel (%p235) target = $region28
      $region27: #{tpu_custom_call.1} parent=5 // pred_region
        // Predicated region
        $region29: #{tpu_custom_call.1} parent=27 // pred_check
          %p238 = pneg %p49
        $region30: #{tpu_custom_call.1} parent=27 // pred_check_branch
          %240 = sbr.rel (%p238) target = $region32
        $region31: #{tpu_custom_call.1} parent=27 // pred_region
          %s241 = smul.u32 8, %s23
          %s242 = ssub.s32 10, %s241
          %p243 = scmp.lt.s32.totalorder %s242, 8
          %s244 = scalar_select %p243, %s242, 8
          %s245 = smul.u32 64, %s244
          %s246 = smul.u32 %s245, 10
          %s247 = smul.u32 %s246, 2
          %p248 = scmp.lt.s32.totalorder %s22, 1
          %s249 = scalar_select %p248, %s22, 1
          %p250 = scmp.lt.s32.totalorder %s241, 9
          %s251 = scalar_select %p250, %s241, 9
          %s252 = smul.addr %s251, 20
          %s253 = smul.addr %s249, 200
          %s254 = sadd.s32 %s252, %s253
          %s255 = smul.addr %s254, 4
          %s256 = scalar_lea.vmem %s0, %s255
          %s257 = smul.u32 8, %s23
          %s258 = ssub.s32 10, %s257
          %p259 = scmp.lt.s32.totalorder %s258, 8
          %s260 = scalar_select %p259, %s258, 8
          %s261 = smul.u32 64, %s260
          %s262 = smul.u32 %s261, 10
          %s263 = smul.u32 %s262, 2
        $region32: #{tpu_custom_call.1} parent=27 // pred_fallthru
          _
        // Predicated region
        $region33: #{tpu_custom_call.1} parent=27 // pred_check
          %p264 = pneg %p81
        $region34: #{tpu_custom_call.1} parent=27 // pred_check_branch
          %266 = sbr.rel (%p264) target = $region36
        $region35: #{tpu_custom_call.1} parent=27 // pred_region
          %s267 = smul.u32 %s23, 8
          %s268 = sadd.s32 %s267, 8
          %p269 = scmp.lt.s32.totalorder %s22, 1
          %s270 = scalar_select %p269, %s22, 1
          %p271 = scmp.lt.s32.totalorder %s268, 9
          %s272 = scalar_select %p271, %s268, 9
          %s273 = smul.addr %s272, 20
          %s274 = smul.addr %s270, 200
          %s275 = sadd.s32 %s273, %s274
          %s276 = smul.addr %s275, 4
          %s277 = scalar_lea.vmem %s1, %s276
          %s278 = smul.u32 %s23, 8
          %s279 = sadd.s32 %s278, 8
        $region36: #{tpu_custom_call.1} parent=27 // pred_fallthru
          _
        // Predicated region
        $region37: #{tpu_custom_call.1} parent=27 // pred_check
          %p280 = pneg %p113
        $region38: #{tpu_custom_call.1} parent=27 // pred_check_branch
          %282 = sbr.rel (%p280) target = $region40
        $region39: #{tpu_custom_call.1} parent=27 // pred_region
          %s283 = smul.u32 %s23, 8
          %s284 = sadd.s32 %s283, 9
          %p285 = scmp.lt.s32.totalorder %s22, 1
          %s286 = scalar_select %p285, %s22, 1
          %p287 = scmp.lt.s32.totalorder %s284, 9
          %s288 = scalar_select %p287, %s284, 9
          %s289 = smul.addr %s288, 20
          %s290 = smul.addr %s286, 200
          %s291 = sadd.s32 %s289, %s290
          %s292 = smul.addr %s291, 4
          %s293 = scalar_lea.vmem %s2, %s292
          %s294 = smul.u32 %s23, 8
          %s295 = sadd.s32 %s294, 9
        $region40: #{tpu_custom_call.1} parent=27 // pred_fallthru
          _
      $region28: #{tpu_custom_call.1} parent=5 // pred_fallthru
        _
      %p296 = scmp.le.s32.totalorder 1, %s15
      %p297 = scmp.lt.s32.totalorder %s15, 3
      %p298 = pnand %p296, %p297
      %p299 = pneg %p298
      // Predicated region
      $region41: #{tpu_custom_call.1} parent=5 // pred_check
        _
      $region42: #{tpu_custom_call.1} parent=5 // pred_check_branch
        %301 = sbr.rel (%p298) target = $region44
      $region43: #{tpu_custom_call.1} parent=5 // pred_region
        %s302 = ssub.s32 %s15, 1
        %s303 = smul.u32 8, %s25
        %s304 = ssub.s32 10, %s303
        %p305 = scmp.lt.s32.totalorder %s304, 8
        %s306 = scalar_select %p305, %s304, 8
        %s307 = smul.u32 64, %s306
        %s308 = smul.u32 %s307, 10
        %s309 = smul.u32 %s308, 2
        %p310 = scmp.lt.s32.totalorder %s24, 1
        %s311 = scalar_select %p310, %s24, 1
        %p312 = scmp.lt.s32.totalorder %s303, 9
        %s313 = scalar_select %p312, %s303, 9
        %s314 = smul.addr %s313, 20
        %s315 = smul.addr %s311, 200
        %s316 = sadd.s32 %s314, %s315
        %s317 = smul.addr %s316, 4
        %s318 = scalar_lea.vmem %s0, %s317
        %p319 = pneg %p55
        %p320 = pneg %p52
        %s321 = smul.u32 %s25, 8
        %s322 = sadd.s32 %s321, 8
        %p323 = scmp.lt.s32.totalorder %s24, 1
        %s324 = scalar_select %p323, %s24, 1
        %p325 = scmp.lt.s32.totalorder %s322, 9
        %s326 = scalar_select %p325, %s322, 9
        %s327 = smul.addr %s326, 20
        %s328 = smul.addr %s324, 200
        %s329 = sadd.s32 %s327, %s328
        %s330 = smul.addr %s329, 4
        %s331 = scalar_lea.vmem %s1, %s330
        %p332 = pneg %p87
        %p333 = pneg %p84
        %s334 = smul.u32 %s25, 8
        %s335 = sadd.s32 %s334, 9
        %p336 = scmp.lt.s32.totalorder %s24, 1
        %s337 = scalar_select %p336, %s24, 1
        %p338 = scmp.lt.s32.totalorder %s335, 9
        %s339 = scalar_select %p338, %s335, 9
        %s340 = smul.addr %s339, 20
        %s341 = smul.addr %s337, 200
        %s342 = sadd.s32 %s340, %s341
        %s343 = smul.addr %s342, 4
        %s344 = scalar_lea.vmem %s2, %s343
        %p345 = pneg %p119
        %p346 = pneg %p116
        %p347 = pneg %p140
        %p348 = pneg %p137
        %p349 = pneg %p161
        %p350 = pneg %p158
        %p351 = pneg %p182
        %p352 = pneg %p179
        %p353 = pneg %p210
        %p354 = pneg %p207
        %s355 = sand.u32 %s197, 1
        %s356 = scalar_lea.sflag [#allocation3], %s355
        %s357 = sand.u32 %s197, 1
        %s358 = smul.addr %s357, 16
        %s359 = scalar_lea.vmem [#allocation2], %s358
        %s360 = smul.u32 8, %s25
        %s361 = ssub.s32 10, %s360
        %p362 = scmp.lt.s32.totalorder %s361, 8
        %s363 = scalar_select %p362, %s361, 8
        %s364 = smul.u32 64, %s363
        %s365 = smul.u32 %s364, 10
        %s366 = smul.u32 %s365, 2
        %p367 = scmp.lt.s32.totalorder %s24, 1
        %s368 = scalar_select %p367, %s24, 1
        %p369 = scmp.lt.s32.totalorder %s360, 9
        %s370 = scalar_select %p369, %s360, 9
        %s371 = smul.addr %s370, 20
        %s372 = smul.addr %s368, 200
        %s373 = sadd.s32 %s371, %s372
        %s374 = smul.addr %s373, 4
        %s375 = scalar_lea.vmem %s0, %s374
        %s376 = smul.u32 8, %s25
        %s377 = ssub.s32 10, %s376
        %p378 = scmp.lt.s32.totalorder %s377, 8
        %s379 = scalar_select %p378, %s377, 8
        %s380 = smul.u32 64, %s379
        %s381 = smul.u32 %s380, 10
        %s382 = smul.u32 %s381, 2
        %s383 = smul.u32 %s25, 8
        %s384 = sadd.s32 %s383, 8
        %p385 = scmp.lt.s32.totalorder %s24, 1
        %s386 = scalar_select %p385, %s24, 1
        %p387 = scmp.lt.s32.totalorder %s384, 9
        %s388 = scalar_select %p387, %s384, 9
        %s389 = smul.addr %s388, 20
        %s390 = smul.addr %s386, 200
        %s391 = sadd.s32 %s389, %s390
        %s392 = smul.addr %s391, 4
        %s393 = scalar_lea.vmem %s1, %s392
        %s394 = smul.u32 %s25, 8
        %s395 = sadd.s32 %s394, 8
        %s396 = smul.u32 %s25, 8
        %s397 = sadd.s32 %s396, 9
        %p398 = scmp.lt.s32.totalorder %s24, 1
        %s399 = scalar_select %p398, %s24, 1
        %p400 = scmp.lt.s32.totalorder %s397, 9
        %s401 = scalar_select %p400, %s397, 9
        %s402 = smul.addr %s401, 20
        %s403 = smul.addr %s399, 200
        %s404 = sadd.s32 %s402, %s403
        %s405 = smul.addr %s404, 4
        %s406 = scalar_lea.vmem %s2, %s405
        %s407 = smul.u32 %s25, 8
        %s408 = sadd.s32 %s407, 9
        %s409 = smul.u32 4, %s25
        %v411 = vld [vmem:[%s375] sm:$0xf]
        %v412 = vld [vmem:[%s375 + $0x4] sm:$0x1]
        %v413 = vld [vmem:[%s375 + $0x8] sm:$0xf]
        %v414 = vld [vmem:[%s375 + $0xc] sm:$0x1]
        %v415 = vld [vmem:[%s375 + $0x10] sm:$0xf]
        %v416 = vld [vmem:[%s375 + $0x14] sm:$0x1]
        %v417 = vld [vmem:[%s375 + $0x18] sm:$0xf]
        %v418 = vld [vmem:[%s375 + $0x1c] sm:$0x1]
        %v419 = vld [vmem:[%s375 + $0x20] sm:$0xf]
        %v420 = vld [vmem:[%s375 + $0x24] sm:$0x1]
        %v421 = vld [vmem:[%s375 + $0x28] sm:$0xf]
        %v422 = vld [vmem:[%s375 + $0x2c] sm:$0x1]
        %v423 = vld [vmem:[%s375 + $0x30] sm:$0xf]
        %v424 = vld [vmem:[%s375 + $0x34] sm:$0x1]
        %v425 = vld [vmem:[%s375 + $0x38] sm:$0xf]
        %v426 = vld [vmem:[%s375 + $0x3c] sm:$0x1]
        %v427 = vld [vmem:[%s375 + $0x40] sm:$0xf]
        %v428 = vld [vmem:[%s375 + $0x44] sm:$0x1]
        %v429 = vld [vmem:[%s375 + $0x48] sm:$0xf]
        %v430 = vld [vmem:[%s375 + $0x4c] sm:$0x1]
        %v431 = vld [vmem:[%s375 + $0x50] sm:$0xf]
        %v432 = vld [vmem:[%s375 + $0x54] sm:$0x1]
        %v433 = vld [vmem:[%s375 + $0x58] sm:$0xf]
        %v434 = vld [vmem:[%s375 + $0x5c] sm:$0x1]
        %v435 = vld [vmem:[%s375 + $0x60] sm:$0xf]
        %v436 = vld [vmem:[%s375 + $0x64] sm:$0x1]
        %v437 = vld [vmem:[%s375 + $0x68] sm:$0xf]
        %v438 = vld [vmem:[%s375 + $0x6c] sm:$0x1]
        %v439 = vld [vmem:[%s375 + $0x70] sm:$0xf]
        %v440 = vld [vmem:[%s375 + $0x74] sm:$0x1]
        %v441 = vld [vmem:[%s375 + $0x78] sm:$0xf]
        %v442 = vld [vmem:[%s375 + $0x7c] sm:$0x1]
        %v443 = vld [vmem:[%s375 + $0x80] sm:$0xf]
        %v444 = vld [vmem:[%s375 + $0x84] sm:$0x1]
        %v445 = vld [vmem:[%s375 + $0x88] sm:$0xf]
        %v446 = vld [vmem:[%s375 + $0x8c] sm:$0x1]
        %v447 = vld [vmem:[%s375 + $0x90] sm:$0xf]
        %v448 = vld [vmem:[%s375 + $0x94] sm:$0x1]
        %v449 = vld [vmem:[%s375 + $0x98] sm:$0xf]
        %v450 = vld [vmem:[%s375 + $0x9c] sm:$0x1]
        %v451 = vld [vmem:[%s375 + $0xa0] sm:$0xf]
        %v452 = vld [vmem:[%s375 + $0xa4] sm:$0x1]
        %v453 = vld [vmem:[%s375 + $0xa8] sm:$0xf]
        %v454 = vld [vmem:[%s375 + $0xac] sm:$0x1]
        %v455 = vld [vmem:[%s375 + $0xb0] sm:$0xf]
        %v456 = vld [vmem:[%s375 + $0xb4] sm:$0x1]
        %v457 = vld [vmem:[%s375 + $0xb8] sm:$0xf]
        %v458 = vld [vmem:[%s375 + $0xbc] sm:$0x1]
        %v459 = vld [vmem:[%s375 + $0xc0] sm:$0xf]
        %v460 = vld [vmem:[%s375 + $0xc4] sm:$0x1]
        %v461 = vld [vmem:[%s375 + $0xc8] sm:$0xf]
        %v462 = vld [vmem:[%s375 + $0xcc] sm:$0x1]
        %v463 = vld [vmem:[%s375 + $0xd0] sm:$0xf]
        %v464 = vld [vmem:[%s375 + $0xd4] sm:$0x1]
        %v465 = vld [vmem:[%s375 + $0xd8] sm:$0xf]
        %v466 = vld [vmem:[%s375 + $0xdc] sm:$0x1]
        %v467 = vld [vmem:[%s375 + $0xe0] sm:$0xf]
        %v468 = vld [vmem:[%s375 + $0xe4] sm:$0x1]
        %v469 = vld [vmem:[%s375 + $0xe8] sm:$0xf]
        %v470 = vld [vmem:[%s375 + $0xec] sm:$0x1]
        %v471 = vld [vmem:[%s375 + $0xf0] sm:$0xf]
        %v472 = vld [vmem:[%s375 + $0xf4] sm:$0x1]
        %v473 = vld [vmem:[%s375 + $0xf8] sm:$0xf]
        %v474 = vld [vmem:[%s375 + $0xfc] sm:$0x1]
        %v475 = vld [vmem:[%s375 + $0x100] sm:$0xf]
        %v476 = vld [vmem:[%s375 + $0x104] sm:$0x1]
        %v477 = vld [vmem:[%s375 + $0x108] sm:$0xf]
        %v478 = vld [vmem:[%s375 + $0x10c] sm:$0x1]
        %v479 = vld [vmem:[%s375 + $0x110] sm:$0xf]
        %v480 = vld [vmem:[%s375 + $0x114] sm:$0x1]
        %v481 = vld [vmem:[%s375 + $0x118] sm:$0xf]
        %v482 = vld [vmem:[%s375 + $0x11c] sm:$0x1]
        %v483 = vld [vmem:[%s375 + $0x120] sm:$0xf]
        %v484 = vld [vmem:[%s375 + $0x124] sm:$0x1]
        %v485 = vld [vmem:[%s375 + $0x128] sm:$0xf]
        %v486 = vld [vmem:[%s375 + $0x12c] sm:$0x1]
        %v487 = vld [vmem:[%s375 + $0x130] sm:$0xf]
        %v488 = vld [vmem:[%s375 + $0x134] sm:$0x1]
        %v489 = vld [vmem:[%s375 + $0x138] sm:$0xf]
        %v490 = vld [vmem:[%s375 + $0x13c] sm:$0x1]
        %v491 = vld [vmem:[%s375 + $0x140] sm:$0xf]
        %v492 = vld [vmem:[%s375 + $0x144] sm:$0x1]
        %v493 = vld [vmem:[%s375 + $0x148] sm:$0xf]
        %v494 = vld [vmem:[%s375 + $0x14c] sm:$0x1]
        %v495 = vld [vmem:[%s375 + $0x150] sm:$0xf]
        %v496 = vld [vmem:[%s375 + $0x154] sm:$0x1]
        %v497 = vld [vmem:[%s375 + $0x158] sm:$0xf]
        %v498 = vld [vmem:[%s375 + $0x15c] sm:$0x1]
        %v499 = vld [vmem:[%s375 + $0x160] sm:$0xf]
        %v500 = vld [vmem:[%s375 + $0x164] sm:$0x1]
        %v501 = vld [vmem:[%s375 + $0x168] sm:$0xf]
        %v502 = vld [vmem:[%s375 + $0x16c] sm:$0x1]
        %v503 = vld [vmem:[%s375 + $0x170] sm:$0xf]
        %v504 = vld [vmem:[%s375 + $0x174] sm:$0x1]
        %v505 = vld [vmem:[%s375 + $0x178] sm:$0xf]
        %v506 = vld [vmem:[%s375 + $0x17c] sm:$0x1]
        %v507 = vld [vmem:[%s375 + $0x180] sm:$0xf]
        %v508 = vld [vmem:[%s375 + $0x184] sm:$0x1]
        %v509 = vld [vmem:[%s375 + $0x188] sm:$0xf]
        %v510 = vld [vmem:[%s375 + $0x18c] sm:$0x1]
        %v511 = vld [vmem:[%s375 + $0x190] sm:$0xf]
        %v512 = vld [vmem:[%s375 + $0x194] sm:$0x1]
        %v513 = vld [vmem:[%s375 + $0x198] sm:$0xf]
        %v514 = vld [vmem:[%s375 + $0x19c] sm:$0x1]
        %v515 = vld [vmem:[%s375 + $0x1a0] sm:$0xf]
        %v516 = vld [vmem:[%s375 + $0x1a4] sm:$0x1]
        %v517 = vld [vmem:[%s375 + $0x1a8] sm:$0xf]
        %v518 = vld [vmem:[%s375 + $0x1ac] sm:$0x1]
        %v519 = vld [vmem:[%s375 + $0x1b0] sm:$0xf]
        %v520 = vld [vmem:[%s375 + $0x1b4] sm:$0x1]
        %v521 = vld [vmem:[%s375 + $0x1b8] sm:$0xf]
        %v522 = vld [vmem:[%s375 + $0x1bc] sm:$0x1]
        %v523 = vld [vmem:[%s375 + $0x1c0] sm:$0xf]
        %v524 = vld [vmem:[%s375 + $0x1c4] sm:$0x1]
        %v525 = vld [vmem:[%s375 + $0x1c8] sm:$0xf]
        %v526 = vld [vmem:[%s375 + $0x1cc] sm:$0x1]
        %v527 = vld [vmem:[%s375 + $0x1d0] sm:$0xf]
        %v528 = vld [vmem:[%s375 + $0x1d4] sm:$0x1]
        %v529 = vld [vmem:[%s375 + $0x1d8] sm:$0xf]
        %v530 = vld [vmem:[%s375 + $0x1dc] sm:$0x1]
        %v531 = vld [vmem:[%s375 + $0x1e0] sm:$0xf]
        %v532 = vld [vmem:[%s375 + $0x1e4] sm:$0x1]
        %v533 = vld [vmem:[%s375 + $0x1e8] sm:$0xf]
        %v534 = vld [vmem:[%s375 + $0x1ec] sm:$0x1]
        %v535 = vld [vmem:[%s375 + $0x1f0] sm:$0xf]
        %v536 = vld [vmem:[%s375 + $0x1f4] sm:$0x1]
        %v537 = vld [vmem:[%s375 + $0x1f8] sm:$0xf]
        %v538 = vld [vmem:[%s375 + $0x1fc] sm:$0x1]
        %v539 = vld [vmem:[%s375 + $0x200] sm:$0xf]
        %v540 = vld [vmem:[%s375 + $0x204] sm:$0x1]
        %v541 = vld [vmem:[%s375 + $0x208] sm:$0xf]
        %v542 = vld [vmem:[%s375 + $0x20c] sm:$0x1]
        %v543 = vld [vmem:[%s375 + $0x210] sm:$0xf]
        %v544 = vld [vmem:[%s375 + $0x214] sm:$0x1]
        %v545 = vld [vmem:[%s375 + $0x218] sm:$0xf]
        %v546 = vld [vmem:[%s375 + $0x21c] sm:$0x1]
        %v547 = vld [vmem:[%s375 + $0x220] sm:$0xf]
        %v548 = vld [vmem:[%s375 + $0x224] sm:$0x1]
        %v549 = vld [vmem:[%s375 + $0x228] sm:$0xf]
        %v550 = vld [vmem:[%s375 + $0x22c] sm:$0x1]
        %v551 = vld [vmem:[%s375 + $0x230] sm:$0xf]
        %v552 = vld [vmem:[%s375 + $0x234] sm:$0x1]
        %v553 = vld [vmem:[%s375 + $0x238] sm:$0xf]
        %v554 = vld [vmem:[%s375 + $0x23c] sm:$0x1]
        %v555 = vld [vmem:[%s375 + $0x240] sm:$0xf]
        %v556 = vld [vmem:[%s375 + $0x244] sm:$0x1]
        %v557 = vld [vmem:[%s375 + $0x248] sm:$0xf]
        %v558 = vld [vmem:[%s375 + $0x24c] sm:$0x1]
        %v559 = vld [vmem:[%s375 + $0x250] sm:$0xf]
        %v560 = vld [vmem:[%s375 + $0x254] sm:$0x1]
        %v561 = vld [vmem:[%s375 + $0x258] sm:$0xf]
        %v562 = vld [vmem:[%s375 + $0x25c] sm:$0x1]
        %v563 = vld [vmem:[%s375 + $0x260] sm:$0xf]
        %v564 = vld [vmem:[%s375 + $0x264] sm:$0x1]
        %v565 = vld [vmem:[%s375 + $0x268] sm:$0xf]
        %v566 = vld [vmem:[%s375 + $0x26c] sm:$0x1]
        %v567 = vld [vmem:[%s375 + $0x270] sm:$0xf]
        %v568 = vld [vmem:[%s375 + $0x274] sm:$0x1]
        %v569 = vld [vmem:[%s375 + $0x278] sm:$0xf]
        %v570 = vld [vmem:[%s375 + $0x27c] sm:$0x1]
        %v571 = vld [vmem:[%s393] sm:$0xf]
        %v572 = vld [vmem:[%s393 + $0x4] sm:$0x1]
        %v573 = vld [vmem:[%s393 + $0x8] sm:$0xf]
        %v574 = vld [vmem:[%s393 + $0xc] sm:$0x1]
        %v575 = vld [vmem:[%s393 + $0x10] sm:$0xf]
        %v576 = vld [vmem:[%s393 + $0x14] sm:$0x1]
        %v577 = vld [vmem:[%s393 + $0x18] sm:$0xf]
        %v578 = vld [vmem:[%s393 + $0x1c] sm:$0x1]
        %v579 = vld [vmem:[%s393 + $0x20] sm:$0xf]
        %v580 = vld [vmem:[%s393 + $0x24] sm:$0x1]
        %v581 = vld [vmem:[%s393 + $0x28] sm:$0xf]
        %v582 = vld [vmem:[%s393 + $0x2c] sm:$0x1]
        %v583 = vld [vmem:[%s393 + $0x30] sm:$0xf]
        %v584 = vld [vmem:[%s393 + $0x34] sm:$0x1]
        %v585 = vld [vmem:[%s393 + $0x38] sm:$0xf]
        %v586 = vld [vmem:[%s393 + $0x3c] sm:$0x1]
        %v587 = vld [vmem:[%s393 + $0x40] sm:$0xf]
        %v588 = vld [vmem:[%s393 + $0x44] sm:$0x1]
        %v589 = vld [vmem:[%s393 + $0x48] sm:$0xf]
        %v590 = vld [vmem:[%s393 + $0x4c] sm:$0x1]
        %v591 = vld [vmem:[%s406] sm:$0xf]
        %v592 = vld [vmem:[%s406 + $0x4] sm:$0x1]
        %v593 = vld [vmem:[%s406 + $0x8] sm:$0xf]
        %v594 = vld [vmem:[%s406 + $0xc] sm:$0x1]
        %v595 = vld [vmem:[%s406 + $0x10] sm:$0xf]
        %v596 = vld [vmem:[%s406 + $0x14] sm:$0x1]
        %v597 = vld [vmem:[%s406 + $0x18] sm:$0xf]
        %v598 = vld [vmem:[%s406 + $0x1c] sm:$0x1]
        %v599 = vld [vmem:[%s406 + $0x20] sm:$0xf]
        %v600 = vld [vmem:[%s406 + $0x24] sm:$0x1]
        %v601 = vld [vmem:[%s406 + $0x28] sm:$0xf]
        %v602 = vld [vmem:[%s406 + $0x2c] sm:$0x1]
        %v603 = vld [vmem:[%s406 + $0x30] sm:$0xf]
        %v604 = vld [vmem:[%s406 + $0x34] sm:$0x1]
        %v605 = vld [vmem:[%s406 + $0x38] sm:$0xf]
        %v606 = vld [vmem:[%s406 + $0x3c] sm:$0x1]
        %v607 = vld [vmem:[%s406 + $0x40] sm:$0xf]
        %v608 = vld [vmem:[%s406 + $0x44] sm:$0x1]
        %v609 = vld [vmem:[%s406 + $0x48] sm:$0xf]
        %v610 = vld [vmem:[%s406 + $0x4c] sm:$0x1]
        %v771 = vunpack.c.l.b16 %v411
        %v772 = vunpack.c.l.b16 %v412
        %v773 = vunpack.c.l.b16 %v413
        %v774 = vunpack.c.l.b16 %v414
        %v775 = vunpack.c.l.b16 %v415
        %v776 = vunpack.c.l.b16 %v416
        %v777 = vunpack.c.l.b16 %v417
        %v778 = vunpack.c.l.b16 %v418
        %v779 = vunpack.c.l.b16 %v419
        %v780 = vunpack.c.l.b16 %v420
        %v781 = vunpack.c.l.b16 %v421
        %v782 = vunpack.c.l.b16 %v422
        %v783 = vunpack.c.l.b16 %v423
        %v784 = vunpack.c.l.b16 %v424
        %v785 = vunpack.c.l.b16 %v425
        %v786 = vunpack.c.l.b16 %v426
        %v787 = vunpack.c.l.b16 %v431
        %v788 = vunpack.c.l.b16 %v432
        %v789 = vunpack.c.l.b16 %v433
        %v790 = vunpack.c.l.b16 %v434
        %v791 = vunpack.c.l.b16 %v435
        %v792 = vunpack.c.l.b16 %v436
        %v793 = vunpack.c.l.b16 %v437
        %v794 = vunpack.c.l.b16 %v438
        %v795 = vunpack.c.l.b16 %v439
        %v796 = vunpack.c.l.b16 %v440
        %v797 = vunpack.c.l.b16 %v441
        %v798 = vunpack.c.l.b16 %v442
        %v799 = vunpack.c.l.b16 %v443
        %v800 = vunpack.c.l.b16 %v444
        %v801 = vunpack.c.l.b16 %v445
        %v802 = vunpack.c.l.b16 %v446
        %v803 = vunpack.c.l.b16 %v451
        %v804 = vunpack.c.l.b16 %v452
        %v805 = vunpack.c.l.b16 %v453
        %v806 = vunpack.c.l.b16 %v454
        %v807 = vunpack.c.l.b16 %v455
        %v808 = vunpack.c.l.b16 %v456
        %v809 = vunpack.c.l.b16 %v457
        %v810 = vunpack.c.l.b16 %v458
        %v811 = vunpack.c.l.b16 %v459
        %v812 = vunpack.c.l.b16 %v460
        %v813 = vunpack.c.l.b16 %v461
        %v814 = vunpack.c.l.b16 %v462
        %v815 = vunpack.c.l.b16 %v463
        %v816 = vunpack.c.l.b16 %v464
        %v817 = vunpack.c.l.b16 %v465
        %v818 = vunpack.c.l.b16 %v466
        %v819 = vunpack.c.l.b16 %v471
        %v820 = vunpack.c.l.b16 %v472
        %v821 = vunpack.c.l.b16 %v473
        %v822 = vunpack.c.l.b16 %v474
        %v823 = vunpack.c.l.b16 %v475
        %v824 = vunpack.c.l.b16 %v476
        %v825 = vunpack.c.l.b16 %v477
        %v826 = vunpack.c.l.b16 %v478
        %v827 = vunpack.c.l.b16 %v479
        %v828 = vunpack.c.l.b16 %v480
        %v829 = vunpack.c.l.b16 %v481
        %v830 = vunpack.c.l.b16 %v482
        %v831 = vunpack.c.l.b16 %v483
        %v832 = vunpack.c.l.b16 %v484
        %v833 = vunpack.c.l.b16 %v485
        %v834 = vunpack.c.l.b16 %v486
        %v835 = vunpack.c.l.b16 %v491
        %v836 = vunpack.c.l.b16 %v492
        %v837 = vunpack.c.l.b16 %v493
        %v838 = vunpack.c.l.b16 %v494
        %v839 = vunpack.c.l.b16 %v495
        %v840 = vunpack.c.l.b16 %v496
        %v841 = vunpack.c.l.b16 %v497
        %v842 = vunpack.c.l.b16 %v498
        %v843 = vunpack.c.l.b16 %v499
        %v844 = vunpack.c.l.b16 %v500
        %v845 = vunpack.c.l.b16 %v501
        %v846 = vunpack.c.l.b16 %v502
        %v847 = vunpack.c.l.b16 %v503
        %v848 = vunpack.c.l.b16 %v504
        %v849 = vunpack.c.l.b16 %v505
        %v850 = vunpack.c.l.b16 %v506
        %v851 = vunpack.c.l.b16 %v511
        %v852 = vunpack.c.l.b16 %v512
        %v853 = vunpack.c.l.b16 %v513
        %v854 = vunpack.c.l.b16 %v514
        %v855 = vunpack.c.l.b16 %v515
        %v856 = vunpack.c.l.b16 %v516
        %v857 = vunpack.c.l.b16 %v517
        %v858 = vunpack.c.l.b16 %v518
        %v859 = vunpack.c.l.b16 %v519
        %v860 = vunpack.c.l.b16 %v520
        %v861 = vunpack.c.l.b16 %v521
        %v862 = vunpack.c.l.b16 %v522
        %v863 = vunpack.c.l.b16 %v523
        %v864 = vunpack.c.l.b16 %v524
        %v865 = vunpack.c.l.b16 %v525
        %v866 = vunpack.c.l.b16 %v526
        %v867 = vunpack.c.l.b16 %v531
        %v868 = vunpack.c.l.b16 %v532
        %v869 = vunpack.c.l.b16 %v533
        %v870 = vunpack.c.l.b16 %v534
        %v871 = vunpack.c.l.b16 %v535
        %v872 = vunpack.c.l.b16 %v536
        %v873 = vunpack.c.l.b16 %v537
        %v874 = vunpack.c.l.b16 %v538
        %v875 = vunpack.c.l.b16 %v539
        %v876 = vunpack.c.l.b16 %v540
        %v877 = vunpack.c.l.b16 %v541
        %v878 = vunpack.c.l.b16 %v542
        %v879 = vunpack.c.l.b16 %v543
        %v880 = vunpack.c.l.b16 %v544
        %v881 = vunpack.c.l.b16 %v545
        %v882 = vunpack.c.l.b16 %v546
        %v883 = vunpack.c.l.b16 %v551
        %v884 = vunpack.c.l.b16 %v552
        %v885 = vunpack.c.l.b16 %v553
        %v886 = vunpack.c.l.b16 %v554
        %v887 = vunpack.c.l.b16 %v555
        %v888 = vunpack.c.l.b16 %v556
        %v889 = vunpack.c.l.b16 %v557
        %v890 = vunpack.c.l.b16 %v558
        %v891 = vunpack.c.l.b16 %v559
        %v892 = vunpack.c.l.b16 %v560
        %v893 = vunpack.c.l.b16 %v561
        %v894 = vunpack.c.l.b16 %v562
        %v895 = vunpack.c.l.b16 %v563
        %v896 = vunpack.c.l.b16 %v564
        %v897 = vunpack.c.l.b16 %v565
        %v898 = vunpack.c.l.b16 %v566
        %v899 = vunpack.c.l.b16 %v571
        %v900 = vunpack.c.l.b16 %v572
        %v901 = vunpack.c.l.b16 %v573
        %v902 = vunpack.c.l.b16 %v574
        %v903 = vunpack.c.l.b16 %v575
        %v904 = vunpack.c.l.b16 %v576
        %v905 = vunpack.c.l.b16 %v577
        %v906 = vunpack.c.l.b16 %v578
        %v907 = vunpack.c.l.b16 %v579
        %v908 = vunpack.c.l.b16 %v580
        %v909 = vunpack.c.l.b16 %v581
        %v910 = vunpack.c.l.b16 %v582
        %v911 = vunpack.c.l.b16 %v583
        %v912 = vunpack.c.l.b16 %v584
        %v913 = vunpack.c.l.b16 %v585
        %v914 = vunpack.c.l.b16 %v586
        %v915 = vunpack.c.l.b16 %v591
        %v916 = vunpack.c.l.b16 %v592
        %v917 = vunpack.c.l.b16 %v593
        %v918 = vunpack.c.l.b16 %v594
        %v919 = vunpack.c.l.b16 %v595
        %v920 = vunpack.c.l.b16 %v596
        %v921 = vunpack.c.l.b16 %v597
        %v922 = vunpack.c.l.b16 %v598
        %v923 = vunpack.c.l.b16 %v599
        %v924 = vunpack.c.l.b16 %v600
        %v925 = vunpack.c.l.b16 %v601
        %v926 = vunpack.c.l.b16 %v602
        %v927 = vunpack.c.l.b16 %v603
        %v928 = vunpack.c.l.b16 %v604
        %v929 = vunpack.c.l.b16 %v605
        %v930 = vunpack.c.l.b16 %v606
        %v931 = vpack.c.b16 %v772, %v771
        %v932 = vpack.c.b16 %v774, %v773
        %v933 = vpack.c.b16 %v776, %v775
        %v934 = vpack.c.b16 %v778, %v777
        %v935 = vpack.c.b16 %v780, %v779
        %v936 = vpack.c.b16 %v782, %v781
        %v937 = vpack.c.b16 %v784, %v783
        %v938 = vpack.c.b16 %v786, %v785
        %v939 = vpack.c.b16 %v788, %v787
        %v940 = vpack.c.b16 %v790, %v789
        %v941 = vpack.c.b16 %v792, %v791
        %v942 = vpack.c.b16 %v794, %v793
        %v943 = vpack.c.b16 %v796, %v795
        %v944 = vpack.c.b16 %v798, %v797
        %v945 = vpack.c.b16 %v800, %v799
        %v946 = vpack.c.b16 %v802, %v801
        %v947 = vpack.c.b16 %v804, %v803
        %v948 = vpack.c.b16 %v806, %v805
        %v949 = vpack.c.b16 %v808, %v807
        %v950 = vpack.c.b16 %v810, %v809
        %v951 = vpack.c.b16 %v812, %v811
        %v952 = vpack.c.b16 %v814, %v813
        %v953 = vpack.c.b16 %v816, %v815
        %v954 = vpack.c.b16 %v818, %v817
        %v955 = vpack.c.b16 %v820, %v819
        %v956 = vpack.c.b16 %v822, %v821
        %v957 = vpack.c.b16 %v824, %v823
        %v958 = vpack.c.b16 %v826, %v825
        %v959 = vpack.c.b16 %v828, %v827
        %v960 = vpack.c.b16 %v830, %v829
        %v961 = vpack.c.b16 %v832, %v831
        %v962 = vpack.c.b16 %v834, %v833
        %v963 = vpack.c.b16 %v836, %v835
        %v964 = vpack.c.b16 %v838, %v837
        %v965 = vpack.c.b16 %v840, %v839
        %v966 = vpack.c.b16 %v842, %v841
        %v967 = vpack.c.b16 %v844, %v843
        %v968 = vpack.c.b16 %v846, %v845
        %v969 = vpack.c.b16 %v848, %v847
        %v970 = vpack.c.b16 %v850, %v849
        %v971 = vpack.c.b16 %v852, %v851
        %v972 = vpack.c.b16 %v854, %v853
        %v973 = vpack.c.b16 %v856, %v855
        %v974 = vpack.c.b16 %v858, %v857
        %v975 = vpack.c.b16 %v860, %v859
        %v976 = vpack.c.b16 %v862, %v861
        %v977 = vpack.c.b16 %v864, %v863
        %v978 = vpack.c.b16 %v866, %v865
        %v979 = vpack.c.b16 %v868, %v867
        %v980 = vpack.c.b16 %v870, %v869
        %v981 = vpack.c.b16 %v872, %v871
        %v982 = vpack.c.b16 %v874, %v873
        %v983 = vpack.c.b16 %v876, %v875
        %v984 = vpack.c.b16 %v878, %v877
        %v985 = vpack.c.b16 %v880, %v879
        %v986 = vpack.c.b16 %v882, %v881
        %v987 = vpack.c.b16 %v884, %v883
        %v988 = vpack.c.b16 %v886, %v885
        %v989 = vpack.c.b16 %v888, %v887
        %v990 = vpack.c.b16 %v890, %v889
        %v991 = vpack.c.b16 %v892, %v891
        %v992 = vpack.c.b16 %v894, %v893
        %v993 = vpack.c.b16 %v896, %v895
        %v994 = vpack.c.b16 %v898, %v897
        %v995 = vpack.c.b16 %v900, %v899
        %v996 = vpack.c.b16 %v902, %v901
        %v997 = vpack.c.b16 %v904, %v903
        %v998 = vpack.c.b16 %v906, %v905
        %v999 = vpack.c.b16 %v908, %v907
        %v1000 = vpack.c.b16 %v910, %v909
        %v1001 = vpack.c.b16 %v912, %v911
        %v1002 = vpack.c.b16 %v914, %v913
        %v1003 = vpack.c.b16 %v916, %v915
        %v1004 = vpack.c.b16 %v918, %v917
        %v1005 = vpack.c.b16 %v920, %v919
        %v1006 = vpack.c.b16 %v922, %v921
        %v1007 = vpack.c.b16 %v924, %v923
        %v1008 = vpack.c.b16 %v926, %v925
        %v1009 = vpack.c.b16 %v928, %v927
        %v1010 = vpack.c.b16 %v930, %v929
        %v1012 = vshrl.u32 %v931, 16
        %v1014 = vshll.u32 %v931, 16
        %v1016 = vrot.slane %v1014, 1
        %v1017 = vor.u32 %v1012, %v1016
        %v1019 = vshrl.u32 %v932, 16
        %v1021 = vshll.u32 %v932, 16
        %v1023 = vrot.slane %v1021, 1
        %v1024 = vor.u32 %v1019, %v1023
        %v1026 = vshrl.u32 %v933, 16
        %v1028 = vshll.u32 %v933, 16
        %v1030 = vrot.slane %v1028, 1
        %v1031 = vor.u32 %v1026, %v1030
        %v1033 = vshrl.u32 %v934, 16
        %v1035 = vshll.u32 %v934, 16
        %v1037 = vrot.slane %v1035, 1
        %v1038 = vor.u32 %v1033, %v1037
        %v1040 = vshrl.u32 %v935, 16
        %v1042 = vshll.u32 %v935, 16
        %v1044 = vrot.slane %v1042, 1
        %v1045 = vor.u32 %v1040, %v1044
        %v1047 = vshrl.u32 %v936, 16
        %v1049 = vshll.u32 %v936, 16
        %v1051 = vrot.slane %v1049, 1
        %v1052 = vor.u32 %v1047, %v1051
        %v1054 = vshrl.u32 %v937, 16
        %v1056 = vshll.u32 %v937, 16
        %v1058 = vrot.slane %v1056, 1
        %v1059 = vor.u32 %v1054, %v1058
        %v1061 = vshrl.u32 %v938, 16
        %v1063 = vshll.u32 %v938, 16
        %v1065 = vrot.slane %v1063, 1
        %v1066 = vor.u32 %v1061, %v1065
        %v1068 = vshrl.u32 %v939, 16
        %v1070 = vshll.u32 %v939, 16
        %v1072 = vrot.slane %v1070, 1
        %v1073 = vor.u32 %v1068, %v1072
        %v1075 = vshrl.u32 %v940, 16
        %v1077 = vshll.u32 %v940, 16
        %v1079 = vrot.slane %v1077, 1
        %v1080 = vor.u32 %v1075, %v1079
        %v1082 = vshrl.u32 %v941, 16
        %v1084 = vshll.u32 %v941, 16
        %v1086 = vrot.slane %v1084, 1
        %v1087 = vor.u32 %v1082, %v1086
        %v1089 = vshrl.u32 %v942, 16
        %v1091 = vshll.u32 %v942, 16
        %v1093 = vrot.slane %v1091, 1
        %v1094 = vor.u32 %v1089, %v1093
        %v1096 = vshrl.u32 %v943, 16
        %v1098 = vshll.u32 %v943, 16
        %v1100 = vrot.slane %v1098, 1
        %v1101 = vor.u32 %v1096, %v1100
        %v1103 = vshrl.u32 %v944, 16
        %v1105 = vshll.u32 %v944, 16
        %v1107 = vrot.slane %v1105, 1
        %v1108 = vor.u32 %v1103, %v1107
        %v1110 = vshrl.u32 %v945, 16
        %v1112 = vshll.u32 %v945, 16
        %v1114 = vrot.slane %v1112, 1
        %v1115 = vor.u32 %v1110, %v1114
        %v1117 = vshrl.u32 %v946, 16
        %v1119 = vshll.u32 %v946, 16
        %v1121 = vrot.slane %v1119, 1
        %v1122 = vor.u32 %v1117, %v1121
        %v1124 = vshrl.u32 %v947, 16
        %v1126 = vshll.u32 %v947, 16
        %v1128 = vrot.slane %v1126, 1
        %v1129 = vor.u32 %v1124, %v1128
        %v1131 = vshrl.u32 %v948, 16
        %v1133 = vshll.u32 %v948, 16
        %v1135 = vrot.slane %v1133, 1
        %v1136 = vor.u32 %v1131, %v1135
        %v1138 = vshrl.u32 %v949, 16
        %v1140 = vshll.u32 %v949, 16
        %v1142 = vrot.slane %v1140, 1
        %v1143 = vor.u32 %v1138, %v1142
        %v1145 = vshrl.u32 %v950, 16
        %v1147 = vshll.u32 %v950, 16
        %v1149 = vrot.slane %v1147, 1
        %v1150 = vor.u32 %v1145, %v1149
        %v1152 = vshrl.u32 %v951, 16
        %v1154 = vshll.u32 %v951, 16
        %v1156 = vrot.slane %v1154, 1
        %v1157 = vor.u32 %v1152, %v1156
        %v1159 = vshrl.u32 %v952, 16
        %v1161 = vshll.u32 %v952, 16
        %v1163 = vrot.slane %v1161, 1
        %v1164 = vor.u32 %v1159, %v1163
        %v1166 = vshrl.u32 %v953, 16
        %v1168 = vshll.u32 %v953, 16
        %v1170 = vrot.slane %v1168, 1
        %v1171 = vor.u32 %v1166, %v1170
        %v1173 = vshrl.u32 %v954, 16
        %v1175 = vshll.u32 %v954, 16
        %v1177 = vrot.slane %v1175, 1
        %v1178 = vor.u32 %v1173, %v1177
        %v1180 = vshrl.u32 %v955, 16
        %v1182 = vshll.u32 %v955, 16
        %v1184 = vrot.slane %v1182, 1
        %v1185 = vor.u32 %v1180, %v1184
        %v1187 = vshrl.u32 %v956, 16
        %v1189 = vshll.u32 %v956, 16
        %v1191 = vrot.slane %v1189, 1
        %v1192 = vor.u32 %v1187, %v1191
        %v1194 = vshrl.u32 %v957, 16
        %v1196 = vshll.u32 %v957, 16
        %v1198 = vrot.slane %v1196, 1
        %v1199 = vor.u32 %v1194, %v1198
        %v1201 = vshrl.u32 %v958, 16
        %v1203 = vshll.u32 %v958, 16
        %v1205 = vrot.slane %v1203, 1
        %v1206 = vor.u32 %v1201, %v1205
        %v1208 = vshrl.u32 %v959, 16
        %v1210 = vshll.u32 %v959, 16
        %v1212 = vrot.slane %v1210, 1
        %v1213 = vor.u32 %v1208, %v1212
        %v1215 = vshrl.u32 %v960, 16
        %v1217 = vshll.u32 %v960, 16
        %v1219 = vrot.slane %v1217, 1
        %v1220 = vor.u32 %v1215, %v1219
        %v1222 = vshrl.u32 %v961, 16
        %v1224 = vshll.u32 %v961, 16
        %v1226 = vrot.slane %v1224, 1
        %v1227 = vor.u32 %v1222, %v1226
        %v1229 = vshrl.u32 %v962, 16
        %v1231 = vshll.u32 %v962, 16
        %v1233 = vrot.slane %v1231, 1
        %v1234 = vor.u32 %v1229, %v1233
        %v1236 = vshrl.u32 %v963, 16
        %v1238 = vshll.u32 %v963, 16
        %v1240 = vrot.slane %v1238, 1
        %v1241 = vor.u32 %v1236, %v1240
        %v1243 = vshrl.u32 %v964, 16
        %v1245 = vshll.u32 %v964, 16
        %v1247 = vrot.slane %v1245, 1
        %v1248 = vor.u32 %v1243, %v1247
        %v1250 = vshrl.u32 %v965, 16
        %v1252 = vshll.u32 %v965, 16
        %v1254 = vrot.slane %v1252, 1
        %v1255 = vor.u32 %v1250, %v1254
        %v1257 = vshrl.u32 %v966, 16
        %v1259 = vshll.u32 %v966, 16
        %v1261 = vrot.slane %v1259, 1
        %v1262 = vor.u32 %v1257, %v1261
        %v1264 = vshrl.u32 %v967, 16
        %v1266 = vshll.u32 %v967, 16
        %v1268 = vrot.slane %v1266, 1
        %v1269 = vor.u32 %v1264, %v1268
        %v1271 = vshrl.u32 %v968, 16
        %v1273 = vshll.u32 %v968, 16
        %v1275 = vrot.slane %v1273, 1
        %v1276 = vor.u32 %v1271, %v1275
        %v1278 = vshrl.u32 %v969, 16
        %v1280 = vshll.u32 %v969, 16
        %v1282 = vrot.slane %v1280, 1
        %v1283 = vor.u32 %v1278, %v1282
        %v1285 = vshrl.u32 %v970, 16
        %v1287 = vshll.u32 %v970, 16
        %v1289 = vrot.slane %v1287, 1
        %v1290 = vor.u32 %v1285, %v1289
        %v1292 = vshrl.u32 %v971, 16
        %v1294 = vshll.u32 %v971, 16
        %v1296 = vrot.slane %v1294, 1
        %v1297 = vor.u32 %v1292, %v1296
        %v1299 = vshrl.u32 %v972, 16
        %v1301 = vshll.u32 %v972, 16
        %v1303 = vrot.slane %v1301, 1
        %v1304 = vor.u32 %v1299, %v1303
        %v1306 = vshrl.u32 %v973, 16
        %v1308 = vshll.u32 %v973, 16
        %v1310 = vrot.slane %v1308, 1
        %v1311 = vor.u32 %v1306, %v1310
        %v1313 = vshrl.u32 %v974, 16
        %v1315 = vshll.u32 %v974, 16
        %v1317 = vrot.slane %v1315, 1
        %v1318 = vor.u32 %v1313, %v1317
        %v1320 = vshrl.u32 %v975, 16
        %v1322 = vshll.u32 %v975, 16
        %v1324 = vrot.slane %v1322, 1
        %v1325 = vor.u32 %v1320, %v1324
        %v1327 = vshrl.u32 %v976, 16
        %v1329 = vshll.u32 %v976, 16
        %v1331 = vrot.slane %v1329, 1
        %v1332 = vor.u32 %v1327, %v1331
        %v1334 = vshrl.u32 %v977, 16
        %v1336 = vshll.u32 %v977, 16
        %v1338 = vrot.slane %v1336, 1
        %v1339 = vor.u32 %v1334, %v1338
        %v1341 = vshrl.u32 %v978, 16
        %v1343 = vshll.u32 %v978, 16
        %v1345 = vrot.slane %v1343, 1
        %v1346 = vor.u32 %v1341, %v1345
        %v1348 = vshrl.u32 %v979, 16
        %v1350 = vshll.u32 %v979, 16
        %v1352 = vrot.slane %v1350, 1
        %v1353 = vor.u32 %v1348, %v1352
        %v1355 = vshrl.u32 %v980, 16
        %v1357 = vshll.u32 %v980, 16
        %v1359 = vrot.slane %v1357, 1
        %v1360 = vor.u32 %v1355, %v1359
        %v1362 = vshrl.u32 %v981, 16
        %v1364 = vshll.u32 %v981, 16
        %v1366 = vrot.slane %v1364, 1
        %v1367 = vor.u32 %v1362, %v1366
        %v1369 = vshrl.u32 %v982, 16
        %v1371 = vshll.u32 %v982, 16
        %v1373 = vrot.slane %v1371, 1
        %v1374 = vor.u32 %v1369, %v1373
        %v1376 = vshrl.u32 %v983, 16
        %v1378 = vshll.u32 %v983, 16
        %v1380 = vrot.slane %v1378, 1
        %v1381 = vor.u32 %v1376, %v1380
        %v1383 = vshrl.u32 %v984, 16
        %v1385 = vshll.u32 %v984, 16
        %v1387 = vrot.slane %v1385, 1
        %v1388 = vor.u32 %v1383, %v1387
        %v1390 = vshrl.u32 %v985, 16
        %v1392 = vshll.u32 %v985, 16
        %v1394 = vrot.slane %v1392, 1
        %v1395 = vor.u32 %v1390, %v1394
        %v1397 = vshrl.u32 %v986, 16
        %v1399 = vshll.u32 %v986, 16
        %v1401 = vrot.slane %v1399, 1
        %v1402 = vor.u32 %v1397, %v1401
        %v1404 = vshrl.u32 %v987, 16
        %v1406 = vshll.u32 %v987, 16
        %v1408 = vrot.slane %v1406, 1
        %v1409 = vor.u32 %v1404, %v1408
        %v1411 = vshrl.u32 %v988, 16
        %v1413 = vshll.u32 %v988, 16
        %v1415 = vrot.slane %v1413, 1
        %v1416 = vor.u32 %v1411, %v1415
        %v1418 = vshrl.u32 %v989, 16
        %v1420 = vshll.u32 %v989, 16
        %v1422 = vrot.slane %v1420, 1
        %v1423 = vor.u32 %v1418, %v1422
        %v1425 = vshrl.u32 %v990, 16
        %v1427 = vshll.u32 %v990, 16
        %v1429 = vrot.slane %v1427, 1
        %v1430 = vor.u32 %v1425, %v1429
        %v1432 = vshrl.u32 %v991, 16
        %v1434 = vshll.u32 %v991, 16
        %v1436 = vrot.slane %v1434, 1
        %v1437 = vor.u32 %v1432, %v1436
        %v1439 = vshrl.u32 %v992, 16
        %v1441 = vshll.u32 %v992, 16
        %v1443 = vrot.slane %v1441, 1
        %v1444 = vor.u32 %v1439, %v1443
        %v1446 = vshrl.u32 %v993, 16
        %v1448 = vshll.u32 %v993, 16
        %v1450 = vrot.slane %v1448, 1
        %v1451 = vor.u32 %v1446, %v1450
        %v1453 = vshrl.u32 %v994, 16
        %v1455 = vshll.u32 %v994, 16
        %v1457 = vrot.slane %v1455, 1
        %v1458 = vor.u32 %v1453, %v1457
        %v1460 = vshrl.u32 %v995, 16
        %v1462 = vshll.u32 %v995, 16
        %v1464 = vrot.slane %v1462, 1
        %v1465 = vor.u32 %v1460, %v1464
        %v1467 = vshrl.u32 %v996, 16
        %v1469 = vshll.u32 %v996, 16
        %v1471 = vrot.slane %v1469, 1
        %v1472 = vor.u32 %v1467, %v1471
        %v1474 = vshrl.u32 %v997, 16
        %v1476 = vshll.u32 %v997, 16
        %v1478 = vrot.slane %v1476, 1
        %v1479 = vor.u32 %v1474, %v1478
        %v1481 = vshrl.u32 %v998, 16
        %v1483 = vshll.u32 %v998, 16
        %v1485 = vrot.slane %v1483, 1
        %v1486 = vor.u32 %v1481, %v1485
        %v1488 = vshrl.u32 %v999, 16
        %v1490 = vshll.u32 %v999, 16
        %v1492 = vrot.slane %v1490, 1
        %v1493 = vor.u32 %v1488, %v1492
        %v1495 = vshrl.u32 %v1000, 16
        %v1497 = vshll.u32 %v1000, 16
        %v1499 = vrot.slane %v1497, 1
        %v1500 = vor.u32 %v1495, %v1499
        %v1502 = vshrl.u32 %v1001, 16
        %v1504 = vshll.u32 %v1001, 16
        %v1506 = vrot.slane %v1504, 1
        %v1507 = vor.u32 %v1502, %v1506
        %v1509 = vshrl.u32 %v1002, 16
        %v1511 = vshll.u32 %v1002, 16
        %v1513 = vrot.slane %v1511, 1
        %v1514 = vor.u32 %v1509, %v1513
        %v1516 = vshrl.u32 %v1003, 16
        %v1518 = vshll.u32 %v1003, 16
        %v1520 = vrot.slane %v1518, 1
        %v1521 = vor.u32 %v1516, %v1520
        %v1523 = vshrl.u32 %v1004, 16
        %v1525 = vshll.u32 %v1004, 16
        %v1527 = vrot.slane %v1525, 1
        %v1528 = vor.u32 %v1523, %v1527
        %v1530 = vshrl.u32 %v1005, 16
        %v1532 = vshll.u32 %v1005, 16
        %v1534 = vrot.slane %v1532, 1
        %v1535 = vor.u32 %v1530, %v1534
        %v1537 = vshrl.u32 %v1006, 16
        %v1539 = vshll.u32 %v1006, 16
        %v1541 = vrot.slane %v1539, 1
        %v1542 = vor.u32 %v1537, %v1541
        %v1544 = vshrl.u32 %v1007, 16
        %v1546 = vshll.u32 %v1007, 16
        %v1548 = vrot.slane %v1546, 1
        %v1549 = vor.u32 %v1544, %v1548
        %v1551 = vshrl.u32 %v1008, 16
        %v1553 = vshll.u32 %v1008, 16
        %v1555 = vrot.slane %v1553, 1
        %v1556 = vor.u32 %v1551, %v1555
        %v1558 = vshrl.u32 %v1009, 16
        %v1560 = vshll.u32 %v1009, 16
        %v1562 = vrot.slane %v1560, 1
        %v1563 = vor.u32 %v1558, %v1562
        %v1565 = vshrl.u32 %v1010, 16
        %v1567 = vshll.u32 %v1010, 16
        %v1569 = vrot.slane %v1567, 1
        %v1570 = vor.u32 %v1565, %v1569
        %1571 = vrot.lane.b32.xlu0 %v1017, 4
        %v1572 = vpop.permute.xlu0 %1571
        %1573 = vrot.lane.b32.xlu0 %v1024, 4
        %v1574 = vpop.permute.xlu0 %1573
        %1575 = vrot.lane.b32.xlu0 %v1031, 4
        %v1576 = vpop.permute.xlu0 %1575
        %1577 = vrot.lane.b32.xlu0 %v1038, 4
        %v1578 = vpop.permute.xlu0 %1577
        %1579 = vrot.lane.b32.xlu0 %v1045, 4
        %v1580 = vpop.permute.xlu0 %1579
        %1581 = vrot.lane.b32.xlu0 %v1052, 4
        %v1582 = vpop.permute.xlu0 %1581
        %1583 = vrot.lane.b32.xlu0 %v1059, 4
        %v1584 = vpop.permute.xlu0 %1583
        %1585 = vrot.lane.b32.xlu0 %v1066, 4
        %v1586 = vpop.permute.xlu0 %1585
        %1587 = vrot.lane.b32.xlu0 %v1073, 4
        %v1588 = vpop.permute.xlu0 %1587
        %1589 = vrot.lane.b32.xlu0 %v1080, 4
        %v1590 = vpop.permute.xlu0 %1589
        %1591 = vrot.lane.b32.xlu0 %v1087, 4
        %v1592 = vpop.permute.xlu0 %1591
        %1593 = vrot.lane.b32.xlu0 %v1094, 4
        %v1594 = vpop.permute.xlu0 %1593
        %1595 = vrot.lane.b32.xlu0 %v1101, 4
        %v1596 = vpop.permute.xlu0 %1595
        %1597 = vrot.lane.b32.xlu0 %v1108, 4
        %v1598 = vpop.permute.xlu0 %1597
        %1599 = vrot.lane.b32.xlu0 %v1115, 4
        %v1600 = vpop.permute.xlu0 %1599
        %1601 = vrot.lane.b32.xlu0 %v1122, 4
        %v1602 = vpop.permute.xlu0 %1601
        %1603 = vrot.lane.b32.xlu0 %v1129, 4
        %v1604 = vpop.permute.xlu0 %1603
        %1605 = vrot.lane.b32.xlu0 %v1136, 4
        %v1606 = vpop.permute.xlu0 %1605
        %1607 = vrot.lane.b32.xlu0 %v1143, 4
        %v1608 = vpop.permute.xlu0 %1607
        %1609 = vrot.lane.b32.xlu0 %v1150, 4
        %v1610 = vpop.permute.xlu0 %1609
        %1611 = vrot.lane.b32.xlu0 %v1157, 4
        %v1612 = vpop.permute.xlu0 %1611
        %1613 = vrot.lane.b32.xlu0 %v1164, 4
        %v1614 = vpop.permute.xlu0 %1613
        %1615 = vrot.lane.b32.xlu0 %v1171, 4
        %v1616 = vpop.permute.xlu0 %1615
        %1617 = vrot.lane.b32.xlu0 %v1178, 4
        %v1618 = vpop.permute.xlu0 %1617
        %1619 = vrot.lane.b32.xlu0 %v1185, 4
        %v1620 = vpop.permute.xlu0 %1619
        %1621 = vrot.lane.b32.xlu0 %v1192, 4
        %v1622 = vpop.permute.xlu0 %1621
        %1623 = vrot.lane.b32.xlu0 %v1199, 4
        %v1624 = vpop.permute.xlu0 %1623
        %1625 = vrot.lane.b32.xlu0 %v1206, 4
        %v1626 = vpop.permute.xlu0 %1625
        %1627 = vrot.lane.b32.xlu0 %v1213, 4
        %v1628 = vpop.permute.xlu0 %1627
        %1629 = vrot.lane.b32.xlu0 %v1220, 4
        %v1630 = vpop.permute.xlu0 %1629
        %1631 = vrot.lane.b32.xlu0 %v1227, 4
        %v1632 = vpop.permute.xlu0 %1631
        %1633 = vrot.lane.b32.xlu0 %v1234, 4
        %v1634 = vpop.permute.xlu0 %1633
        %1635 = vrot.lane.b32.xlu0 %v1241, 4
        %v1636 = vpop.permute.xlu0 %1635
        %1637 = vrot.lane.b32.xlu0 %v1248, 4
        %v1638 = vpop.permute.xlu0 %1637
        %1639 = vrot.lane.b32.xlu0 %v1255, 4
        %v1640 = vpop.permute.xlu0 %1639
        %1641 = vrot.lane.b32.xlu0 %v1262, 4
        %v1642 = vpop.permute.xlu0 %1641
        %1643 = vrot.lane.b32.xlu0 %v1269, 4
        %v1644 = vpop.permute.xlu0 %1643
        %1645 = vrot.lane.b32.xlu0 %v1276, 4
        %v1646 = vpop.permute.xlu0 %1645
        %1647 = vrot.lane.b32.xlu0 %v1283, 4
        %v1648 = vpop.permute.xlu0 %1647
        %1649 = vrot.lane.b32.xlu0 %v1290, 4
        %v1650 = vpop.permute.xlu0 %1649
        %1651 = vrot.lane.b32.xlu0 %v1297, 4
        %v1652 = vpop.permute.xlu0 %1651
        %1653 = vrot.lane.b32.xlu0 %v1304, 4
        %v1654 = vpop.permute.xlu0 %1653
        %1655 = vrot.lane.b32.xlu0 %v1311, 4
        %v1656 = vpop.permute.xlu0 %1655
        %1657 = vrot.lane.b32.xlu0 %v1318, 4
        %v1658 = vpop.permute.xlu0 %1657
        %1659 = vrot.lane.b32.xlu0 %v1325, 4
        %v1660 = vpop.permute.xlu0 %1659
        %1661 = vrot.lane.b32.xlu0 %v1332, 4
        %v1662 = vpop.permute.xlu0 %1661
        %1663 = vrot.lane.b32.xlu0 %v1339, 4
        %v1664 = vpop.permute.xlu0 %1663
        %1665 = vrot.lane.b32.xlu0 %v1346, 4
        %v1666 = vpop.permute.xlu0 %1665
        %1667 = vrot.lane.b32.xlu0 %v1353, 4
        %v1668 = vpop.permute.xlu0 %1667
        %1669 = vrot.lane.b32.xlu0 %v1360, 4
        %v1670 = vpop.permute.xlu0 %1669
        %1671 = vrot.lane.b32.xlu0 %v1367, 4
        %v1672 = vpop.permute.xlu0 %1671
        %1673 = vrot.lane.b32.xlu0 %v1374, 4
        %v1674 = vpop.permute.xlu0 %1673
        %1675 = vrot.lane.b32.xlu0 %v1381, 4
        %v1676 = vpop.permute.xlu0 %1675
        %1677 = vrot.lane.b32.xlu0 %v1388, 4
        %v1678 = vpop.permute.xlu0 %1677
        %1679 = vrot.lane.b32.xlu0 %v1395, 4
        %v1680 = vpop.permute.xlu0 %1679
        %1681 = vrot.lane.b32.xlu0 %v1402, 4
        %v1682 = vpop.permute.xlu0 %1681
        %1683 = vrot.lane.b32.xlu0 %v1409, 4
        %v1684 = vpop.permute.xlu0 %1683
        %1685 = vrot.lane.b32.xlu0 %v1416, 4
        %v1686 = vpop.permute.xlu0 %1685
        %1687 = vrot.lane.b32.xlu0 %v1423, 4
        %v1688 = vpop.permute.xlu0 %1687
        %1689 = vrot.lane.b32.xlu0 %v1430, 4
        %v1690 = vpop.permute.xlu0 %1689
        %1691 = vrot.lane.b32.xlu0 %v1437, 4
        %v1692 = vpop.permute.xlu0 %1691
        %1693 = vrot.lane.b32.xlu0 %v1444, 4
        %v1694 = vpop.permute.xlu0 %1693
        %1695 = vrot.lane.b32.xlu0 %v1451, 4
        %v1696 = vpop.permute.xlu0 %1695
        %1697 = vrot.lane.b32.xlu0 %v1458, 4
        %v1698 = vpop.permute.xlu0 %1697
        %1699 = vrot.lane.b32.xlu0 %v1465, 4
        %v1700 = vpop.permute.xlu0 %1699
        %1701 = vrot.lane.b32.xlu0 %v1472, 4
        %v1702 = vpop.permute.xlu0 %1701
        %1703 = vrot.lane.b32.xlu0 %v1479, 4
        %v1704 = vpop.permute.xlu0 %1703
        %1705 = vrot.lane.b32.xlu0 %v1486, 4
        %v1706 = vpop.permute.xlu0 %1705
        %1707 = vrot.lane.b32.xlu0 %v1493, 4
        %v1708 = vpop.permute.xlu0 %1707
        %1709 = vrot.lane.b32.xlu0 %v1500, 4
        %v1710 = vpop.permute.xlu0 %1709
        %1711 = vrot.lane.b32.xlu0 %v1507, 4
        %v1712 = vpop.permute.xlu0 %1711
        %1713 = vrot.lane.b32.xlu0 %v1514, 4
        %v1714 = vpop.permute.xlu0 %1713
        %1715 = vrot.lane.b32.xlu0 %v1521, 4
        %v1716 = vpop.permute.xlu0 %1715
        %1717 = vrot.lane.b32.xlu0 %v1528, 4
        %v1718 = vpop.permute.xlu0 %1717
        %1719 = vrot.lane.b32.xlu0 %v1535, 4
        %v1720 = vpop.permute.xlu0 %1719
        %1721 = vrot.lane.b32.xlu0 %v1542, 4
        %v1722 = vpop.permute.xlu0 %1721
        %1723 = vrot.lane.b32.xlu0 %v1549, 4
        %v1724 = vpop.permute.xlu0 %1723
        %1725 = vrot.lane.b32.xlu0 %v1556, 4
        %v1726 = vpop.permute.xlu0 %1725
        %1727 = vrot.lane.b32.xlu0 %v1563, 4
        %v1728 = vpop.permute.xlu0 %1727
        %1729 = vrot.lane.b32.xlu0 %v1570, 4
        %v1730 = vpop.permute.xlu0 %1729
        %v1731 = vrot.slane %v931, 1
        %v1732 = vrot.slane %v932, 1
        %v1733 = vrot.slane %v933, 1
        %v1734 = vrot.slane %v934, 1
        %v1735 = vrot.slane %v935, 1
        %v1736 = vrot.slane %v936, 1
        %v1737 = vrot.slane %v937, 1
        %v1738 = vrot.slane %v938, 1
        %v1739 = vrot.slane %v939, 1
        %v1740 = vrot.slane %v940, 1
        %v1741 = vrot.slane %v941, 1
        %v1742 = vrot.slane %v942, 1
        %v1743 = vrot.slane %v943, 1
        %v1744 = vrot.slane %v944, 1
        %v1745 = vrot.slane %v945, 1
        %v1746 = vrot.slane %v946, 1
        %v1747 = vrot.slane %v947, 1
        %v1748 = vrot.slane %v948, 1
        %v1749 = vrot.slane %v949, 1
        %v1750 = vrot.slane %v950, 1
        %v1751 = vrot.slane %v951, 1
        %v1752 = vrot.slane %v952, 1
        %v1753 = vrot.slane %v953, 1
        %v1754 = vrot.slane %v954, 1
        %v1755 = vrot.slane %v955, 1
        %v1756 = vrot.slane %v956, 1
        %v1757 = vrot.slane %v957, 1
        %v1758 = vrot.slane %v958, 1
        %v1759 = vrot.slane %v959, 1
        %v1760 = vrot.slane %v960, 1
        %v1761 = vrot.slane %v961, 1
        %v1762 = vrot.slane %v962, 1
        %v1763 = vrot.slane %v963, 1
        %v1764 = vrot.slane %v964, 1
        %v1765 = vrot.slane %v965, 1
        %v1766 = vrot.slane %v966, 1
        %v1767 = vrot.slane %v967, 1
        %v1768 = vrot.slane %v968, 1
        %v1769 = vrot.slane %v969, 1
        %v1770 = vrot.slane %v970, 1
        %v1771 = vrot.slane %v971, 1
        %v1772 = vrot.slane %v972, 1
        %v1773 = vrot.slane %v973, 1
        %v1774 = vrot.slane %v974, 1
        %v1775 = vrot.slane %v975, 1
        %v1776 = vrot.slane %v976, 1
        %v1777 = vrot.slane %v977, 1
        %v1778 = vrot.slane %v978, 1
        %v1779 = vrot.slane %v979, 1
        %v1780 = vrot.slane %v980, 1
        %v1781 = vrot.slane %v981, 1
        %v1782 = vrot.slane %v982, 1
        %v1783 = vrot.slane %v983, 1
        %v1784 = vrot.slane %v984, 1
        %v1785 = vrot.slane %v985, 1
        %v1786 = vrot.slane %v986, 1
        %v1787 = vrot.slane %v987, 1
        %v1788 = vrot.slane %v988, 1
        %v1789 = vrot.slane %v989, 1
        %v1790 = vrot.slane %v990, 1
        %v1791 = vrot.slane %v991, 1
        %v1792 = vrot.slane %v992, 1
        %v1793 = vrot.slane %v993, 1
        %v1794 = vrot.slane %v994, 1
        %v1795 = vrot.slane %v995, 1
        %v1796 = vrot.slane %v996, 1
        %v1797 = vrot.slane %v997, 1
        %v1798 = vrot.slane %v998, 1
        %v1799 = vrot.slane %v999, 1
        %v1800 = vrot.slane %v1000, 1
        %v1801 = vrot.slane %v1001, 1
        %v1802 = vrot.slane %v1002, 1
        %v1803 = vrot.slane %v1003, 1
        %v1804 = vrot.slane %v1004, 1
        %v1805 = vrot.slane %v1005, 1
        %v1806 = vrot.slane %v1006, 1
        %v1807 = vrot.slane %v1007, 1
        %v1808 = vrot.slane %v1008, 1
        %v1809 = vrot.slane %v1009, 1
        %v1810 = vrot.slane %v1010, 1
        %1811 = vrot.lane.b32.xlu0 %v1731, 8
        %v1812 = vpop.permute.xlu0 %1811
        %1813 = vrot.lane.b32.xlu0 %v1732, 8
        %v1814 = vpop.permute.xlu0 %1813
        %1815 = vrot.lane.b32.xlu0 %v1733, 8
        %v1816 = vpop.permute.xlu0 %1815
        %1817 = vrot.lane.b32.xlu0 %v1734, 8
        %v1818 = vpop.permute.xlu0 %1817
        %1819 = vrot.lane.b32.xlu0 %v1735, 8
        %v1820 = vpop.permute.xlu0 %1819
        %1821 = vrot.lane.b32.xlu0 %v1736, 8
        %v1822 = vpop.permute.xlu0 %1821
        %1823 = vrot.lane.b32.xlu0 %v1737, 8
        %v1824 = vpop.permute.xlu0 %1823
        %1825 = vrot.lane.b32.xlu0 %v1738, 8
        %v1826 = vpop.permute.xlu0 %1825
        %1827 = vrot.lane.b32.xlu0 %v1739, 8
        %v1828 = vpop.permute.xlu0 %1827
        %1829 = vrot.lane.b32.xlu0 %v1740, 8
        %v1830 = vpop.permute.xlu0 %1829
        %1831 = vrot.lane.b32.xlu0 %v1741, 8
        %v1832 = vpop.permute.xlu0 %1831
        %1833 = vrot.lane.b32.xlu0 %v1742, 8
        %v1834 = vpop.permute.xlu0 %1833
        %1835 = vrot.lane.b32.xlu0 %v1743, 8
        %v1836 = vpop.permute.xlu0 %1835
        %1837 = vrot.lane.b32.xlu0 %v1744, 8
        %v1838 = vpop.permute.xlu0 %1837
        %1839 = vrot.lane.b32.xlu0 %v1745, 8
        %v1840 = vpop.permute.xlu0 %1839
        %1841 = vrot.lane.b32.xlu0 %v1746, 8
        %v1842 = vpop.permute.xlu0 %1841
        %1843 = vrot.lane.b32.xlu0 %v1747, 8
        %v1844 = vpop.permute.xlu0 %1843
        %1845 = vrot.lane.b32.xlu0 %v1748, 8
        %v1846 = vpop.permute.xlu0 %1845
        %1847 = vrot.lane.b32.xlu0 %v1749, 8
        %v1848 = vpop.permute.xlu0 %1847
        %1849 = vrot.lane.b32.xlu0 %v1750, 8
        %v1850 = vpop.permute.xlu0 %1849
        %1851 = vrot.lane.b32.xlu0 %v1751, 8
        %v1852 = vpop.permute.xlu0 %1851
        %1853 = vrot.lane.b32.xlu0 %v1752, 8
        %v1854 = vpop.permute.xlu0 %1853
        %1855 = vrot.lane.b32.xlu0 %v1753, 8
        %v1856 = vpop.permute.xlu0 %1855
        %1857 = vrot.lane.b32.xlu0 %v1754, 8
        %v1858 = vpop.permute.xlu0 %1857
        %1859 = vrot.lane.b32.xlu0 %v1755, 8
        %v1860 = vpop.permute.xlu0 %1859
        %1861 = vrot.lane.b32.xlu0 %v1756, 8
        %v1862 = vpop.permute.xlu0 %1861
        %1863 = vrot.lane.b32.xlu0 %v1757, 8
        %v1864 = vpop.permute.xlu0 %1863
        %1865 = vrot.lane.b32.xlu0 %v1758, 8
        %v1866 = vpop.permute.xlu0 %1865
        %1867 = vrot.lane.b32.xlu0 %v1759, 8
        %v1868 = vpop.permute.xlu0 %1867
        %1869 = vrot.lane.b32.xlu0 %v1760, 8
        %v1870 = vpop.permute.xlu0 %1869
        %1871 = vrot.lane.b32.xlu0 %v1761, 8
        %v1872 = vpop.permute.xlu0 %1871
        %1873 = vrot.lane.b32.xlu0 %v1762, 8
        %v1874 = vpop.permute.xlu0 %1873
        %1875 = vrot.lane.b32.xlu0 %v1763, 8
        %v1876 = vpop.permute.xlu0 %1875
        %1877 = vrot.lane.b32.xlu0 %v1764, 8
        %v1878 = vpop.permute.xlu0 %1877
        %1879 = vrot.lane.b32.xlu0 %v1765, 8
        %v1880 = vpop.permute.xlu0 %1879
        %1881 = vrot.lane.b32.xlu0 %v1766, 8
        %v1882 = vpop.permute.xlu0 %1881
        %1883 = vrot.lane.b32.xlu0 %v1767, 8
        %v1884 = vpop.permute.xlu0 %1883
        %1885 = vrot.lane.b32.xlu0 %v1768, 8
        %v1886 = vpop.permute.xlu0 %1885
        %1887 = vrot.lane.b32.xlu0 %v1769, 8
        %v1888 = vpop.permute.xlu0 %1887
        %1889 = vrot.lane.b32.xlu0 %v1770, 8
        %v1890 = vpop.permute.xlu0 %1889
        %1891 = vrot.lane.b32.xlu0 %v1771, 8
        %v1892 = vpop.permute.xlu0 %1891
        %1893 = vrot.lane.b32.xlu0 %v1772, 8
        %v1894 = vpop.permute.xlu0 %1893
        %1895 = vrot.lane.b32.xlu0 %v1773, 8
        %v1896 = vpop.permute.xlu0 %1895
        %1897 = vrot.lane.b32.xlu0 %v1774, 8
        %v1898 = vpop.permute.xlu0 %1897
        %1899 = vrot.lane.b32.xlu0 %v1775, 8
        %v1900 = vpop.permute.xlu0 %1899
        %1901 = vrot.lane.b32.xlu0 %v1776, 8
        %v1902 = vpop.permute.xlu0 %1901
        %1903 = vrot.lane.b32.xlu0 %v1777, 8
        %v1904 = vpop.permute.xlu0 %1903
        %1905 = vrot.lane.b32.xlu0 %v1778, 8
        %v1906 = vpop.permute.xlu0 %1905
        %1907 = vrot.lane.b32.xlu0 %v1779, 8
        %v1908 = vpop.permute.xlu0 %1907
        %1909 = vrot.lane.b32.xlu0 %v1780, 8
        %v1910 = vpop.permute.xlu0 %1909
        %1911 = vrot.lane.b32.xlu0 %v1781, 8
        %v1912 = vpop.permute.xlu0 %1911
        %1913 = vrot.lane.b32.xlu0 %v1782, 8
        %v1914 = vpop.permute.xlu0 %1913
        %1915 = vrot.lane.b32.xlu0 %v1783, 8
        %v1916 = vpop.permute.xlu0 %1915
        %1917 = vrot.lane.b32.xlu0 %v1784, 8
        %v1918 = vpop.permute.xlu0 %1917
        %1919 = vrot.lane.b32.xlu0 %v1785, 8
        %v1920 = vpop.permute.xlu0 %1919
        %1921 = vrot.lane.b32.xlu0 %v1786, 8
        %v1922 = vpop.permute.xlu0 %1921
        %1923 = vrot.lane.b32.xlu0 %v1787, 8
        %v1924 = vpop.permute.xlu0 %1923
        %1925 = vrot.lane.b32.xlu0 %v1788, 8
        %v1926 = vpop.permute.xlu0 %1925
        %1927 = vrot.lane.b32.xlu0 %v1789, 8
        %v1928 = vpop.permute.xlu0 %1927
        %1929 = vrot.lane.b32.xlu0 %v1790, 8
        %v1930 = vpop.permute.xlu0 %1929
        %1931 = vrot.lane.b32.xlu0 %v1791, 8
        %v1932 = vpop.permute.xlu0 %1931
        %1933 = vrot.lane.b32.xlu0 %v1792, 8
        %v1934 = vpop.permute.xlu0 %1933
        %1935 = vrot.lane.b32.xlu0 %v1793, 8
        %v1936 = vpop.permute.xlu0 %1935
        %1937 = vrot.lane.b32.xlu0 %v1794, 8
        %v1938 = vpop.permute.xlu0 %1937
        %1939 = vrot.lane.b32.xlu0 %v1795, 8
        %v1940 = vpop.permute.xlu0 %1939
        %1941 = vrot.lane.b32.xlu0 %v1796, 8
        %v1942 = vpop.permute.xlu0 %1941
        %1943 = vrot.lane.b32.xlu0 %v1797, 8
        %v1944 = vpop.permute.xlu0 %1943
        %1945 = vrot.lane.b32.xlu0 %v1798, 8
        %v1946 = vpop.permute.xlu0 %1945
        %1947 = vrot.lane.b32.xlu0 %v1799, 8
        %v1948 = vpop.permute.xlu0 %1947
        %1949 = vrot.lane.b32.xlu0 %v1800, 8
        %v1950 = vpop.permute.xlu0 %1949
        %1951 = vrot.lane.b32.xlu0 %v1801, 8
        %v1952 = vpop.permute.xlu0 %1951
        %1953 = vrot.lane.b32.xlu0 %v1802, 8
        %v1954 = vpop.permute.xlu0 %1953
        %1955 = vrot.lane.b32.xlu0 %v1803, 8
        %v1956 = vpop.permute.xlu0 %1955
        %1957 = vrot.lane.b32.xlu0 %v1804, 8
        %v1958 = vpop.permute.xlu0 %1957
        %1959 = vrot.lane.b32.xlu0 %v1805, 8
        %v1960 = vpop.permute.xlu0 %1959
        %1961 = vrot.lane.b32.xlu0 %v1806, 8
        %v1962 = vpop.permute.xlu0 %1961
        %1963 = vrot.lane.b32.xlu0 %v1807, 8
        %v1964 = vpop.permute.xlu0 %1963
        %1965 = vrot.lane.b32.xlu0 %v1808, 8
        %v1966 = vpop.permute.xlu0 %1965
        %1967 = vrot.lane.b32.xlu0 %v1809, 8
        %v1968 = vpop.permute.xlu0 %1967
        %1969 = vrot.lane.b32.xlu0 %v1810, 8
        %v1970 = vpop.permute.xlu0 %1969
        %v1981 = vunpack.c.l.b16 %v427
        %v1982 = vunpack.c.l.b16 %v447
        %v1983 = vunpack.c.l.b16 %v467
        %v1984 = vunpack.c.l.b16 %v487
        %v1985 = vunpack.c.l.b16 %v507
        %v1986 = vunpack.c.l.b16 %v527
        %v1987 = vunpack.c.l.b16 %v547
        %v1988 = vunpack.c.l.b16 %v567
        %v1989 = vunpack.c.l.b16 %v587
        %v1990 = vunpack.c.l.b16 %v607
        %v1991 = vpack.c.b16 %v773, %v773
        %v1992 = vpack.c.b16 %v775, %v775
        %v1993 = vpack.c.b16 %v777, %v777
        %v1994 = vpack.c.b16 %v779, %v779
        %v1995 = vpack.c.b16 %v781, %v781
        %v1996 = vpack.c.b16 %v783, %v783
        %v1997 = vpack.c.b16 %v785, %v785
        %v1998 = vpack.c.b16 %v1981, %v1981
        %v1999 = vpack.c.b16 %v789, %v789
        %v2000 = vpack.c.b16 %v791, %v791
        %v2001 = vpack.c.b16 %v793, %v793
        %v2002 = vpack.c.b16 %v795, %v795
        %v2003 = vpack.c.b16 %v797, %v797
        %v2004 = vpack.c.b16 %v799, %v799
        %v2005 = vpack.c.b16 %v801, %v801
        %v2006 = vpack.c.b16 %v1982, %v1982
        %v2007 = vpack.c.b16 %v805, %v805
        %v2008 = vpack.c.b16 %v807, %v807
        %v2009 = vpack.c.b16 %v809, %v809
        %v2010 = vpack.c.b16 %v811, %v811
        %v2011 = vpack.c.b16 %v813, %v813
        %v2012 = vpack.c.b16 %v815, %v815
        %v2013 = vpack.c.b16 %v817, %v817
        %v2014 = vpack.c.b16 %v1983, %v1983
        %v2015 = vpack.c.b16 %v821, %v821
        %v2016 = vpack.c.b16 %v823, %v823
        %v2017 = vpack.c.b16 %v825, %v825
        %v2018 = vpack.c.b16 %v827, %v827
        %v2019 = vpack.c.b16 %v829, %v829
        %v2020 = vpack.c.b16 %v831, %v831
        %v2021 = vpack.c.b16 %v833, %v833
        %v2022 = vpack.c.b16 %v1984, %v1984
        %v2023 = vpack.c.b16 %v837, %v837
        %v2024 = vpack.c.b16 %v839, %v839
        %v2025 = vpack.c.b16 %v841, %v841
        %v2026 = vpack.c.b16 %v843, %v843
        %v2027 = vpack.c.b16 %v845, %v845
        %v2028 = vpack.c.b16 %v847, %v847
        %v2029 = vpack.c.b16 %v849, %v849
        %v2030 = vpack.c.b16 %v1985, %v1985
        %v2031 = vpack.c.b16 %v853, %v853
        %v2032 = vpack.c.b16 %v855, %v855
        %v2033 = vpack.c.b16 %v857, %v857
        %v2034 = vpack.c.b16 %v859, %v859
        %v2035 = vpack.c.b16 %v861, %v861
        %v2036 = vpack.c.b16 %v863, %v863
        %v2037 = vpack.c.b16 %v865, %v865
        %v2038 = vpack.c.b16 %v1986, %v1986
        %v2039 = vpack.c.b16 %v869, %v869
        %v2040 = vpack.c.b16 %v871, %v871
        %v2041 = vpack.c.b16 %v873, %v873
        %v2042 = vpack.c.b16 %v875, %v875
        %v2043 = vpack.c.b16 %v877, %v877
        %v2044 = vpack.c.b16 %v879, %v879
        %v2045 = vpack.c.b16 %v881, %v881
        %v2046 = vpack.c.b16 %v1987, %v1987
        %v2047 = vpack.c.b16 %v885, %v885
        %v2048 = vpack.c.b16 %v887, %v887
        %v2049 = vpack.c.b16 %v889, %v889
        %v2050 = vpack.c.b16 %v891, %v891
        %v2051 = vpack.c.b16 %v893, %v893
        %v2052 = vpack.c.b16 %v895, %v895
        %v2053 = vpack.c.b16 %v897, %v897
        %v2054 = vpack.c.b16 %v1988, %v1988
        %v2055 = vpack.c.b16 %v901, %v901
        %v2056 = vpack.c.b16 %v903, %v903
        %v2057 = vpack.c.b16 %v905, %v905
        %v2058 = vpack.c.b16 %v907, %v907
        %v2059 = vpack.c.b16 %v909, %v909
        %v2060 = vpack.c.b16 %v911, %v911
        %v2061 = vpack.c.b16 %v913, %v913
        %v2062 = vpack.c.b16 %v1989, %v1989
        %v2063 = vpack.c.b16 %v917, %v917
        %v2064 = vpack.c.b16 %v919, %v919
        %v2065 = vpack.c.b16 %v921, %v921
        %v2066 = vpack.c.b16 %v923, %v923
        %v2067 = vpack.c.b16 %v925, %v925
        %v2068 = vpack.c.b16 %v927, %v927
        %v2069 = vpack.c.b16 %v929, %v929
        %v2070 = vpack.c.b16 %v1990, %v1990
        %2071 = vrot.lane.b32.xlu0 %v1991, 12
        %v2072 = vpop.permute.xlu0 %2071
        %2073 = vrot.lane.b32.xlu0 %v1992, 12
        %v2074 = vpop.permute.xlu0 %2073
        %2075 = vrot.lane.b32.xlu0 %v1993, 12
        %v2076 = vpop.permute.xlu0 %2075
        %2077 = vrot.lane.b32.xlu0 %v1994, 12
        %v2078 = vpop.permute.xlu0 %2077
        %2079 = vrot.lane.b32.xlu0 %v1995, 12
        %v2080 = vpop.permute.xlu0 %2079
        %2081 = vrot.lane.b32.xlu0 %v1996, 12
        %v2082 = vpop.permute.xlu0 %2081
        %2083 = vrot.lane.b32.xlu0 %v1997, 12
        %v2084 = vpop.permute.xlu0 %2083
        %2085 = vrot.lane.b32.xlu0 %v1998, 12
        %v2086 = vpop.permute.xlu0 %2085
        %2087 = vrot.lane.b32.xlu0 %v1999, 12
        %v2088 = vpop.permute.xlu0 %2087
        %2089 = vrot.lane.b32.xlu0 %v2000, 12
        %v2090 = vpop.permute.xlu0 %2089
        %2091 = vrot.lane.b32.xlu0 %v2001, 12
        %v2092 = vpop.permute.xlu0 %2091
        %2093 = vrot.lane.b32.xlu0 %v2002, 12
        %v2094 = vpop.permute.xlu0 %2093
        %2095 = vrot.lane.b32.xlu0 %v2003, 12
        %v2096 = vpop.permute.xlu0 %2095
        %2097 = vrot.lane.b32.xlu0 %v2004, 12
        %v2098 = vpop.permute.xlu0 %2097
        %2099 = vrot.lane.b32.xlu0 %v2005, 12
        %v2100 = vpop.permute.xlu0 %2099
        %2101 = vrot.lane.b32.xlu0 %v2006, 12
        %v2102 = vpop.permute.xlu0 %2101
        %2103 = vrot.lane.b32.xlu0 %v2007, 12
        %v2104 = vpop.permute.xlu0 %2103
        %2105 = vrot.lane.b32.xlu0 %v2008, 12
        %v2106 = vpop.permute.xlu0 %2105
        %2107 = vrot.lane.b32.xlu0 %v2009, 12
        %v2108 = vpop.permute.xlu0 %2107
        %2109 = vrot.lane.b32.xlu0 %v2010, 12
        %v2110 = vpop.permute.xlu0 %2109
        %2111 = vrot.lane.b32.xlu0 %v2011, 12
        %v2112 = vpop.permute.xlu0 %2111
        %2113 = vrot.lane.b32.xlu0 %v2012, 12
        %v2114 = vpop.permute.xlu0 %2113
        %2115 = vrot.lane.b32.xlu0 %v2013, 12
        %v2116 = vpop.permute.xlu0 %2115
        %2117 = vrot.lane.b32.xlu0 %v2014, 12
        %v2118 = vpop.permute.xlu0 %2117
        %2119 = vrot.lane.b32.xlu0 %v2015, 12
        %v2120 = vpop.permute.xlu0 %2119
        %2121 = vrot.lane.b32.xlu0 %v2016, 12
        %v2122 = vpop.permute.xlu0 %2121
        %2123 = vrot.lane.b32.xlu0 %v2017, 12
        %v2124 = vpop.permute.xlu0 %2123
        %2125 = vrot.lane.b32.xlu0 %v2018, 12
        %v2126 = vpop.permute.xlu0 %2125
        %2127 = vrot.lane.b32.xlu0 %v2019, 12
        %v2128 = vpop.permute.xlu0 %2127
        %2129 = vrot.lane.b32.xlu0 %v2020, 12
        %v2130 = vpop.permute.xlu0 %2129
        %2131 = vrot.lane.b32.xlu0 %v2021, 12
        %v2132 = vpop.permute.xlu0 %2131
        %2133 = vrot.lane.b32.xlu0 %v2022, 12
        %v2134 = vpop.permute.xlu0 %2133
        %2135 = vrot.lane.b32.xlu0 %v2023, 12
        %v2136 = vpop.permute.xlu0 %2135
        %2137 = vrot.lane.b32.xlu0 %v2024, 12
        %v2138 = vpop.permute.xlu0 %2137
        %2139 = vrot.lane.b32.xlu0 %v2025, 12
        %v2140 = vpop.permute.xlu0 %2139
        %2141 = vrot.lane.b32.xlu0 %v2026, 12
        %v2142 = vpop.permute.xlu0 %2141
        %2143 = vrot.lane.b32.xlu0 %v2027, 12
        %v2144 = vpop.permute.xlu0 %2143
        %2145 = vrot.lane.b32.xlu0 %v2028, 12
        %v2146 = vpop.permute.xlu0 %2145
        %2147 = vrot.lane.b32.xlu0 %v2029, 12
        %v2148 = vpop.permute.xlu0 %2147
        %2149 = vrot.lane.b32.xlu0 %v2030, 12
        %v2150 = vpop.permute.xlu0 %2149
        %2151 = vrot.lane.b32.xlu0 %v2031, 12
        %v2152 = vpop.permute.xlu0 %2151
        %2153 = vrot.lane.b32.xlu0 %v2032, 12
        %v2154 = vpop.permute.xlu0 %2153
        %2155 = vrot.lane.b32.xlu0 %v2033, 12
        %v2156 = vpop.permute.xlu0 %2155
        %2157 = vrot.lane.b32.xlu0 %v2034, 12
        %v2158 = vpop.permute.xlu0 %2157
        %2159 = vrot.lane.b32.xlu0 %v2035, 12
        %v2160 = vpop.permute.xlu0 %2159
        %2161 = vrot.lane.b32.xlu0 %v2036, 12
        %v2162 = vpop.permute.xlu0 %2161
        %2163 = vrot.lane.b32.xlu0 %v2037, 12
        %v2164 = vpop.permute.xlu0 %2163
        %2165 = vrot.lane.b32.xlu0 %v2038, 12
        %v2166 = vpop.permute.xlu0 %2165
        %2167 = vrot.lane.b32.xlu0 %v2039, 12
        %v2168 = vpop.permute.xlu0 %2167
        %2169 = vrot.lane.b32.xlu0 %v2040, 12
        %v2170 = vpop.permute.xlu0 %2169
        %2171 = vrot.lane.b32.xlu0 %v2041, 12
        %v2172 = vpop.permute.xlu0 %2171
        %2173 = vrot.lane.b32.xlu0 %v2042, 12
        %v2174 = vpop.permute.xlu0 %2173
        %2175 = vrot.lane.b32.xlu0 %v2043, 12
        %v2176 = vpop.permute.xlu0 %2175
        %2177 = vrot.lane.b32.xlu0 %v2044, 12
        %v2178 = vpop.permute.xlu0 %2177
        %2179 = vrot.lane.b32.xlu0 %v2045, 12
        %v2180 = vpop.permute.xlu0 %2179
        %2181 = vrot.lane.b32.xlu0 %v2046, 12
        %v2182 = vpop.permute.xlu0 %2181
        %2183 = vrot.lane.b32.xlu0 %v2047, 12
        %v2184 = vpop.permute.xlu0 %2183
        %2185 = vrot.lane.b32.xlu0 %v2048, 12
        %v2186 = vpop.permute.xlu0 %2185
        %2187 = vrot.lane.b32.xlu0 %v2049, 12
        %v2188 = vpop.permute.xlu0 %2187
        %2189 = vrot.lane.b32.xlu0 %v2050, 12
        %v2190 = vpop.permute.xlu0 %2189
        %2191 = vrot.lane.b32.xlu0 %v2051, 12
        %v2192 = vpop.permute.xlu0 %2191
        %2193 = vrot.lane.b32.xlu0 %v2052, 12
        %v2194 = vpop.permute.xlu0 %2193
        %2195 = vrot.lane.b32.xlu0 %v2053, 12
        %v2196 = vpop.permute.xlu0 %2195
        %2197 = vrot.lane.b32.xlu0 %v2054, 12
        %v2198 = vpop.permute.xlu0 %2197
        %2199 = vrot.lane.b32.xlu0 %v2055, 12
        %v2200 = vpop.permute.xlu0 %2199
        %2201 = vrot.lane.b32.xlu0 %v2056, 12
        %v2202 = vpop.permute.xlu0 %2201
        %2203 = vrot.lane.b32.xlu0 %v2057, 12
        %v2204 = vpop.permute.xlu0 %2203
        %2205 = vrot.lane.b32.xlu0 %v2058, 12
        %v2206 = vpop.permute.xlu0 %2205
        %2207 = vrot.lane.b32.xlu0 %v2059, 12
        %v2208 = vpop.permute.xlu0 %2207
        %2209 = vrot.lane.b32.xlu0 %v2060, 12
        %v2210 = vpop.permute.xlu0 %2209
        %2211 = vrot.lane.b32.xlu0 %v2061, 12
        %v2212 = vpop.permute.xlu0 %2211
        %2213 = vrot.lane.b32.xlu0 %v2062, 12
        %v2214 = vpop.permute.xlu0 %2213
        %2215 = vrot.lane.b32.xlu0 %v2063, 12
        %v2216 = vpop.permute.xlu0 %2215
        %2217 = vrot.lane.b32.xlu0 %v2064, 12
        %v2218 = vpop.permute.xlu0 %2217
        %2219 = vrot.lane.b32.xlu0 %v2065, 12
        %v2220 = vpop.permute.xlu0 %2219
        %2221 = vrot.lane.b32.xlu0 %v2066, 12
        %v2222 = vpop.permute.xlu0 %2221
        %2223 = vrot.lane.b32.xlu0 %v2067, 12
        %v2224 = vpop.permute.xlu0 %2223
        %2225 = vrot.lane.b32.xlu0 %v2068, 12
        %v2226 = vpop.permute.xlu0 %2225
        %2227 = vrot.lane.b32.xlu0 %v2069, 12
        %v2228 = vpop.permute.xlu0 %2227
        %2229 = vrot.lane.b32.xlu0 %v2070, 12
        %v2230 = vpop.permute.xlu0 %2229
        %v2241 = vunpack.c.l.b16 %v428
        %v2242 = vunpack.c.l.b16 %v448
        %v2243 = vunpack.c.l.b16 %v468
        %v2244 = vunpack.c.l.b16 %v488
        %v2245 = vunpack.c.l.b16 %v508
        %v2246 = vunpack.c.l.b16 %v528
        %v2247 = vunpack.c.l.b16 %v548
        %v2248 = vunpack.c.l.b16 %v568
        %v2249 = vunpack.c.l.b16 %v588
        %v2250 = vunpack.c.l.b16 %v608
        %v2251 = vpack.c.b16 %v2241, %v1981
        %v2252 = vpack.c.b16 %v2242, %v1982
        %v2253 = vpack.c.b16 %v2243, %v1983
        %v2254 = vpack.c.b16 %v2244, %v1984
        %v2255 = vpack.c.b16 %v2245, %v1985
        %v2256 = vpack.c.b16 %v2246, %v1986
        %v2257 = vpack.c.b16 %v2247, %v1987
        %v2258 = vpack.c.b16 %v2248, %v1988
        %v2259 = vpack.c.b16 %v2249, %v1989
        %v2260 = vpack.c.b16 %v2250, %v1990
        %v2262 = vshrl.u32 %v2251, 16
        %v2264 = vshll.u32 %v2251, 16
        %v2266 = vrot.slane %v2264, 1
        %v2267 = vor.u32 %v2262, %v2266
        %v2269 = vshrl.u32 %v2252, 16
        %v2271 = vshll.u32 %v2252, 16
        %v2273 = vrot.slane %v2271, 1
        %v2274 = vor.u32 %v2269, %v2273
        %v2276 = vshrl.u32 %v2253, 16
        %v2278 = vshll.u32 %v2253, 16
        %v2280 = vrot.slane %v2278, 1
        %v2281 = vor.u32 %v2276, %v2280
        %v2283 = vshrl.u32 %v2254, 16
        %v2285 = vshll.u32 %v2254, 16
        %v2287 = vrot.slane %v2285, 1
        %v2288 = vor.u32 %v2283, %v2287
        %v2290 = vshrl.u32 %v2255, 16
        %v2292 = vshll.u32 %v2255, 16
        %v2294 = vrot.slane %v2292, 1
        %v2295 = vor.u32 %v2290, %v2294
        %v2297 = vshrl.u32 %v2256, 16
        %v2299 = vshll.u32 %v2256, 16
        %v2301 = vrot.slane %v2299, 1
        %v2302 = vor.u32 %v2297, %v2301
        %v2304 = vshrl.u32 %v2257, 16
        %v2306 = vshll.u32 %v2257, 16
        %v2308 = vrot.slane %v2306, 1
        %v2309 = vor.u32 %v2304, %v2308
        %v2311 = vshrl.u32 %v2258, 16
        %v2313 = vshll.u32 %v2258, 16
        %v2315 = vrot.slane %v2313, 1
        %v2316 = vor.u32 %v2311, %v2315
        %v2318 = vshrl.u32 %v2259, 16
        %v2320 = vshll.u32 %v2259, 16
        %v2322 = vrot.slane %v2320, 1
        %v2323 = vor.u32 %v2318, %v2322
        %v2325 = vshrl.u32 %v2260, 16
        %v2327 = vshll.u32 %v2260, 16
        %v2329 = vrot.slane %v2327, 1
        %v2330 = vor.u32 %v2325, %v2329
        %2331 = vrot.lane.b32.xlu0 %v1024, 16
        %v2332 = vpop.permute.xlu0 %2331
        %2333 = vrot.lane.b32.xlu0 %v1031, 16
        %v2334 = vpop.permute.xlu0 %2333
        %2335 = vrot.lane.b32.xlu0 %v1038, 16
        %v2336 = vpop.permute.xlu0 %2335
        %2337 = vrot.lane.b32.xlu0 %v1045, 16
        %v2338 = vpop.permute.xlu0 %2337
        %2339 = vrot.lane.b32.xlu0 %v1052, 16
        %v2340 = vpop.permute.xlu0 %2339
        %2341 = vrot.lane.b32.xlu0 %v1059, 16
        %v2342 = vpop.permute.xlu0 %2341
        %2343 = vrot.lane.b32.xlu0 %v1066, 16
        %v2344 = vpop.permute.xlu0 %2343
        %2345 = vrot.lane.b32.xlu0 %v2267, 16
        %v2346 = vpop.permute.xlu0 %2345
        %2347 = vrot.lane.b32.xlu0 %v1080, 16
        %v2348 = vpop.permute.xlu0 %2347
        %2349 = vrot.lane.b32.xlu0 %v1087, 16
        %v2350 = vpop.permute.xlu0 %2349
        %2351 = vrot.lane.b32.xlu0 %v1094, 16
        %v2352 = vpop.permute.xlu0 %2351
        %2353 = vrot.lane.b32.xlu0 %v1101, 16
        %v2354 = vpop.permute.xlu0 %2353
        %2355 = vrot.lane.b32.xlu0 %v1108, 16
        %v2356 = vpop.permute.xlu0 %2355
        %2357 = vrot.lane.b32.xlu0 %v1115, 16
        %v2358 = vpop.permute.xlu0 %2357
        %2359 = vrot.lane.b32.xlu0 %v1122, 16
        %v2360 = vpop.permute.xlu0 %2359
        %2361 = vrot.lane.b32.xlu0 %v2274, 16
        %v2362 = vpop.permute.xlu0 %2361
        %2363 = vrot.lane.b32.xlu0 %v1136, 16
        %v2364 = vpop.permute.xlu0 %2363
        %2365 = vrot.lane.b32.xlu0 %v1143, 16
        %v2366 = vpop.permute.xlu0 %2365
        %2367 = vrot.lane.b32.xlu0 %v1150, 16
        %v2368 = vpop.permute.xlu0 %2367
        %2369 = vrot.lane.b32.xlu0 %v1157, 16
        %v2370 = vpop.permute.xlu0 %2369
        %2371 = vrot.lane.b32.xlu0 %v1164, 16
        %v2372 = vpop.permute.xlu0 %2371
        %2373 = vrot.lane.b32.xlu0 %v1171, 16
        %v2374 = vpop.permute.xlu0 %2373
        %2375 = vrot.lane.b32.xlu0 %v1178, 16
        %v2376 = vpop.permute.xlu0 %2375
        %2377 = vrot.lane.b32.xlu0 %v2281, 16
        %v2378 = vpop.permute.xlu0 %2377
        %2379 = vrot.lane.b32.xlu0 %v1192, 16
        %v2380 = vpop.permute.xlu0 %2379
        %2381 = vrot.lane.b32.xlu0 %v1199, 16
        %v2382 = vpop.permute.xlu0 %2381
        %2383 = vrot.lane.b32.xlu0 %v1206, 16
        %v2384 = vpop.permute.xlu0 %2383
        %2385 = vrot.lane.b32.xlu0 %v1213, 16
        %v2386 = vpop.permute.xlu0 %2385
        %2387 = vrot.lane.b32.xlu0 %v1220, 16
        %v2388 = vpop.permute.xlu0 %2387
        %2389 = vrot.lane.b32.xlu0 %v1227, 16
        %v2390 = vpop.permute.xlu0 %2389
        %2391 = vrot.lane.b32.xlu0 %v1234, 16
        %v2392 = vpop.permute.xlu0 %2391
        %2393 = vrot.lane.b32.xlu0 %v2288, 16
        %v2394 = vpop.permute.xlu0 %2393
        %2395 = vrot.lane.b32.xlu0 %v1248, 16
        %v2396 = vpop.permute.xlu0 %2395
        %2397 = vrot.lane.b32.xlu0 %v1255, 16
        %v2398 = vpop.permute.xlu0 %2397
        %2399 = vrot.lane.b32.xlu0 %v1262, 16
        %v2400 = vpop.permute.xlu0 %2399
        %2401 = vrot.lane.b32.xlu0 %v1269, 16
        %v2402 = vpop.permute.xlu0 %2401
        %2403 = vrot.lane.b32.xlu0 %v1276, 16
        %v2404 = vpop.permute.xlu0 %2403
        %2405 = vrot.lane.b32.xlu0 %v1283, 16
        %v2406 = vpop.permute.xlu0 %2405
        %2407 = vrot.lane.b32.xlu0 %v1290, 16
        %v2408 = vpop.permute.xlu0 %2407
        %2409 = vrot.lane.b32.xlu0 %v2295, 16
        %v2410 = vpop.permute.xlu0 %2409
        %2411 = vrot.lane.b32.xlu0 %v1304, 16
        %v2412 = vpop.permute.xlu0 %2411
        %2413 = vrot.lane.b32.xlu0 %v1311, 16
        %v2414 = vpop.permute.xlu0 %2413
        %2415 = vrot.lane.b32.xlu0 %v1318, 16
        %v2416 = vpop.permute.xlu0 %2415
        %2417 = vrot.lane.b32.xlu0 %v1325, 16
        %v2418 = vpop.permute.xlu0 %2417
        %2419 = vrot.lane.b32.xlu0 %v1332, 16
        %v2420 = vpop.permute.xlu0 %2419
        %2421 = vrot.lane.b32.xlu0 %v1339, 16
        %v2422 = vpop.permute.xlu0 %2421
        %2423 = vrot.lane.b32.xlu0 %v1346, 16
        %v2424 = vpop.permute.xlu0 %2423
        %2425 = vrot.lane.b32.xlu0 %v2302, 16
        %v2426 = vpop.permute.xlu0 %2425
        %2427 = vrot.lane.b32.xlu0 %v1360, 16
        %v2428 = vpop.permute.xlu0 %2427
        %2429 = vrot.lane.b32.xlu0 %v1367, 16
        %v2430 = vpop.permute.xlu0 %2429
        %2431 = vrot.lane.b32.xlu0 %v1374, 16
        %v2432 = vpop.permute.xlu0 %2431
        %2433 = vrot.lane.b32.xlu0 %v1381, 16
        %v2434 = vpop.permute.xlu0 %2433
        %2435 = vrot.lane.b32.xlu0 %v1388, 16
        %v2436 = vpop.permute.xlu0 %2435
        %2437 = vrot.lane.b32.xlu0 %v1395, 16
        %v2438 = vpop.permute.xlu0 %2437
        %2439 = vrot.lane.b32.xlu0 %v1402, 16
        %v2440 = vpop.permute.xlu0 %2439
        %2441 = vrot.lane.b32.xlu0 %v2309, 16
        %v2442 = vpop.permute.xlu0 %2441
        %2443 = vrot.lane.b32.xlu0 %v1416, 16
        %v2444 = vpop.permute.xlu0 %2443
        %2445 = vrot.lane.b32.xlu0 %v1423, 16
        %v2446 = vpop.permute.xlu0 %2445
        %2447 = vrot.lane.b32.xlu0 %v1430, 16
        %v2448 = vpop.permute.xlu0 %2447
        %2449 = vrot.lane.b32.xlu0 %v1437, 16
        %v2450 = vpop.permute.xlu0 %2449
        %2451 = vrot.lane.b32.xlu0 %v1444, 16
        %v2452 = vpop.permute.xlu0 %2451
        %2453 = vrot.lane.b32.xlu0 %v1451, 16
        %v2454 = vpop.permute.xlu0 %2453
        %2455 = vrot.lane.b32.xlu0 %v1458, 16
        %v2456 = vpop.permute.xlu0 %2455
        %2457 = vrot.lane.b32.xlu0 %v2316, 16
        %v2458 = vpop.permute.xlu0 %2457
        %2459 = vrot.lane.b32.xlu0 %v1472, 16
        %v2460 = vpop.permute.xlu0 %2459
        %2461 = vrot.lane.b32.xlu0 %v1479, 16
        %v2462 = vpop.permute.xlu0 %2461
        %2463 = vrot.lane.b32.xlu0 %v1486, 16
        %v2464 = vpop.permute.xlu0 %2463
        %2465 = vrot.lane.b32.xlu0 %v1493, 16
        %v2466 = vpop.permute.xlu0 %2465
        %2467 = vrot.lane.b32.xlu0 %v1500, 16
        %v2468 = vpop.permute.xlu0 %2467
        %2469 = vrot.lane.b32.xlu0 %v1507, 16
        %v2470 = vpop.permute.xlu0 %2469
        %2471 = vrot.lane.b32.xlu0 %v1514, 16
        %v2472 = vpop.permute.xlu0 %2471
        %2473 = vrot.lane.b32.xlu0 %v2323, 16
        %v2474 = vpop.permute.xlu0 %2473
        %2475 = vrot.lane.b32.xlu0 %v1528, 16
        %v2476 = vpop.permute.xlu0 %2475
        %2477 = vrot.lane.b32.xlu0 %v1535, 16
        %v2478 = vpop.permute.xlu0 %2477
        %2479 = vrot.lane.b32.xlu0 %v1542, 16
        %v2480 = vpop.permute.xlu0 %2479
        %2481 = vrot.lane.b32.xlu0 %v1549, 16
        %v2482 = vpop.permute.xlu0 %2481
        %2483 = vrot.lane.b32.xlu0 %v1556, 16
        %v2484 = vpop.permute.xlu0 %2483
        %2485 = vrot.lane.b32.xlu0 %v1563, 16
        %v2486 = vpop.permute.xlu0 %2485
        %2487 = vrot.lane.b32.xlu0 %v1570, 16
        %v2488 = vpop.permute.xlu0 %2487
        %2489 = vrot.lane.b32.xlu0 %v2330, 16
        %v2490 = vpop.permute.xlu0 %2489
        %v2491 = vrot.slane %v2251, 1
        %v2492 = vrot.slane %v2252, 1
        %v2493 = vrot.slane %v2253, 1
        %v2494 = vrot.slane %v2254, 1
        %v2495 = vrot.slane %v2255, 1
        %v2496 = vrot.slane %v2256, 1
        %v2497 = vrot.slane %v2257, 1
        %v2498 = vrot.slane %v2258, 1
        %v2499 = vrot.slane %v2259, 1
        %v2500 = vrot.slane %v2260, 1
        %2501 = vrot.lane.b32.xlu0 %v1732, 20
        %v2502 = vpop.permute.xlu0 %2501
        %2503 = vrot.lane.b32.xlu0 %v1733, 20
        %v2504 = vpop.permute.xlu0 %2503
        %2505 = vrot.lane.b32.xlu0 %v1734, 20
        %v2506 = vpop.permute.xlu0 %2505
        %2507 = vrot.lane.b32.xlu0 %v1735, 20
        %v2508 = vpop.permute.xlu0 %2507
        %2509 = vrot.lane.b32.xlu0 %v1736, 20
        %v2510 = vpop.permute.xlu0 %2509
        %2511 = vrot.lane.b32.xlu0 %v1737, 20
        %v2512 = vpop.permute.xlu0 %2511
        %2513 = vrot.lane.b32.xlu0 %v1738, 20
        %v2514 = vpop.permute.xlu0 %2513
        %2515 = vrot.lane.b32.xlu0 %v2491, 20
        %v2516 = vpop.permute.xlu0 %2515
        %2517 = vrot.lane.b32.xlu0 %v1740, 20
        %v2518 = vpop.permute.xlu0 %2517
        %2519 = vrot.lane.b32.xlu0 %v1741, 20
        %v2520 = vpop.permute.xlu0 %2519
        %2521 = vrot.lane.b32.xlu0 %v1742, 20
        %v2522 = vpop.permute.xlu0 %2521
        %2523 = vrot.lane.b32.xlu0 %v1743, 20
        %v2524 = vpop.permute.xlu0 %2523
        %2525 = vrot.lane.b32.xlu0 %v1744, 20
        %v2526 = vpop.permute.xlu0 %2525
        %2527 = vrot.lane.b32.xlu0 %v1745, 20
        %v2528 = vpop.permute.xlu0 %2527
        %2529 = vrot.lane.b32.xlu0 %v1746, 20
        %v2530 = vpop.permute.xlu0 %2529
        %2531 = vrot.lane.b32.xlu0 %v2492, 20
        %v2532 = vpop.permute.xlu0 %2531
        %2533 = vrot.lane.b32.xlu0 %v1748, 20
        %v2534 = vpop.permute.xlu0 %2533
        %2535 = vrot.lane.b32.xlu0 %v1749, 20
        %v2536 = vpop.permute.xlu0 %2535
        %2537 = vrot.lane.b32.xlu0 %v1750, 20
        %v2538 = vpop.permute.xlu0 %2537
        %2539 = vrot.lane.b32.xlu0 %v1751, 20
        %v2540 = vpop.permute.xlu0 %2539
        %2541 = vrot.lane.b32.xlu0 %v1752, 20
        %v2542 = vpop.permute.xlu0 %2541
        %2543 = vrot.lane.b32.xlu0 %v1753, 20
        %v2544 = vpop.permute.xlu0 %2543
        %2545 = vrot.lane.b32.xlu0 %v1754, 20
        %v2546 = vpop.permute.xlu0 %2545
        %2547 = vrot.lane.b32.xlu0 %v2493, 20
        %v2548 = vpop.permute.xlu0 %2547
        %2549 = vrot.lane.b32.xlu0 %v1756, 20
        %v2550 = vpop.permute.xlu0 %2549
        %2551 = vrot.lane.b32.xlu0 %v1757, 20
        %v2552 = vpop.permute.xlu0 %2551
        %2553 = vrot.lane.b32.xlu0 %v1758, 20
        %v2554 = vpop.permute.xlu0 %2553
        %2555 = vrot.lane.b32.xlu0 %v1759, 20
        %v2556 = vpop.permute.xlu0 %2555
        %2557 = vrot.lane.b32.xlu0 %v1760, 20
        %v2558 = vpop.permute.xlu0 %2557
        %2559 = vrot.lane.b32.xlu0 %v1761, 20
        %v2560 = vpop.permute.xlu0 %2559
        %2561 = vrot.lane.b32.xlu0 %v1762, 20
        %v2562 = vpop.permute.xlu0 %2561
        %2563 = vrot.lane.b32.xlu0 %v2494, 20
        %v2564 = vpop.permute.xlu0 %2563
        %2565 = vrot.lane.b32.xlu0 %v1764, 20
        %v2566 = vpop.permute.xlu0 %2565
        %2567 = vrot.lane.b32.xlu0 %v1765, 20
        %v2568 = vpop.permute.xlu0 %2567
        %2569 = vrot.lane.b32.xlu0 %v1766, 20
        %v2570 = vpop.permute.xlu0 %2569
        %2571 = vrot.lane.b32.xlu0 %v1767, 20
        %v2572 = vpop.permute.xlu0 %2571
        %2573 = vrot.lane.b32.xlu0 %v1768, 20
        %v2574 = vpop.permute.xlu0 %2573
        %2575 = vrot.lane.b32.xlu0 %v1769, 20
        %v2576 = vpop.permute.xlu0 %2575
        %2577 = vrot.lane.b32.xlu0 %v1770, 20
        %v2578 = vpop.permute.xlu0 %2577
        %2579 = vrot.lane.b32.xlu0 %v2495, 20
        %v2580 = vpop.permute.xlu0 %2579
        %2581 = vrot.lane.b32.xlu0 %v1772, 20
        %v2582 = vpop.permute.xlu0 %2581
        %2583 = vrot.lane.b32.xlu0 %v1773, 20
        %v2584 = vpop.permute.xlu0 %2583
        %2585 = vrot.lane.b32.xlu0 %v1774, 20
        %v2586 = vpop.permute.xlu0 %2585
        %2587 = vrot.lane.b32.xlu0 %v1775, 20
        %v2588 = vpop.permute.xlu0 %2587
        %2589 = vrot.lane.b32.xlu0 %v1776, 20
        %v2590 = vpop.permute.xlu0 %2589
        %2591 = vrot.lane.b32.xlu0 %v1777, 20
        %v2592 = vpop.permute.xlu0 %2591
        %2593 = vrot.lane.b32.xlu0 %v1778, 20
        %v2594 = vpop.permute.xlu0 %2593
        %2595 = vrot.lane.b32.xlu0 %v2496, 20
        %v2596 = vpop.permute.xlu0 %2595
        %2597 = vrot.lane.b32.xlu0 %v1780, 20
        %v2598 = vpop.permute.xlu0 %2597
        %2599 = vrot.lane.b32.xlu0 %v1781, 20
        %v2600 = vpop.permute.xlu0 %2599
        %2601 = vrot.lane.b32.xlu0 %v1782, 20
        %v2602 = vpop.permute.xlu0 %2601
        %2603 = vrot.lane.b32.xlu0 %v1783, 20
        %v2604 = vpop.permute.xlu0 %2603
        %2605 = vrot.lane.b32.xlu0 %v1784, 20
        %v2606 = vpop.permute.xlu0 %2605
        %2607 = vrot.lane.b32.xlu0 %v1785, 20
        %v2608 = vpop.permute.xlu0 %2607
        %2609 = vrot.lane.b32.xlu0 %v1786, 20
        %v2610 = vpop.permute.xlu0 %2609
        %2611 = vrot.lane.b32.xlu0 %v2497, 20
        %v2612 = vpop.permute.xlu0 %2611
        %2613 = vrot.lane.b32.xlu0 %v1788, 20
        %v2614 = vpop.permute.xlu0 %2613
        %2615 = vrot.lane.b32.xlu0 %v1789, 20
        %v2616 = vpop.permute.xlu0 %2615
        %2617 = vrot.lane.b32.xlu0 %v1790, 20
        %v2618 = vpop.permute.xlu0 %2617
        %2619 = vrot.lane.b32.xlu0 %v1791, 20
        %v2620 = vpop.permute.xlu0 %2619
        %2621 = vrot.lane.b32.xlu0 %v1792, 20
        %v2622 = vpop.permute.xlu0 %2621
        %2623 = vrot.lane.b32.xlu0 %v1793, 20
        %v2624 = vpop.permute.xlu0 %2623
        %2625 = vrot.lane.b32.xlu0 %v1794, 20
        %v2626 = vpop.permute.xlu0 %2625
        %2627 = vrot.lane.b32.xlu0 %v2498, 20
        %v2628 = vpop.permute.xlu0 %2627
        %2629 = vrot.lane.b32.xlu0 %v1796, 20
        %v2630 = vpop.permute.xlu0 %2629
        %2631 = vrot.lane.b32.xlu0 %v1797, 20
        %v2632 = vpop.permute.xlu0 %2631
        %2633 = vrot.lane.b32.xlu0 %v1798, 20
        %v2634 = vpop.permute.xlu0 %2633
        %2635 = vrot.lane.b32.xlu0 %v1799, 20
        %v2636 = vpop.permute.xlu0 %2635
        %2637 = vrot.lane.b32.xlu0 %v1800, 20
        %v2638 = vpop.permute.xlu0 %2637
        %2639 = vrot.lane.b32.xlu0 %v1801, 20
        %v2640 = vpop.permute.xlu0 %2639
        %2641 = vrot.lane.b32.xlu0 %v1802, 20
        %v2642 = vpop.permute.xlu0 %2641
        %2643 = vrot.lane.b32.xlu0 %v2499, 20
        %v2644 = vpop.permute.xlu0 %2643
        %2645 = vrot.lane.b32.xlu0 %v1804, 20
        %v2646 = vpop.permute.xlu0 %2645
        %2647 = vrot.lane.b32.xlu0 %v1805, 20
        %v2648 = vpop.permute.xlu0 %2647
        %2649 = vrot.lane.b32.xlu0 %v1806, 20
        %v2650 = vpop.permute.xlu0 %2649
        %2651 = vrot.lane.b32.xlu0 %v1807, 20
        %v2652 = vpop.permute.xlu0 %2651
        %2653 = vrot.lane.b32.xlu0 %v1808, 20
        %v2654 = vpop.permute.xlu0 %2653
        %2655 = vrot.lane.b32.xlu0 %v1809, 20
        %v2656 = vpop.permute.xlu0 %2655
        %2657 = vrot.lane.b32.xlu0 %v1810, 20
        %v2658 = vpop.permute.xlu0 %2657
        %2659 = vrot.lane.b32.xlu0 %v2500, 20
        %v2660 = vpop.permute.xlu0 %2659
        %v2671 = vunpack.c.l.b16 %v429
        %v2672 = vunpack.c.l.b16 %v449
        %v2673 = vunpack.c.l.b16 %v469
        %v2674 = vunpack.c.l.b16 %v489
        %v2675 = vunpack.c.l.b16 %v509
        %v2676 = vunpack.c.l.b16 %v529
        %v2677 = vunpack.c.l.b16 %v549
        %v2678 = vunpack.c.l.b16 %v569
        %v2679 = vunpack.c.l.b16 %v589
        %v2680 = vunpack.c.l.b16 %v609
        %v2681 = vpack.c.b16 %v2671, %v2671
        %v2682 = vpack.c.b16 %v2672, %v2672
        %v2683 = vpack.c.b16 %v2673, %v2673
        %v2684 = vpack.c.b16 %v2674, %v2674
        %v2685 = vpack.c.b16 %v2675, %v2675
        %v2686 = vpack.c.b16 %v2676, %v2676
        %v2687 = vpack.c.b16 %v2677, %v2677
        %v2688 = vpack.c.b16 %v2678, %v2678
        %v2689 = vpack.c.b16 %v2679, %v2679
        %v2690 = vpack.c.b16 %v2680, %v2680
        %2691 = vrot.lane.b32.xlu0 %v1992, 24
        %v2692 = vpop.permute.xlu0 %2691
        %2693 = vrot.lane.b32.xlu0 %v1993, 24
        %v2694 = vpop.permute.xlu0 %2693
        %2695 = vrot.lane.b32.xlu0 %v1994, 24
        %v2696 = vpop.permute.xlu0 %2695
        %2697 = vrot.lane.b32.xlu0 %v1995, 24
        %v2698 = vpop.permute.xlu0 %2697
        %2699 = vrot.lane.b32.xlu0 %v1996, 24
        %v2700 = vpop.permute.xlu0 %2699
        %2701 = vrot.lane.b32.xlu0 %v1997, 24
        %v2702 = vpop.permute.xlu0 %2701
        %2703 = vrot.lane.b32.xlu0 %v1998, 24
        %v2704 = vpop.permute.xlu0 %2703
        %2705 = vrot.lane.b32.xlu0 %v2681, 24
        %v2706 = vpop.permute.xlu0 %2705
        %2707 = vrot.lane.b32.xlu0 %v2000, 24
        %v2708 = vpop.permute.xlu0 %2707
        %2709 = vrot.lane.b32.xlu0 %v2001, 24
        %v2710 = vpop.permute.xlu0 %2709
        %2711 = vrot.lane.b32.xlu0 %v2002, 24
        %v2712 = vpop.permute.xlu0 %2711
        %2713 = vrot.lane.b32.xlu0 %v2003, 24
        %v2714 = vpop.permute.xlu0 %2713
        %2715 = vrot.lane.b32.xlu0 %v2004, 24
        %v2716 = vpop.permute.xlu0 %2715
        %2717 = vrot.lane.b32.xlu0 %v2005, 24
        %v2718 = vpop.permute.xlu0 %2717
        %2719 = vrot.lane.b32.xlu0 %v2006, 24
        %v2720 = vpop.permute.xlu0 %2719
        %2721 = vrot.lane.b32.xlu0 %v2682, 24
        %v2722 = vpop.permute.xlu0 %2721
        %2723 = vrot.lane.b32.xlu0 %v2008, 24
        %v2724 = vpop.permute.xlu0 %2723
        %2725 = vrot.lane.b32.xlu0 %v2009, 24
        %v2726 = vpop.permute.xlu0 %2725
        %2727 = vrot.lane.b32.xlu0 %v2010, 24
        %v2728 = vpop.permute.xlu0 %2727
        %2729 = vrot.lane.b32.xlu0 %v2011, 24
        %v2730 = vpop.permute.xlu0 %2729
        %2731 = vrot.lane.b32.xlu0 %v2012, 24
        %v2732 = vpop.permute.xlu0 %2731
        %2733 = vrot.lane.b32.xlu0 %v2013, 24
        %v2734 = vpop.permute.xlu0 %2733
        %2735 = vrot.lane.b32.xlu0 %v2014, 24
        %v2736 = vpop.permute.xlu0 %2735
        %2737 = vrot.lane.b32.xlu0 %v2683, 24
        %v2738 = vpop.permute.xlu0 %2737
        %2739 = vrot.lane.b32.xlu0 %v2016, 24
        %v2740 = vpop.permute.xlu0 %2739
        %2741 = vrot.lane.b32.xlu0 %v2017, 24
        %v2742 = vpop.permute.xlu0 %2741
        %2743 = vrot.lane.b32.xlu0 %v2018, 24
        %v2744 = vpop.permute.xlu0 %2743
        %2745 = vrot.lane.b32.xlu0 %v2019, 24
        %v2746 = vpop.permute.xlu0 %2745
        %2747 = vrot.lane.b32.xlu0 %v2020, 24
        %v2748 = vpop.permute.xlu0 %2747
        %2749 = vrot.lane.b32.xlu0 %v2021, 24
        %v2750 = vpop.permute.xlu0 %2749
        %2751 = vrot.lane.b32.xlu0 %v2022, 24
        %v2752 = vpop.permute.xlu0 %2751
        %2753 = vrot.lane.b32.xlu0 %v2684, 24
        %v2754 = vpop.permute.xlu0 %2753
        %2755 = vrot.lane.b32.xlu0 %v2024, 24
        %v2756 = vpop.permute.xlu0 %2755
        %2757 = vrot.lane.b32.xlu0 %v2025, 24
        %v2758 = vpop.permute.xlu0 %2757
        %2759 = vrot.lane.b32.xlu0 %v2026, 24
        %v2760 = vpop.permute.xlu0 %2759
        %2761 = vrot.lane.b32.xlu0 %v2027, 24
        %v2762 = vpop.permute.xlu0 %2761
        %2763 = vrot.lane.b32.xlu0 %v2028, 24
        %v2764 = vpop.permute.xlu0 %2763
        %2765 = vrot.lane.b32.xlu0 %v2029, 24
        %v2766 = vpop.permute.xlu0 %2765
        %2767 = vrot.lane.b32.xlu0 %v2030, 24
        %v2768 = vpop.permute.xlu0 %2767
        %2769 = vrot.lane.b32.xlu0 %v2685, 24
        %v2770 = vpop.permute.xlu0 %2769
        %2771 = vrot.lane.b32.xlu0 %v2032, 24
        %v2772 = vpop.permute.xlu0 %2771
        %2773 = vrot.lane.b32.xlu0 %v2033, 24
        %v2774 = vpop.permute.xlu0 %2773
        %2775 = vrot.lane.b32.xlu0 %v2034, 24
        %v2776 = vpop.permute.xlu0 %2775
        %2777 = vrot.lane.b32.xlu0 %v2035, 24
        %v2778 = vpop.permute.xlu0 %2777
        %2779 = vrot.lane.b32.xlu0 %v2036, 24
        %v2780 = vpop.permute.xlu0 %2779
        %2781 = vrot.lane.b32.xlu0 %v2037, 24
        %v2782 = vpop.permute.xlu0 %2781
        %2783 = vrot.lane.b32.xlu0 %v2038, 24
        %v2784 = vpop.permute.xlu0 %2783
        %2785 = vrot.lane.b32.xlu0 %v2686, 24
        %v2786 = vpop.permute.xlu0 %2785
        %2787 = vrot.lane.b32.xlu0 %v2040, 24
        %v2788 = vpop.permute.xlu0 %2787
        %2789 = vrot.lane.b32.xlu0 %v2041, 24
        %v2790 = vpop.permute.xlu0 %2789
        %2791 = vrot.lane.b32.xlu0 %v2042, 24
        %v2792 = vpop.permute.xlu0 %2791
        %2793 = vrot.lane.b32.xlu0 %v2043, 24
        %v2794 = vpop.permute.xlu0 %2793
        %2795 = vrot.lane.b32.xlu0 %v2044, 24
        %v2796 = vpop.permute.xlu0 %2795
        %2797 = vrot.lane.b32.xlu0 %v2045, 24
        %v2798 = vpop.permute.xlu0 %2797
        %2799 = vrot.lane.b32.xlu0 %v2046, 24
        %v2800 = vpop.permute.xlu0 %2799
        %2801 = vrot.lane.b32.xlu0 %v2687, 24
        %v2802 = vpop.permute.xlu0 %2801
        %2803 = vrot.lane.b32.xlu0 %v2048, 24
        %v2804 = vpop.permute.xlu0 %2803
        %2805 = vrot.lane.b32.xlu0 %v2049, 24
        %v2806 = vpop.permute.xlu0 %2805
        %2807 = vrot.lane.b32.xlu0 %v2050, 24
        %v2808 = vpop.permute.xlu0 %2807
        %2809 = vrot.lane.b32.xlu0 %v2051, 24
        %v2810 = vpop.permute.xlu0 %2809
        %2811 = vrot.lane.b32.xlu0 %v2052, 24
        %v2812 = vpop.permute.xlu0 %2811
        %2813 = vrot.lane.b32.xlu0 %v2053, 24
        %v2814 = vpop.permute.xlu0 %2813
        %2815 = vrot.lane.b32.xlu0 %v2054, 24
        %v2816 = vpop.permute.xlu0 %2815
        %2817 = vrot.lane.b32.xlu0 %v2688, 24
        %v2818 = vpop.permute.xlu0 %2817
        %2819 = vrot.lane.b32.xlu0 %v2056, 24
        %v2820 = vpop.permute.xlu0 %2819
        %2821 = vrot.lane.b32.xlu0 %v2057, 24
        %v2822 = vpop.permute.xlu0 %2821
        %2823 = vrot.lane.b32.xlu0 %v2058, 24
        %v2824 = vpop.permute.xlu0 %2823
        %2825 = vrot.lane.b32.xlu0 %v2059, 24
        %v2826 = vpop.permute.xlu0 %2825
        %2827 = vrot.lane.b32.xlu0 %v2060, 24
        %v2828 = vpop.permute.xlu0 %2827
        %2829 = vrot.lane.b32.xlu0 %v2061, 24
        %v2830 = vpop.permute.xlu0 %2829
        %2831 = vrot.lane.b32.xlu0 %v2062, 24
        %v2832 = vpop.permute.xlu0 %2831
        %2833 = vrot.lane.b32.xlu0 %v2689, 24
        %v2834 = vpop.permute.xlu0 %2833
        %2835 = vrot.lane.b32.xlu0 %v2064, 24
        %v2836 = vpop.permute.xlu0 %2835
        %2837 = vrot.lane.b32.xlu0 %v2065, 24
        %v2838 = vpop.permute.xlu0 %2837
        %2839 = vrot.lane.b32.xlu0 %v2066, 24
        %v2840 = vpop.permute.xlu0 %2839
        %2841 = vrot.lane.b32.xlu0 %v2067, 24
        %v2842 = vpop.permute.xlu0 %2841
        %2843 = vrot.lane.b32.xlu0 %v2068, 24
        %v2844 = vpop.permute.xlu0 %2843
        %2845 = vrot.lane.b32.xlu0 %v2069, 24
        %v2846 = vpop.permute.xlu0 %2845
        %2847 = vrot.lane.b32.xlu0 %v2070, 24
        %v2848 = vpop.permute.xlu0 %2847
        %2849 = vrot.lane.b32.xlu0 %v2690, 24
        %v2850 = vpop.permute.xlu0 %2849
        %v2861 = vunpack.c.l.b16 %v430
        %v2862 = vunpack.c.l.b16 %v450
        %v2863 = vunpack.c.l.b16 %v470
        %v2864 = vunpack.c.l.b16 %v490
        %v2865 = vunpack.c.l.b16 %v510
        %v2866 = vunpack.c.l.b16 %v530
        %v2867 = vunpack.c.l.b16 %v550
        %v2868 = vunpack.c.l.b16 %v570
        %v2869 = vunpack.c.l.b16 %v590
        %v2870 = vunpack.c.l.b16 %v610
        %v2871 = vpack.c.b16 %v2861, %v2671
        %v2872 = vpack.c.b16 %v2862, %v2672
        %v2873 = vpack.c.b16 %v2863, %v2673
        %v2874 = vpack.c.b16 %v2864, %v2674
        %v2875 = vpack.c.b16 %v2865, %v2675
        %v2876 = vpack.c.b16 %v2866, %v2676
        %v2877 = vpack.c.b16 %v2867, %v2677
        %v2878 = vpack.c.b16 %v2868, %v2678
        %v2879 = vpack.c.b16 %v2869, %v2679
        %v2880 = vpack.c.b16 %v2870, %v2680
        %v2882 = vshrl.u32 %v2871, 16
        %v2884 = vshll.u32 %v2871, 16
        %v2886 = vrot.slane %v2884, 1
        %v2887 = vor.u32 %v2882, %v2886
        %v2889 = vshrl.u32 %v2872, 16
        %v2891 = vshll.u32 %v2872, 16
        %v2893 = vrot.slane %v2891, 1
        %v2894 = vor.u32 %v2889, %v2893
        %v2896 = vshrl.u32 %v2873, 16
        %v2898 = vshll.u32 %v2873, 16
        %v2900 = vrot.slane %v2898, 1
        %v2901 = vor.u32 %v2896, %v2900
        %v2903 = vshrl.u32 %v2874, 16
        %v2905 = vshll.u32 %v2874, 16
        %v2907 = vrot.slane %v2905, 1
        %v2908 = vor.u32 %v2903, %v2907
        %v2910 = vshrl.u32 %v2875, 16
        %v2912 = vshll.u32 %v2875, 16
        %v2914 = vrot.slane %v2912, 1
        %v2915 = vor.u32 %v2910, %v2914
        %v2917 = vshrl.u32 %v2876, 16
        %v2919 = vshll.u32 %v2876, 16
        %v2921 = vrot.slane %v2919, 1
        %v2922 = vor.u32 %v2917, %v2921
        %v2924 = vshrl.u32 %v2877, 16
        %v2926 = vshll.u32 %v2877, 16
        %v2928 = vrot.slane %v2926, 1
        %v2929 = vor.u32 %v2924, %v2928
        %v2931 = vshrl.u32 %v2878, 16
        %v2933 = vshll.u32 %v2878, 16
        %v2935 = vrot.slane %v2933, 1
        %v2936 = vor.u32 %v2931, %v2935
        %v2938 = vshrl.u32 %v2879, 16
        %v2940 = vshll.u32 %v2879, 16
        %v2942 = vrot.slane %v2940, 1
        %v2943 = vor.u32 %v2938, %v2942
        %v2945 = vshrl.u32 %v2880, 16
        %v2947 = vshll.u32 %v2880, 16
        %v2949 = vrot.slane %v2947, 1
        %v2950 = vor.u32 %v2945, %v2949
        %2951 = vrot.lane.b32.xlu0 %v1031, 28
        %v2952 = vpop.permute.xlu0 %2951
        %2953 = vrot.lane.b32.xlu0 %v1038, 28
        %v2954 = vpop.permute.xlu0 %2953
        %2955 = vrot.lane.b32.xlu0 %v1045, 28
        %v2956 = vpop.permute.xlu0 %2955
        %2957 = vrot.lane.b32.xlu0 %v1052, 28
        %v2958 = vpop.permute.xlu0 %2957
        %2959 = vrot.lane.b32.xlu0 %v1059, 28
        %v2960 = vpop.permute.xlu0 %2959
        %2961 = vrot.lane.b32.xlu0 %v1066, 28
        %v2962 = vpop.permute.xlu0 %2961
        %2963 = vrot.lane.b32.xlu0 %v2267, 28
        %v2964 = vpop.permute.xlu0 %2963
        %2965 = vrot.lane.b32.xlu0 %v2887, 28
        %v2966 = vpop.permute.xlu0 %2965
        %2967 = vrot.lane.b32.xlu0 %v1087, 28
        %v2968 = vpop.permute.xlu0 %2967
        %2969 = vrot.lane.b32.xlu0 %v1094, 28
        %v2970 = vpop.permute.xlu0 %2969
        %2971 = vrot.lane.b32.xlu0 %v1101, 28
        %v2972 = vpop.permute.xlu0 %2971
        %2973 = vrot.lane.b32.xlu0 %v1108, 28
        %v2974 = vpop.permute.xlu0 %2973
        %2975 = vrot.lane.b32.xlu0 %v1115, 28
        %v2976 = vpop.permute.xlu0 %2975
        %2977 = vrot.lane.b32.xlu0 %v1122, 28
        %v2978 = vpop.permute.xlu0 %2977
        %2979 = vrot.lane.b32.xlu0 %v2274, 28
        %v2980 = vpop.permute.xlu0 %2979
        %2981 = vrot.lane.b32.xlu0 %v2894, 28
        %v2982 = vpop.permute.xlu0 %2981
        %2983 = vrot.lane.b32.xlu0 %v1143, 28
        %v2984 = vpop.permute.xlu0 %2983
        %2985 = vrot.lane.b32.xlu0 %v1150, 28
        %v2986 = vpop.permute.xlu0 %2985
        %2987 = vrot.lane.b32.xlu0 %v1157, 28
        %v2988 = vpop.permute.xlu0 %2987
        %2989 = vrot.lane.b32.xlu0 %v1164, 28
        %v2990 = vpop.permute.xlu0 %2989
        %2991 = vrot.lane.b32.xlu0 %v1171, 28
        %v2992 = vpop.permute.xlu0 %2991
        %2993 = vrot.lane.b32.xlu0 %v1178, 28
        %v2994 = vpop.permute.xlu0 %2993
        %2995 = vrot.lane.b32.xlu0 %v2281, 28
        %v2996 = vpop.permute.xlu0 %2995
        %2997 = vrot.lane.b32.xlu0 %v2901, 28
        %v2998 = vpop.permute.xlu0 %2997
        %2999 = vrot.lane.b32.xlu0 %v1199, 28
        %v3000 = vpop.permute.xlu0 %2999
        %3001 = vrot.lane.b32.xlu0 %v1206, 28
        %v3002 = vpop.permute.xlu0 %3001
        %3003 = vrot.lane.b32.xlu0 %v1213, 28
        %v3004 = vpop.permute.xlu0 %3003
        %3005 = vrot.lane.b32.xlu0 %v1220, 28
        %v3006 = vpop.permute.xlu0 %3005
        %3007 = vrot.lane.b32.xlu0 %v1227, 28
        %v3008 = vpop.permute.xlu0 %3007
        %3009 = vrot.lane.b32.xlu0 %v1234, 28
        %v3010 = vpop.permute.xlu0 %3009
        %3011 = vrot.lane.b32.xlu0 %v2288, 28
        %v3012 = vpop.permute.xlu0 %3011
        %3013 = vrot.lane.b32.xlu0 %v2908, 28
        %v3014 = vpop.permute.xlu0 %3013
        %3015 = vrot.lane.b32.xlu0 %v1255, 28
        %v3016 = vpop.permute.xlu0 %3015
        %3017 = vrot.lane.b32.xlu0 %v1262, 28
        %v3018 = vpop.permute.xlu0 %3017
        %3019 = vrot.lane.b32.xlu0 %v1269, 28
        %v3020 = vpop.permute.xlu0 %3019
        %3021 = vrot.lane.b32.xlu0 %v1276, 28
        %v3022 = vpop.permute.xlu0 %3021
        %3023 = vrot.lane.b32.xlu0 %v1283, 28
        %v3024 = vpop.permute.xlu0 %3023
        %3025 = vrot.lane.b32.xlu0 %v1290, 28
        %v3026 = vpop.permute.xlu0 %3025
        %3027 = vrot.lane.b32.xlu0 %v2295, 28
        %v3028 = vpop.permute.xlu0 %3027
        %3029 = vrot.lane.b32.xlu0 %v2915, 28
        %v3030 = vpop.permute.xlu0 %3029
        %3031 = vrot.lane.b32.xlu0 %v1311, 28
        %v3032 = vpop.permute.xlu0 %3031
        %3033 = vrot.lane.b32.xlu0 %v1318, 28
        %v3034 = vpop.permute.xlu0 %3033
        %3035 = vrot.lane.b32.xlu0 %v1325, 28
        %v3036 = vpop.permute.xlu0 %3035
        %3037 = vrot.lane.b32.xlu0 %v1332, 28
        %v3038 = vpop.permute.xlu0 %3037
        %3039 = vrot.lane.b32.xlu0 %v1339, 28
        %v3040 = vpop.permute.xlu0 %3039
        %3041 = vrot.lane.b32.xlu0 %v1346, 28
        %v3042 = vpop.permute.xlu0 %3041
        %3043 = vrot.lane.b32.xlu0 %v2302, 28
        %v3044 = vpop.permute.xlu0 %3043
        %3045 = vrot.lane.b32.xlu0 %v2922, 28
        %v3046 = vpop.permute.xlu0 %3045
        %3047 = vrot.lane.b32.xlu0 %v1367, 28
        %v3048 = vpop.permute.xlu0 %3047
        %3049 = vrot.lane.b32.xlu0 %v1374, 28
        %v3050 = vpop.permute.xlu0 %3049
        %3051 = vrot.lane.b32.xlu0 %v1381, 28
        %v3052 = vpop.permute.xlu0 %3051
        %3053 = vrot.lane.b32.xlu0 %v1388, 28
        %v3054 = vpop.permute.xlu0 %3053
        %3055 = vrot.lane.b32.xlu0 %v1395, 28
        %v3056 = vpop.permute.xlu0 %3055
        %3057 = vrot.lane.b32.xlu0 %v1402, 28
        %v3058 = vpop.permute.xlu0 %3057
        %3059 = vrot.lane.b32.xlu0 %v2309, 28
        %v3060 = vpop.permute.xlu0 %3059
        %3061 = vrot.lane.b32.xlu0 %v2929, 28
        %v3062 = vpop.permute.xlu0 %3061
        %3063 = vrot.lane.b32.xlu0 %v1423, 28
        %v3064 = vpop.permute.xlu0 %3063
        %3065 = vrot.lane.b32.xlu0 %v1430, 28
        %v3066 = vpop.permute.xlu0 %3065
        %3067 = vrot.lane.b32.xlu0 %v1437, 28
        %v3068 = vpop.permute.xlu0 %3067
        %3069 = vrot.lane.b32.xlu0 %v1444, 28
        %v3070 = vpop.permute.xlu0 %3069
        %3071 = vrot.lane.b32.xlu0 %v1451, 28
        %v3072 = vpop.permute.xlu0 %3071
        %3073 = vrot.lane.b32.xlu0 %v1458, 28
        %v3074 = vpop.permute.xlu0 %3073
        %3075 = vrot.lane.b32.xlu0 %v2316, 28
        %v3076 = vpop.permute.xlu0 %3075
        %3077 = vrot.lane.b32.xlu0 %v2936, 28
        %v3078 = vpop.permute.xlu0 %3077
        %3079 = vrot.lane.b32.xlu0 %v1479, 28
        %v3080 = vpop.permute.xlu0 %3079
        %3081 = vrot.lane.b32.xlu0 %v1486, 28
        %v3082 = vpop.permute.xlu0 %3081
        %3083 = vrot.lane.b32.xlu0 %v1493, 28
        %v3084 = vpop.permute.xlu0 %3083
        %3085 = vrot.lane.b32.xlu0 %v1500, 28
        %v3086 = vpop.permute.xlu0 %3085
        %3087 = vrot.lane.b32.xlu0 %v1507, 28
        %v3088 = vpop.permute.xlu0 %3087
        %3089 = vrot.lane.b32.xlu0 %v1514, 28
        %v3090 = vpop.permute.xlu0 %3089
        %3091 = vrot.lane.b32.xlu0 %v2323, 28
        %v3092 = vpop.permute.xlu0 %3091
        %3093 = vrot.lane.b32.xlu0 %v2943, 28
        %v3094 = vpop.permute.xlu0 %3093
        %3095 = vrot.lane.b32.xlu0 %v1535, 28
        %v3096 = vpop.permute.xlu0 %3095
        %3097 = vrot.lane.b32.xlu0 %v1542, 28
        %v3098 = vpop.permute.xlu0 %3097
        %3099 = vrot.lane.b32.xlu0 %v1549, 28
        %v3100 = vpop.permute.xlu0 %3099
        %3101 = vrot.lane.b32.xlu0 %v1556, 28
        %v3102 = vpop.permute.xlu0 %3101
        %3103 = vrot.lane.b32.xlu0 %v1563, 28
        %v3104 = vpop.permute.xlu0 %3103
        %3105 = vrot.lane.b32.xlu0 %v1570, 28
        %v3106 = vpop.permute.xlu0 %3105
        %3107 = vrot.lane.b32.xlu0 %v2330, 28
        %v3108 = vpop.permute.xlu0 %3107
        %3109 = vrot.lane.b32.xlu0 %v2950, 28
        %v3110 = vpop.permute.xlu0 %3109
        %v3111 = vrot.slane %v2871, 1
        %v3112 = vrot.slane %v2872, 1
        %v3113 = vrot.slane %v2873, 1
        %v3114 = vrot.slane %v2874, 1
        %v3115 = vrot.slane %v2875, 1
        %v3116 = vrot.slane %v2876, 1
        %v3117 = vrot.slane %v2877, 1
        %v3118 = vrot.slane %v2878, 1
        %v3119 = vrot.slane %v2879, 1
        %v3120 = vrot.slane %v2880, 1
        %3121 = vrot.lane.b32.xlu0 %v1733, 32
        %v3122 = vpop.permute.xlu0 %3121
        %3123 = vrot.lane.b32.xlu0 %v1734, 32
        %v3124 = vpop.permute.xlu0 %3123
        %3125 = vrot.lane.b32.xlu0 %v1735, 32
        %v3126 = vpop.permute.xlu0 %3125
        %3127 = vrot.lane.b32.xlu0 %v1736, 32
        %v3128 = vpop.permute.xlu0 %3127
        %3129 = vrot.lane.b32.xlu0 %v1737, 32
        %v3130 = vpop.permute.xlu0 %3129
        %3131 = vrot.lane.b32.xlu0 %v1738, 32
        %v3132 = vpop.permute.xlu0 %3131
        %3133 = vrot.lane.b32.xlu0 %v2491, 32
        %v3134 = vpop.permute.xlu0 %3133
        %3135 = vrot.lane.b32.xlu0 %v3111, 32
        %v3136 = vpop.permute.xlu0 %3135
        %3137 = vrot.lane.b32.xlu0 %v1741, 32
        %v3138 = vpop.permute.xlu0 %3137
        %3139 = vrot.lane.b32.xlu0 %v1742, 32
        %v3140 = vpop.permute.xlu0 %3139
        %3141 = vrot.lane.b32.xlu0 %v1743, 32
        %v3142 = vpop.permute.xlu0 %3141
        %3143 = vrot.lane.b32.xlu0 %v1744, 32
        %v3144 = vpop.permute.xlu0 %3143
        %3145 = vrot.lane.b32.xlu0 %v1745, 32
        %v3146 = vpop.permute.xlu0 %3145
        %3147 = vrot.lane.b32.xlu0 %v1746, 32
        %v3148 = vpop.permute.xlu0 %3147
        %3149 = vrot.lane.b32.xlu0 %v2492, 32
        %v3150 = vpop.permute.xlu0 %3149
        %3151 = vrot.lane.b32.xlu0 %v3112, 32
        %v3152 = vpop.permute.xlu0 %3151
        %3153 = vrot.lane.b32.xlu0 %v1749, 32
        %v3154 = vpop.permute.xlu0 %3153
        %3155 = vrot.lane.b32.xlu0 %v1750, 32
        %v3156 = vpop.permute.xlu0 %3155
        %3157 = vrot.lane.b32.xlu0 %v1751, 32
        %v3158 = vpop.permute.xlu0 %3157
        %3159 = vrot.lane.b32.xlu0 %v1752, 32
        %v3160 = vpop.permute.xlu0 %3159
        %3161 = vrot.lane.b32.xlu0 %v1753, 32
        %v3162 = vpop.permute.xlu0 %3161
        %3163 = vrot.lane.b32.xlu0 %v1754, 32
        %v3164 = vpop.permute.xlu0 %3163
        %3165 = vrot.lane.b32.xlu0 %v2493, 32
        %v3166 = vpop.permute.xlu0 %3165
        %3167 = vrot.lane.b32.xlu0 %v3113, 32
        %v3168 = vpop.permute.xlu0 %3167
        %3169 = vrot.lane.b32.xlu0 %v1757, 32
        %v3170 = vpop.permute.xlu0 %3169
        %3171 = vrot.lane.b32.xlu0 %v1758, 32
        %v3172 = vpop.permute.xlu0 %3171
        %3173 = vrot.lane.b32.xlu0 %v1759, 32
        %v3174 = vpop.permute.xlu0 %3173
        %3175 = vrot.lane.b32.xlu0 %v1760, 32
        %v3176 = vpop.permute.xlu0 %3175
        %3177 = vrot.lane.b32.xlu0 %v1761, 32
        %v3178 = vpop.permute.xlu0 %3177
        %3179 = vrot.lane.b32.xlu0 %v1762, 32
        %v3180 = vpop.permute.xlu0 %3179
        %3181 = vrot.lane.b32.xlu0 %v2494, 32
        %v3182 = vpop.permute.xlu0 %3181
        %3183 = vrot.lane.b32.xlu0 %v3114, 32
        %v3184 = vpop.permute.xlu0 %3183
        %3185 = vrot.lane.b32.xlu0 %v1765, 32
        %v3186 = vpop.permute.xlu0 %3185
        %3187 = vrot.lane.b32.xlu0 %v1766, 32
        %v3188 = vpop.permute.xlu0 %3187
        %3189 = vrot.lane.b32.xlu0 %v1767, 32
        %v3190 = vpop.permute.xlu0 %3189
        %3191 = vrot.lane.b32.xlu0 %v1768, 32
        %v3192 = vpop.permute.xlu0 %3191
        %3193 = vrot.lane.b32.xlu0 %v1769, 32
        %v3194 = vpop.permute.xlu0 %3193
        %3195 = vrot.lane.b32.xlu0 %v1770, 32
        %v3196 = vpop.permute.xlu0 %3195
        %3197 = vrot.lane.b32.xlu0 %v2495, 32
        %v3198 = vpop.permute.xlu0 %3197
        %3199 = vrot.lane.b32.xlu0 %v3115, 32
        %v3200 = vpop.permute.xlu0 %3199
        %3201 = vrot.lane.b32.xlu0 %v1773, 32
        %v3202 = vpop.permute.xlu0 %3201
        %3203 = vrot.lane.b32.xlu0 %v1774, 32
        %v3204 = vpop.permute.xlu0 %3203
        %3205 = vrot.lane.b32.xlu0 %v1775, 32
        %v3206 = vpop.permute.xlu0 %3205
        %3207 = vrot.lane.b32.xlu0 %v1776, 32
        %v3208 = vpop.permute.xlu0 %3207
        %3209 = vrot.lane.b32.xlu0 %v1777, 32
        %v3210 = vpop.permute.xlu0 %3209
        %3211 = vrot.lane.b32.xlu0 %v1778, 32
        %v3212 = vpop.permute.xlu0 %3211
        %3213 = vrot.lane.b32.xlu0 %v2496, 32
        %v3214 = vpop.permute.xlu0 %3213
        %3215 = vrot.lane.b32.xlu0 %v3116, 32
        %v3216 = vpop.permute.xlu0 %3215
        %3217 = vrot.lane.b32.xlu0 %v1781, 32
        %v3218 = vpop.permute.xlu0 %3217
        %3219 = vrot.lane.b32.xlu0 %v1782, 32
        %v3220 = vpop.permute.xlu0 %3219
        %3221 = vrot.lane.b32.xlu0 %v1783, 32
        %v3222 = vpop.permute.xlu0 %3221
        %3223 = vrot.lane.b32.xlu0 %v1784, 32
        %v3224 = vpop.permute.xlu0 %3223
        %3225 = vrot.lane.b32.xlu0 %v1785, 32
        %v3226 = vpop.permute.xlu0 %3225
        %3227 = vrot.lane.b32.xlu0 %v1786, 32
        %v3228 = vpop.permute.xlu0 %3227
        %3229 = vrot.lane.b32.xlu0 %v2497, 32
        %v3230 = vpop.permute.xlu0 %3229
        %3231 = vrot.lane.b32.xlu0 %v3117, 32
        %v3232 = vpop.permute.xlu0 %3231
        %3233 = vrot.lane.b32.xlu0 %v1789, 32
        %v3234 = vpop.permute.xlu0 %3233
        %3235 = vrot.lane.b32.xlu0 %v1790, 32
        %v3236 = vpop.permute.xlu0 %3235
        %3237 = vrot.lane.b32.xlu0 %v1791, 32
        %v3238 = vpop.permute.xlu0 %3237
        %3239 = vrot.lane.b32.xlu0 %v1792, 32
        %v3240 = vpop.permute.xlu0 %3239
        %3241 = vrot.lane.b32.xlu0 %v1793, 32
        %v3242 = vpop.permute.xlu0 %3241
        %3243 = vrot.lane.b32.xlu0 %v1794, 32
        %v3244 = vpop.permute.xlu0 %3243
        %3245 = vrot.lane.b32.xlu0 %v2498, 32
        %v3246 = vpop.permute.xlu0 %3245
        %3247 = vrot.lane.b32.xlu0 %v3118, 32
        %v3248 = vpop.permute.xlu0 %3247
        %3249 = vrot.lane.b32.xlu0 %v1797, 32
        %v3250 = vpop.permute.xlu0 %3249
        %3251 = vrot.lane.b32.xlu0 %v1798, 32
        %v3252 = vpop.permute.xlu0 %3251
        %3253 = vrot.lane.b32.xlu0 %v1799, 32
        %v3254 = vpop.permute.xlu0 %3253
        %3255 = vrot.lane.b32.xlu0 %v1800, 32
        %v3256 = vpop.permute.xlu0 %3255
        %3257 = vrot.lane.b32.xlu0 %v1801, 32
        %v3258 = vpop.permute.xlu0 %3257
        %3259 = vrot.lane.b32.xlu0 %v1802, 32
        %v3260 = vpop.permute.xlu0 %3259
        %3261 = vrot.lane.b32.xlu0 %v2499, 32
        %v3262 = vpop.permute.xlu0 %3261
        %3263 = vrot.lane.b32.xlu0 %v3119, 32
        %v3264 = vpop.permute.xlu0 %3263
        %3265 = vrot.lane.b32.xlu0 %v1805, 32
        %v3266 = vpop.permute.xlu0 %3265
        %3267 = vrot.lane.b32.xlu0 %v1806, 32
        %v3268 = vpop.permute.xlu0 %3267
        %3269 = vrot.lane.b32.xlu0 %v1807, 32
        %v3270 = vpop.permute.xlu0 %3269
        %3271 = vrot.lane.b32.xlu0 %v1808, 32
        %v3272 = vpop.permute.xlu0 %3271
        %3273 = vrot.lane.b32.xlu0 %v1809, 32
        %v3274 = vpop.permute.xlu0 %3273
        %3275 = vrot.lane.b32.xlu0 %v1810, 32
        %v3276 = vpop.permute.xlu0 %3275
        %3277 = vrot.lane.b32.xlu0 %v2500, 32
        %v3278 = vpop.permute.xlu0 %3277
        %3279 = vrot.lane.b32.xlu0 %v3120, 32
        %v3280 = vpop.permute.xlu0 %3279
        %vm3281 = vcmask 31744
        %v3284 = vsel %vm3281, %v411, %v1572
        %v3287 = vsel %vm3281, %v413, %v1574
        %v3290 = vsel %vm3281, %v415, %v1576
        %v3293 = vsel %vm3281, %v417, %v1578
        %v3296 = vsel %vm3281, %v419, %v1580
        %v3299 = vsel %vm3281, %v421, %v1582
        %v3302 = vsel %vm3281, %v423, %v1584
        %v3305 = vsel %vm3281, %v425, %v1586
        %v3308 = vsel %vm3281, %v431, %v1588
        %v3311 = vsel %vm3281, %v433, %v1590
        %v3314 = vsel %vm3281, %v435, %v1592
        %v3317 = vsel %vm3281, %v437, %v1594
        %v3320 = vsel %vm3281, %v439, %v1596
        %v3323 = vsel %vm3281, %v441, %v1598
        %v3326 = vsel %vm3281, %v443, %v1600
        %v3329 = vsel %vm3281, %v445, %v1602
        %v3332 = vsel %vm3281, %v451, %v1604
        %v3335 = vsel %vm3281, %v453, %v1606
        %v3338 = vsel %vm3281, %v455, %v1608
        %v3341 = vsel %vm3281, %v457, %v1610
        %v3344 = vsel %vm3281, %v459, %v1612
        %v3347 = vsel %vm3281, %v461, %v1614
        %v3350 = vsel %vm3281, %v463, %v1616
        %v3353 = vsel %vm3281, %v465, %v1618
        %v3356 = vsel %vm3281, %v471, %v1620
        %v3359 = vsel %vm3281, %v473, %v1622
        %v3362 = vsel %vm3281, %v475, %v1624
        %v3365 = vsel %vm3281, %v477, %v1626
        %v3368 = vsel %vm3281, %v479, %v1628
        %v3371 = vsel %vm3281, %v481, %v1630
        %v3374 = vsel %vm3281, %v483, %v1632
        %v3377 = vsel %vm3281, %v485, %v1634
        %v3380 = vsel %vm3281, %v491, %v1636
        %v3383 = vsel %vm3281, %v493, %v1638
        %v3386 = vsel %vm3281, %v495, %v1640
        %v3389 = vsel %vm3281, %v497, %v1642
        %v3392 = vsel %vm3281, %v499, %v1644
        %v3395 = vsel %vm3281, %v501, %v1646
        %v3398 = vsel %vm3281, %v503, %v1648
        %v3401 = vsel %vm3281, %v505, %v1650
        %v3404 = vsel %vm3281, %v511, %v1652
        %v3407 = vsel %vm3281, %v513, %v1654
        %v3410 = vsel %vm3281, %v515, %v1656
        %v3413 = vsel %vm3281, %v517, %v1658
        %v3416 = vsel %vm3281, %v519, %v1660
        %v3419 = vsel %vm3281, %v521, %v1662
        %v3422 = vsel %vm3281, %v523, %v1664
        %v3425 = vsel %vm3281, %v525, %v1666
        %v3428 = vsel %vm3281, %v531, %v1668
        %v3431 = vsel %vm3281, %v533, %v1670
        %v3434 = vsel %vm3281, %v535, %v1672
        %v3437 = vsel %vm3281, %v537, %v1674
        %v3440 = vsel %vm3281, %v539, %v1676
        %v3443 = vsel %vm3281, %v541, %v1678
        %v3446 = vsel %vm3281, %v543, %v1680
        %v3449 = vsel %vm3281, %v545, %v1682
        %v3452 = vsel %vm3281, %v551, %v1684
        %v3455 = vsel %vm3281, %v553, %v1686
        %v3458 = vsel %vm3281, %v555, %v1688
        %v3461 = vsel %vm3281, %v557, %v1690
        %v3464 = vsel %vm3281, %v559, %v1692
        %v3467 = vsel %vm3281, %v561, %v1694
        %v3470 = vsel %vm3281, %v563, %v1696
        %v3473 = vsel %vm3281, %v565, %v1698
        %v3476 = vsel %vm3281, %v571, %v1700
        %v3479 = vsel %vm3281, %v573, %v1702
        %v3482 = vsel %vm3281, %v575, %v1704
        %v3485 = vsel %vm3281, %v577, %v1706
        %v3488 = vsel %vm3281, %v579, %v1708
        %v3491 = vsel %vm3281, %v581, %v1710
        %v3494 = vsel %vm3281, %v583, %v1712
        %v3497 = vsel %vm3281, %v585, %v1714
        %v3500 = vsel %vm3281, %v591, %v1716
        %v3503 = vsel %vm3281, %v593, %v1718
        %v3506 = vsel %vm3281, %v595, %v1720
        %v3509 = vsel %vm3281, %v597, %v1722
        %v3512 = vsel %vm3281, %v599, %v1724
        %v3515 = vsel %vm3281, %v601, %v1726
        %v3518 = vsel %vm3281, %v603, %v1728
        %v3521 = vsel %vm3281, %v605, %v1730
        %vm3522 = vcmask 64512
        %v3524 = vsel %vm3522, %v3284, %v1812
        %v3526 = vsel %vm3522, %v3287, %v1814
        %v3528 = vsel %vm3522, %v3290, %v1816
        %v3530 = vsel %vm3522, %v3293, %v1818
        %v3532 = vsel %vm3522, %v3296, %v1820
        %v3534 = vsel %vm3522, %v3299, %v1822
        %v3536 = vsel %vm3522, %v3302, %v1824
        %v3538 = vsel %vm3522, %v3305, %v1826
        %v3540 = vsel %vm3522, %v3308, %v1828
        %v3542 = vsel %vm3522, %v3311, %v1830
        %v3544 = vsel %vm3522, %v3314, %v1832
        %v3546 = vsel %vm3522, %v3317, %v1834
        %v3548 = vsel %vm3522, %v3320, %v1836
        %v3550 = vsel %vm3522, %v3323, %v1838
        %v3552 = vsel %vm3522, %v3326, %v1840
        %v3554 = vsel %vm3522, %v3329, %v1842
        %v3556 = vsel %vm3522, %v3332, %v1844
        %v3558 = vsel %vm3522, %v3335, %v1846
        %v3560 = vsel %vm3522, %v3338, %v1848
        %v3562 = vsel %vm3522, %v3341, %v1850
        %v3564 = vsel %vm3522, %v3344, %v1852
        %v3566 = vsel %vm3522, %v3347, %v1854
        %v3568 = vsel %vm3522, %v3350, %v1856
        %v3570 = vsel %vm3522, %v3353, %v1858
        %v3572 = vsel %vm3522, %v3356, %v1860
        %v3574 = vsel %vm3522, %v3359, %v1862
        %v3576 = vsel %vm3522, %v3362, %v1864
        %v3578 = vsel %vm3522, %v3365, %v1866
        %v3580 = vsel %vm3522, %v3368, %v1868
        %v3582 = vsel %vm3522, %v3371, %v1870
        %v3584 = vsel %vm3522, %v3374, %v1872
        %v3586 = vsel %vm3522, %v3377, %v1874
        %v3588 = vsel %vm3522, %v3380, %v1876
        %v3590 = vsel %vm3522, %v3383, %v1878
        %v3592 = vsel %vm3522, %v3386, %v1880
        %v3594 = vsel %vm3522, %v3389, %v1882
        %v3596 = vsel %vm3522, %v3392, %v1884
        %v3598 = vsel %vm3522, %v3395, %v1886
        %v3600 = vsel %vm3522, %v3398, %v1888
        %v3602 = vsel %vm3522, %v3401, %v1890
        %v3604 = vsel %vm3522, %v3404, %v1892
        %v3606 = vsel %vm3522, %v3407, %v1894
        %v3608 = vsel %vm3522, %v3410, %v1896
        %v3610 = vsel %vm3522, %v3413, %v1898
        %v3612 = vsel %vm3522, %v3416, %v1900
        %v3614 = vsel %vm3522, %v3419, %v1902
        %v3616 = vsel %vm3522, %v3422, %v1904
        %v3618 = vsel %vm3522, %v3425, %v1906
        %v3620 = vsel %vm3522, %v3428, %v1908
        %v3622 = vsel %vm3522, %v3431, %v1910
        %v3624 = vsel %vm3522, %v3434, %v1912
        %v3626 = vsel %vm3522, %v3437, %v1914
        %v3628 = vsel %vm3522, %v3440, %v1916
        %v3630 = vsel %vm3522, %v3443, %v1918
        %v3632 = vsel %vm3522, %v3446, %v1920
        %v3634 = vsel %vm3522, %v3449, %v1922
        %v3636 = vsel %vm3522, %v3452, %v1924
        %v3638 = vsel %vm3522, %v3455, %v1926
        %v3640 = vsel %vm3522, %v3458, %v1928
        %v3642 = vsel %vm3522, %v3461, %v1930
        %v3644 = vsel %vm3522, %v3464, %v1932
        %v3646 = vsel %vm3522, %v3467, %v1934
        %v3648 = vsel %vm3522, %v3470, %v1936
        %v3650 = vsel %vm3522, %v3473, %v1938
        %v3652 = vsel %vm3522, %v3476, %v1940
        %v3654 = vsel %vm3522, %v3479, %v1942
        %v3656 = vsel %vm3522, %v3482, %v1944
        %v3658 = vsel %vm3522, %v3485, %v1946
        %v3660 = vsel %vm3522, %v3488, %v1948
        %v3662 = vsel %vm3522, %v3491, %v1950
        %v3664 = vsel %vm3522, %v3494, %v1952
        %v3666 = vsel %vm3522, %v3497, %v1954
        %v3668 = vsel %vm3522, %v3500, %v1956
        %v3670 = vsel %vm3522, %v3503, %v1958
        %v3672 = vsel %vm3522, %v3506, %v1960
        %v3674 = vsel %vm3522, %v3509, %v1962
        %v3676 = vsel %vm3522, %v3512, %v1964
        %v3678 = vsel %vm3522, %v3515, %v1966
        %v3680 = vsel %vm3522, %v3518, %v1968
        %v3682 = vsel %vm3522, %v3521, %v1970
        %vm3683 = vcmask 97280
        %v3685 = vsel %vm3683, %v3524, %v2072
        %v3687 = vsel %vm3683, %v3526, %v2074
        %v3689 = vsel %vm3683, %v3528, %v2076
        %v3691 = vsel %vm3683, %v3530, %v2078
        %v3693 = vsel %vm3683, %v3532, %v2080
        %v3695 = vsel %vm3683, %v3534, %v2082
        %v3697 = vsel %vm3683, %v3536, %v2084
        %v3699 = vsel %vm3683, %v3538, %v2086
        %v3701 = vsel %vm3683, %v3540, %v2088
        %v3703 = vsel %vm3683, %v3542, %v2090
        %v3705 = vsel %vm3683, %v3544, %v2092
        %v3707 = vsel %vm3683, %v3546, %v2094
        %v3709 = vsel %vm3683, %v3548, %v2096
        %v3711 = vsel %vm3683, %v3550, %v2098
        %v3713 = vsel %vm3683, %v3552, %v2100
        %v3715 = vsel %vm3683, %v3554, %v2102
        %v3717 = vsel %vm3683, %v3556, %v2104
        %v3719 = vsel %vm3683, %v3558, %v2106
        %v3721 = vsel %vm3683, %v3560, %v2108
        %v3723 = vsel %vm3683, %v3562, %v2110
        %v3725 = vsel %vm3683, %v3564, %v2112
        %v3727 = vsel %vm3683, %v3566, %v2114
        %v3729 = vsel %vm3683, %v3568, %v2116
        %v3731 = vsel %vm3683, %v3570, %v2118
        %v3733 = vsel %vm3683, %v3572, %v2120
        %v3735 = vsel %vm3683, %v3574, %v2122
        %v3737 = vsel %vm3683, %v3576, %v2124
        %v3739 = vsel %vm3683, %v3578, %v2126
        %v3741 = vsel %vm3683, %v3580, %v2128
        %v3743 = vsel %vm3683, %v3582, %v2130
        %v3745 = vsel %vm3683, %v3584, %v2132
        %v3747 = vsel %vm3683, %v3586, %v2134
        %v3749 = vsel %vm3683, %v3588, %v2136
        %v3751 = vsel %vm3683, %v3590, %v2138
        %v3753 = vsel %vm3683, %v3592, %v2140
        %v3755 = vsel %vm3683, %v3594, %v2142
        %v3757 = vsel %vm3683, %v3596, %v2144
        %v3759 = vsel %vm3683, %v3598, %v2146
        %v3761 = vsel %vm3683, %v3600, %v2148
        %v3763 = vsel %vm3683, %v3602, %v2150
        %v3765 = vsel %vm3683, %v3604, %v2152
        %v3767 = vsel %vm3683, %v3606, %v2154
        %v3769 = vsel %vm3683, %v3608, %v2156
        %v3771 = vsel %vm3683, %v3610, %v2158
        %v3773 = vsel %vm3683, %v3612, %v2160
        %v3775 = vsel %vm3683, %v3614, %v2162
        %v3777 = vsel %vm3683, %v3616, %v2164
        %v3779 = vsel %vm3683, %v3618, %v2166
        %v3781 = vsel %vm3683, %v3620, %v2168
        %v3783 = vsel %vm3683, %v3622, %v2170
        %v3785 = vsel %vm3683, %v3624, %v2172
        %v3787 = vsel %vm3683, %v3626, %v2174
        %v3789 = vsel %vm3683, %v3628, %v2176
        %v3791 = vsel %vm3683, %v3630, %v2178
        %v3793 = vsel %vm3683, %v3632, %v2180
        %v3795 = vsel %vm3683, %v3634, %v2182
        %v3797 = vsel %vm3683, %v3636, %v2184
        %v3799 = vsel %vm3683, %v3638, %v2186
        %v3801 = vsel %vm3683, %v3640, %v2188
        %v3803 = vsel %vm3683, %v3642, %v2190
        %v3805 = vsel %vm3683, %v3644, %v2192
        %v3807 = vsel %vm3683, %v3646, %v2194
        %v3809 = vsel %vm3683, %v3648, %v2196
        %v3811 = vsel %vm3683, %v3650, %v2198
        %v3813 = vsel %vm3683, %v3652, %v2200
        %v3815 = vsel %vm3683, %v3654, %v2202
        %v3817 = vsel %vm3683, %v3656, %v2204
        %v3819 = vsel %vm3683, %v3658, %v2206
        %v3821 = vsel %vm3683, %v3660, %v2208
        %v3823 = vsel %vm3683, %v3662, %v2210
        %v3825 = vsel %vm3683, %v3664, %v2212
        %v3827 = vsel %vm3683, %v3666, %v2214
        %v3829 = vsel %vm3683, %v3668, %v2216
        %v3831 = vsel %vm3683, %v3670, %v2218
        %v3833 = vsel %vm3683, %v3672, %v2220
        %v3835 = vsel %vm3683, %v3674, %v2222
        %v3837 = vsel %vm3683, %v3676, %v2224
        %v3839 = vsel %vm3683, %v3678, %v2226
        %v3841 = vsel %vm3683, %v3680, %v2228
        %v3843 = vsel %vm3683, %v3682, %v2230
        %vm3844 = vcmask 130048
        %v3846 = vsel %vm3844, %v3685, %v2332
        %v3848 = vsel %vm3844, %v3687, %v2334
        %v3850 = vsel %vm3844, %v3689, %v2336
        %v3852 = vsel %vm3844, %v3691, %v2338
        %v3854 = vsel %vm3844, %v3693, %v2340
        %v3856 = vsel %vm3844, %v3695, %v2342
        %v3858 = vsel %vm3844, %v3697, %v2344
        %v3860 = vsel %vm3844, %v3699, %v2346
        %v3862 = vsel %vm3844, %v3701, %v2348
        %v3864 = vsel %vm3844, %v3703, %v2350
        %v3866 = vsel %vm3844, %v3705, %v2352
        %v3868 = vsel %vm3844, %v3707, %v2354
        %v3870 = vsel %vm3844, %v3709, %v2356
        %v3872 = vsel %vm3844, %v3711, %v2358
        %v3874 = vsel %vm3844, %v3713, %v2360
        %v3876 = vsel %vm3844, %v3715, %v2362
        %v3878 = vsel %vm3844, %v3717, %v2364
        %v3880 = vsel %vm3844, %v3719, %v2366
        %v3882 = vsel %vm3844, %v3721, %v2368
        %v3884 = vsel %vm3844, %v3723, %v2370
        %v3886 = vsel %vm3844, %v3725, %v2372
        %v3888 = vsel %vm3844, %v3727, %v2374
        %v3890 = vsel %vm3844, %v3729, %v2376
        %v3892 = vsel %vm3844, %v3731, %v2378
        %v3894 = vsel %vm3844, %v3733, %v2380
        %v3896 = vsel %vm3844, %v3735, %v2382
        %v3898 = vsel %vm3844, %v3737, %v2384
        %v3900 = vsel %vm3844, %v3739, %v2386
        %v3902 = vsel %vm3844, %v3741, %v2388
        %v3904 = vsel %vm3844, %v3743, %v2390
        %v3906 = vsel %vm3844, %v3745, %v2392
        %v3908 = vsel %vm3844, %v3747, %v2394
        %v3910 = vsel %vm3844, %v3749, %v2396
        %v3912 = vsel %vm3844, %v3751, %v2398
        %v3914 = vsel %vm3844, %v3753, %v2400
        %v3916 = vsel %vm3844, %v3755, %v2402
        %v3918 = vsel %vm3844, %v3757, %v2404
        %v3920 = vsel %vm3844, %v3759, %v2406
        %v3922 = vsel %vm3844, %v3761, %v2408
        %v3924 = vsel %vm3844, %v3763, %v2410
        %v3926 = vsel %vm3844, %v3765, %v2412
        %v3928 = vsel %vm3844, %v3767, %v2414
        %v3930 = vsel %vm3844, %v3769, %v2416
        %v3932 = vsel %vm3844, %v3771, %v2418
        %v3934 = vsel %vm3844, %v3773, %v2420
        %v3936 = vsel %vm3844, %v3775, %v2422
        %v3938 = vsel %vm3844, %v3777, %v2424
        %v3940 = vsel %vm3844, %v3779, %v2426
        %v3942 = vsel %vm3844, %v3781, %v2428
        %v3944 = vsel %vm3844, %v3783, %v2430
        %v3946 = vsel %vm3844, %v3785, %v2432
        %v3948 = vsel %vm3844, %v3787, %v2434
        %v3950 = vsel %vm3844, %v3789, %v2436
        %v3952 = vsel %vm3844, %v3791, %v2438
        %v3954 = vsel %vm3844, %v3793, %v2440
        %v3956 = vsel %vm3844, %v3795, %v2442
        %v3958 = vsel %vm3844, %v3797, %v2444
        %v3960 = vsel %vm3844, %v3799, %v2446
        %v3962 = vsel %vm3844, %v3801, %v2448
        %v3964 = vsel %vm3844, %v3803, %v2450
        %v3966 = vsel %vm3844, %v3805, %v2452
        %v3968 = vsel %vm3844, %v3807, %v2454
        %v3970 = vsel %vm3844, %v3809, %v2456
        %v3972 = vsel %vm3844, %v3811, %v2458
        %v3974 = vsel %vm3844, %v3813, %v2460
        %v3976 = vsel %vm3844, %v3815, %v2462
        %v3978 = vsel %vm3844, %v3817, %v2464
        %v3980 = vsel %vm3844, %v3819, %v2466
        %v3982 = vsel %vm3844, %v3821, %v2468
        %v3984 = vsel %vm3844, %v3823, %v2470
        %v3986 = vsel %vm3844, %v3825, %v2472
        %v3988 = vsel %vm3844, %v3827, %v2474
        %v3990 = vsel %vm3844, %v3829, %v2476
        %v3992 = vsel %vm3844, %v3831, %v2478
        %v3994 = vsel %vm3844, %v3833, %v2480
        %v3996 = vsel %vm3844, %v3835, %v2482
        %v3998 = vsel %vm3844, %v3837, %v2484
        %v4000 = vsel %vm3844, %v3839, %v2486
        %v4002 = vsel %vm3844, %v3841, %v2488
        %v4004 = vsel %vm3844, %v3843, %v2490
        %vm4005 = vcmask 162816
        %v4007 = vsel %vm4005, %v3846, %v2502
        %v4009 = vsel %vm4005, %v3848, %v2504
        %v4011 = vsel %vm4005, %v3850, %v2506
        %v4013 = vsel %vm4005, %v3852, %v2508
        %v4015 = vsel %vm4005, %v3854, %v2510
        %v4017 = vsel %vm4005, %v3856, %v2512
        %v4019 = vsel %vm4005, %v3858, %v2514
        %v4021 = vsel %vm4005, %v3860, %v2516
        %v4023 = vsel %vm4005, %v3862, %v2518
        %v4025 = vsel %vm4005, %v3864, %v2520
        %v4027 = vsel %vm4005, %v3866, %v2522
        %v4029 = vsel %vm4005, %v3868, %v2524
        %v4031 = vsel %vm4005, %v3870, %v2526
        %v4033 = vsel %vm4005, %v3872, %v2528
        %v4035 = vsel %vm4005, %v3874, %v2530
        %v4037 = vsel %vm4005, %v3876, %v2532
        %v4039 = vsel %vm4005, %v3878, %v2534
        %v4041 = vsel %vm4005, %v3880, %v2536
        %v4043 = vsel %vm4005, %v3882, %v2538
        %v4045 = vsel %vm4005, %v3884, %v2540
        %v4047 = vsel %vm4005, %v3886, %v2542
        %v4049 = vsel %vm4005, %v3888, %v2544
        %v4051 = vsel %vm4005, %v3890, %v2546
        %v4053 = vsel %vm4005, %v3892, %v2548
        %v4055 = vsel %vm4005, %v3894, %v2550
        %v4057 = vsel %vm4005, %v3896, %v2552
        %v4059 = vsel %vm4005, %v3898, %v2554
        %v4061 = vsel %vm4005, %v3900, %v2556
        %v4063 = vsel %vm4005, %v3902, %v2558
        %v4065 = vsel %vm4005, %v3904, %v2560
        %v4067 = vsel %vm4005, %v3906, %v2562
        %v4069 = vsel %vm4005, %v3908, %v2564
        %v4071 = vsel %vm4005, %v3910, %v2566
        %v4073 = vsel %vm4005, %v3912, %v2568
        %v4075 = vsel %vm4005, %v3914, %v2570
        %v4077 = vsel %vm4005, %v3916, %v2572
        %v4079 = vsel %vm4005, %v3918, %v2574
        %v4081 = vsel %vm4005, %v3920, %v2576
        %v4083 = vsel %vm4005, %v3922, %v2578
        %v4085 = vsel %vm4005, %v3924, %v2580
        %v4087 = vsel %vm4005, %v3926, %v2582
        %v4089 = vsel %vm4005, %v3928, %v2584
        %v4091 = vsel %vm4005, %v3930, %v2586
        %v4093 = vsel %vm4005, %v3932, %v2588
        %v4095 = vsel %vm4005, %v3934, %v2590
        %v4097 = vsel %vm4005, %v3936, %v2592
        %v4099 = vsel %vm4005, %v3938, %v2594
        %v4101 = vsel %vm4005, %v3940, %v2596
        %v4103 = vsel %vm4005, %v3942, %v2598
        %v4105 = vsel %vm4005, %v3944, %v2600
        %v4107 = vsel %vm4005, %v3946, %v2602
        %v4109 = vsel %vm4005, %v3948, %v2604
        %v4111 = vsel %vm4005, %v3950, %v2606
        %v4113 = vsel %vm4005, %v3952, %v2608
        %v4115 = vsel %vm4005, %v3954, %v2610
        %v4117 = vsel %vm4005, %v3956, %v2612
        %v4119 = vsel %vm4005, %v3958, %v2614
        %v4121 = vsel %vm4005, %v3960, %v2616
        %v4123 = vsel %vm4005, %v3962, %v2618
        %v4125 = vsel %vm4005, %v3964, %v2620
        %v4127 = vsel %vm4005, %v3966, %v2622
        %v4129 = vsel %vm4005, %v3968, %v2624
        %v4131 = vsel %vm4005, %v3970, %v2626
        %v4133 = vsel %vm4005, %v3972, %v2628
        %v4135 = vsel %vm4005, %v3974, %v2630
        %v4137 = vsel %vm4005, %v3976, %v2632
        %v4139 = vsel %vm4005, %v3978, %v2634
        %v4141 = vsel %vm4005, %v3980, %v2636
        %v4143 = vsel %vm4005, %v3982, %v2638
        %v4145 = vsel %vm4005, %v3984, %v2640
        %v4147 = vsel %vm4005, %v3986, %v2642
        %v4149 = vsel %vm4005, %v3988, %v2644
        %v4151 = vsel %vm4005, %v3990, %v2646
        %v4153 = vsel %vm4005, %v3992, %v2648
        %v4155 = vsel %vm4005, %v3994, %v2650
        %v4157 = vsel %vm4005, %v3996, %v2652
        %v4159 = vsel %vm4005, %v3998, %v2654
        %v4161 = vsel %vm4005, %v4000, %v2656
        %v4163 = vsel %vm4005, %v4002, %v2658
        %v4165 = vsel %vm4005, %v4004, %v2660
        %vm4166 = vcmask 195584
        %v4168 = vsel %vm4166, %v4007, %v2692
        %v4170 = vsel %vm4166, %v4009, %v2694
        %v4172 = vsel %vm4166, %v4011, %v2696
        %v4174 = vsel %vm4166, %v4013, %v2698
        %v4176 = vsel %vm4166, %v4015, %v2700
        %v4178 = vsel %vm4166, %v4017, %v2702
        %v4180 = vsel %vm4166, %v4019, %v2704
        %v4182 = vsel %vm4166, %v4021, %v2706
        %v4184 = vsel %vm4166, %v4023, %v2708
        %v4186 = vsel %vm4166, %v4025, %v2710
        %v4188 = vsel %vm4166, %v4027, %v2712
        %v4190 = vsel %vm4166, %v4029, %v2714
        %v4192 = vsel %vm4166, %v4031, %v2716
        %v4194 = vsel %vm4166, %v4033, %v2718
        %v4196 = vsel %vm4166, %v4035, %v2720
        %v4198 = vsel %vm4166, %v4037, %v2722
        %v4200 = vsel %vm4166, %v4039, %v2724
        %v4202 = vsel %vm4166, %v4041, %v2726
        %v4204 = vsel %vm4166, %v4043, %v2728
        %v4206 = vsel %vm4166, %v4045, %v2730
        %v4208 = vsel %vm4166, %v4047, %v2732
        %v4210 = vsel %vm4166, %v4049, %v2734
        %v4212 = vsel %vm4166, %v4051, %v2736
        %v4214 = vsel %vm4166, %v4053, %v2738
        %v4216 = vsel %vm4166, %v4055, %v2740
        %v4218 = vsel %vm4166, %v4057, %v2742
        %v4220 = vsel %vm4166, %v4059, %v2744
        %v4222 = vsel %vm4166, %v4061, %v2746
        %v4224 = vsel %vm4166, %v4063, %v2748
        %v4226 = vsel %vm4166, %v4065, %v2750
        %v4228 = vsel %vm4166, %v4067, %v2752
        %v4230 = vsel %vm4166, %v4069, %v2754
        %v4232 = vsel %vm4166, %v4071, %v2756
        %v4234 = vsel %vm4166, %v4073, %v2758
        %v4236 = vsel %vm4166, %v4075, %v2760
        %v4238 = vsel %vm4166, %v4077, %v2762
        %v4240 = vsel %vm4166, %v4079, %v2764
        %v4242 = vsel %vm4166, %v4081, %v2766
        %v4244 = vsel %vm4166, %v4083, %v2768
        %v4246 = vsel %vm4166, %v4085, %v2770
        %v4248 = vsel %vm4166, %v4087, %v2772
        %v4250 = vsel %vm4166, %v4089, %v2774
        %v4252 = vsel %vm4166, %v4091, %v2776
        %v4254 = vsel %vm4166, %v4093, %v2778
        %v4256 = vsel %vm4166, %v4095, %v2780
        %v4258 = vsel %vm4166, %v4097, %v2782
        %v4260 = vsel %vm4166, %v4099, %v2784
        %v4262 = vsel %vm4166, %v4101, %v2786
        %v4264 = vsel %vm4166, %v4103, %v2788
        %v4266 = vsel %vm4166, %v4105, %v2790
        %v4268 = vsel %vm4166, %v4107, %v2792
        %v4270 = vsel %vm4166, %v4109, %v2794
        %v4272 = vsel %vm4166, %v4111, %v2796
        %v4274 = vsel %vm4166, %v4113, %v2798
        %v4276 = vsel %vm4166, %v4115, %v2800
        %v4278 = vsel %vm4166, %v4117, %v2802
        %v4280 = vsel %vm4166, %v4119, %v2804
        %v4282 = vsel %vm4166, %v4121, %v2806
        %v4284 = vsel %vm4166, %v4123, %v2808
        %v4286 = vsel %vm4166, %v4125, %v2810
        %v4288 = vsel %vm4166, %v4127, %v2812
        %v4290 = vsel %vm4166, %v4129, %v2814
        %v4292 = vsel %vm4166, %v4131, %v2816
        %v4294 = vsel %vm4166, %v4133, %v2818
        %v4296 = vsel %vm4166, %v4135, %v2820
        %v4298 = vsel %vm4166, %v4137, %v2822
        %v4300 = vsel %vm4166, %v4139, %v2824
        %v4302 = vsel %vm4166, %v4141, %v2826
        %v4304 = vsel %vm4166, %v4143, %v2828
        %v4306 = vsel %vm4166, %v4145, %v2830
        %v4308 = vsel %vm4166, %v4147, %v2832
        %v4310 = vsel %vm4166, %v4149, %v2834
        %v4312 = vsel %vm4166, %v4151, %v2836
        %v4314 = vsel %vm4166, %v4153, %v2838
        %v4316 = vsel %vm4166, %v4155, %v2840
        %v4318 = vsel %vm4166, %v4157, %v2842
        %v4320 = vsel %vm4166, %v4159, %v2844
        %v4322 = vsel %vm4166, %v4161, %v2846
        %v4324 = vsel %vm4166, %v4163, %v2848
        %v4326 = vsel %vm4166, %v4165, %v2850
        %vm4327 = vcmask 228352
        %v4329 = vsel %vm4327, %v4168, %v2952
        %v4331 = vsel %vm4327, %v4170, %v2954
        %v4333 = vsel %vm4327, %v4172, %v2956
        %v4335 = vsel %vm4327, %v4174, %v2958
        %v4337 = vsel %vm4327, %v4176, %v2960
        %v4339 = vsel %vm4327, %v4178, %v2962
        %v4341 = vsel %vm4327, %v4180, %v2964
        %v4343 = vsel %vm4327, %v4182, %v2966
        %v4345 = vsel %vm4327, %v4184, %v2968
        %v4347 = vsel %vm4327, %v4186, %v2970
        %v4349 = vsel %vm4327, %v4188, %v2972
        %v4351 = vsel %vm4327, %v4190, %v2974
        %v4353 = vsel %vm4327, %v4192, %v2976
        %v4355 = vsel %vm4327, %v4194, %v2978
        %v4357 = vsel %vm4327, %v4196, %v2980
        %v4359 = vsel %vm4327, %v4198, %v2982
        %v4361 = vsel %vm4327, %v4200, %v2984
        %v4363 = vsel %vm4327, %v4202, %v2986
        %v4365 = vsel %vm4327, %v4204, %v2988
        %v4367 = vsel %vm4327, %v4206, %v2990
        %v4369 = vsel %vm4327, %v4208, %v2992
        %v4371 = vsel %vm4327, %v4210, %v2994
        %v4373 = vsel %vm4327, %v4212, %v2996
        %v4375 = vsel %vm4327, %v4214, %v2998
        %v4377 = vsel %vm4327, %v4216, %v3000
        %v4379 = vsel %vm4327, %v4218, %v3002
        %v4381 = vsel %vm4327, %v4220, %v3004
        %v4383 = vsel %vm4327, %v4222, %v3006
        %v4385 = vsel %vm4327, %v4224, %v3008
        %v4387 = vsel %vm4327, %v4226, %v3010
        %v4389 = vsel %vm4327, %v4228, %v3012
        %v4391 = vsel %vm4327, %v4230, %v3014
        %v4393 = vsel %vm4327, %v4232, %v3016
        %v4395 = vsel %vm4327, %v4234, %v3018
        %v4397 = vsel %vm4327, %v4236, %v3020
        %v4399 = vsel %vm4327, %v4238, %v3022
        %v4401 = vsel %vm4327, %v4240, %v3024
        %v4403 = vsel %vm4327, %v4242, %v3026
        %v4405 = vsel %vm4327, %v4244, %v3028
        %v4407 = vsel %vm4327, %v4246, %v3030
        %v4409 = vsel %vm4327, %v4248, %v3032
        %v4411 = vsel %vm4327, %v4250, %v3034
        %v4413 = vsel %vm4327, %v4252, %v3036
        %v4415 = vsel %vm4327, %v4254, %v3038
        %v4417 = vsel %vm4327, %v4256, %v3040
        %v4419 = vsel %vm4327, %v4258, %v3042
        %v4421 = vsel %vm4327, %v4260, %v3044
        %v4423 = vsel %vm4327, %v4262, %v3046
        %v4425 = vsel %vm4327, %v4264, %v3048
        %v4427 = vsel %vm4327, %v4266, %v3050
        %v4429 = vsel %vm4327, %v4268, %v3052
        %v4431 = vsel %vm4327, %v4270, %v3054
        %v4433 = vsel %vm4327, %v4272, %v3056
        %v4435 = vsel %vm4327, %v4274, %v3058
        %v4437 = vsel %vm4327, %v4276, %v3060
        %v4439 = vsel %vm4327, %v4278, %v3062
        %v4441 = vsel %vm4327, %v4280, %v3064
        %v4443 = vsel %vm4327, %v4282, %v3066
        %v4445 = vsel %vm4327, %v4284, %v3068
        %v4447 = vsel %vm4327, %v4286, %v3070
        %v4449 = vsel %vm4327, %v4288, %v3072
        %v4451 = vsel %vm4327, %v4290, %v3074
        %v4453 = vsel %vm4327, %v4292, %v3076
        %v4455 = vsel %vm4327, %v4294, %v3078
        %v4457 = vsel %vm4327, %v4296, %v3080
        %v4459 = vsel %vm4327, %v4298, %v3082
        %v4461 = vsel %vm4327, %v4300, %v3084
        %v4463 = vsel %vm4327, %v4302, %v3086
        %v4465 = vsel %vm4327, %v4304, %v3088
        %v4467 = vsel %vm4327, %v4306, %v3090
        %v4469 = vsel %vm4327, %v4308, %v3092
        %v4471 = vsel %vm4327, %v4310, %v3094
        %v4473 = vsel %vm4327, %v4312, %v3096
        %v4475 = vsel %vm4327, %v4314, %v3098
        %v4477 = vsel %vm4327, %v4316, %v3100
        %v4479 = vsel %vm4327, %v4318, %v3102
        %v4481 = vsel %vm4327, %v4320, %v3104
        %v4483 = vsel %vm4327, %v4322, %v3106
        %v4485 = vsel %vm4327, %v4324, %v3108
        %v4487 = vsel %vm4327, %v4326, %v3110
        %vm4488 = vcmask 261120
        %v4490 = vsel %vm4488, %v4329, %v3122
        %v4492 = vsel %vm4488, %v4331, %v3124
        %v4494 = vsel %vm4488, %v4333, %v3126
        %v4496 = vsel %vm4488, %v4335, %v3128
        %v4498 = vsel %vm4488, %v4337, %v3130
        %v4500 = vsel %vm4488, %v4339, %v3132
        %v4502 = vsel %vm4488, %v4341, %v3134
        %v4504 = vsel %vm4488, %v4343, %v3136
        %v4506 = vsel %vm4488, %v4345, %v3138
        %v4508 = vsel %vm4488, %v4347, %v3140
        %v4510 = vsel %vm4488, %v4349, %v3142
        %v4512 = vsel %vm4488, %v4351, %v3144
        %v4514 = vsel %vm4488, %v4353, %v3146
        %v4516 = vsel %vm4488, %v4355, %v3148
        %v4518 = vsel %vm4488, %v4357, %v3150
        %v4520 = vsel %vm4488, %v4359, %v3152
        %v4522 = vsel %vm4488, %v4361, %v3154
        %v4524 = vsel %vm4488, %v4363, %v3156
        %v4526 = vsel %vm4488, %v4365, %v3158
        %v4528 = vsel %vm4488, %v4367, %v3160
        %v4530 = vsel %vm4488, %v4369, %v3162
        %v4532 = vsel %vm4488, %v4371, %v3164
        %v4534 = vsel %vm4488, %v4373, %v3166
        %v4536 = vsel %vm4488, %v4375, %v3168
        %v4538 = vsel %vm4488, %v4377, %v3170
        %v4540 = vsel %vm4488, %v4379, %v3172
        %v4542 = vsel %vm4488, %v4381, %v3174
        %v4544 = vsel %vm4488, %v4383, %v3176
        %v4546 = vsel %vm4488, %v4385, %v3178
        %v4548 = vsel %vm4488, %v4387, %v3180
        %v4550 = vsel %vm4488, %v4389, %v3182
        %v4552 = vsel %vm4488, %v4391, %v3184
        %v4554 = vsel %vm4488, %v4393, %v3186
        %v4556 = vsel %vm4488, %v4395, %v3188
        %v4558 = vsel %vm4488, %v4397, %v3190
        %v4560 = vsel %vm4488, %v4399, %v3192
        %v4562 = vsel %vm4488, %v4401, %v3194
        %v4564 = vsel %vm4488, %v4403, %v3196
        %v4566 = vsel %vm4488, %v4405, %v3198
        %v4568 = vsel %vm4488, %v4407, %v3200
        %v4570 = vsel %vm4488, %v4409, %v3202
        %v4572 = vsel %vm4488, %v4411, %v3204
        %v4574 = vsel %vm4488, %v4413, %v3206
        %v4576 = vsel %vm4488, %v4415, %v3208
        %v4578 = vsel %vm4488, %v4417, %v3210
        %v4580 = vsel %vm4488, %v4419, %v3212
        %v4582 = vsel %vm4488, %v4421, %v3214
        %v4584 = vsel %vm4488, %v4423, %v3216
        %v4586 = vsel %vm4488, %v4425, %v3218
        %v4588 = vsel %vm4488, %v4427, %v3220
        %v4590 = vsel %vm4488, %v4429, %v3222
        %v4592 = vsel %vm4488, %v4431, %v3224
        %v4594 = vsel %vm4488, %v4433, %v3226
        %v4596 = vsel %vm4488, %v4435, %v3228
        %v4598 = vsel %vm4488, %v4437, %v3230
        %v4600 = vsel %vm4488, %v4439, %v3232
        %v4602 = vsel %vm4488, %v4441, %v3234
        %v4604 = vsel %vm4488, %v4443, %v3236
        %v4606 = vsel %vm4488, %v4445, %v3238
        %v4608 = vsel %vm4488, %v4447, %v3240
        %v4610 = vsel %vm4488, %v4449, %v3242
        %v4612 = vsel %vm4488, %v4451, %v3244
        %v4614 = vsel %vm4488, %v4453, %v3246
        %v4616 = vsel %vm4488, %v4455, %v3248
        %v4618 = vsel %vm4488, %v4457, %v3250
        %v4620 = vsel %vm4488, %v4459, %v3252
        %v4622 = vsel %vm4488, %v4461, %v3254
        %v4624 = vsel %vm4488, %v4463, %v3256
        %v4626 = vsel %vm4488, %v4465, %v3258
        %v4628 = vsel %vm4488, %v4467, %v3260
        %v4630 = vsel %vm4488, %v4469, %v3262
        %v4632 = vsel %vm4488, %v4471, %v3264
        %v4634 = vsel %vm4488, %v4473, %v3266
        %v4636 = vsel %vm4488, %v4475, %v3268
        %v4638 = vsel %vm4488, %v4477, %v3270
        %v4640 = vsel %vm4488, %v4479, %v3272
        %v4642 = vsel %vm4488, %v4481, %v3274
        %v4644 = vsel %vm4488, %v4483, %v3276
        %v4646 = vsel %vm4488, %v4485, %v3278
        %v4648 = vsel %vm4488, %v4487, %v3280
        %4713 = vrot.lane.b32.xlu0 %v4506, 36
        %v4714 = vpop.permute.xlu0 %4713
        %4715 = vrot.lane.b32.xlu0 %v4508, 36
        %v4716 = vpop.permute.xlu0 %4715
        %4717 = vrot.lane.b32.xlu0 %v4510, 36
        %v4718 = vpop.permute.xlu0 %4717
        %4719 = vrot.lane.b32.xlu0 %v4512, 36
        %v4720 = vpop.permute.xlu0 %4719
        %4721 = vrot.lane.b32.xlu0 %v4514, 36
        %v4722 = vpop.permute.xlu0 %4721
        %4723 = vrot.lane.b32.xlu0 %v4516, 36
        %v4724 = vpop.permute.xlu0 %4723
        %4725 = vrot.lane.b32.xlu0 %v4518, 36
        %v4726 = vpop.permute.xlu0 %4725
        %4727 = vrot.lane.b32.xlu0 %v4520, 36
        %v4728 = vpop.permute.xlu0 %4727
        %4729 = vrot.lane.b32.xlu0 %v4522, 36
        %v4730 = vpop.permute.xlu0 %4729
        %4731 = vrot.lane.b32.xlu0 %v4524, 36
        %v4732 = vpop.permute.xlu0 %4731
        %4733 = vrot.lane.b32.xlu0 %v4526, 36
        %v4734 = vpop.permute.xlu0 %4733
        %4735 = vrot.lane.b32.xlu0 %v4528, 36
        %v4736 = vpop.permute.xlu0 %4735
        %4737 = vrot.lane.b32.xlu0 %v4530, 36
        %v4738 = vpop.permute.xlu0 %4737
        %4739 = vrot.lane.b32.xlu0 %v4532, 36
        %v4740 = vpop.permute.xlu0 %4739
        %4741 = vrot.lane.b32.xlu0 %v4534, 36
        %v4742 = vpop.permute.xlu0 %4741
        %4743 = vrot.lane.b32.xlu0 %v4536, 36
        %v4744 = vpop.permute.xlu0 %4743
        %4745 = vrot.lane.b32.xlu0 %v4538, 36
        %v4746 = vpop.permute.xlu0 %4745
        %4747 = vrot.lane.b32.xlu0 %v4540, 36
        %v4748 = vpop.permute.xlu0 %4747
        %4749 = vrot.lane.b32.xlu0 %v4542, 36
        %v4750 = vpop.permute.xlu0 %4749
        %4751 = vrot.lane.b32.xlu0 %v4544, 36
        %v4752 = vpop.permute.xlu0 %4751
        %4753 = vrot.lane.b32.xlu0 %v4546, 36
        %v4754 = vpop.permute.xlu0 %4753
        %4755 = vrot.lane.b32.xlu0 %v4548, 36
        %v4756 = vpop.permute.xlu0 %4755
        %4757 = vrot.lane.b32.xlu0 %v4550, 36
        %v4758 = vpop.permute.xlu0 %4757
        %4759 = vrot.lane.b32.xlu0 %v4552, 36
        %v4760 = vpop.permute.xlu0 %4759
        %4761 = vrot.lane.b32.xlu0 %v4554, 36
        %v4762 = vpop.permute.xlu0 %4761
        %4763 = vrot.lane.b32.xlu0 %v4556, 36
        %v4764 = vpop.permute.xlu0 %4763
        %4765 = vrot.lane.b32.xlu0 %v4558, 36
        %v4766 = vpop.permute.xlu0 %4765
        %4767 = vrot.lane.b32.xlu0 %v4560, 36
        %v4768 = vpop.permute.xlu0 %4767
        %4769 = vrot.lane.b32.xlu0 %v4562, 36
        %v4770 = vpop.permute.xlu0 %4769
        %4771 = vrot.lane.b32.xlu0 %v4564, 36
        %v4772 = vpop.permute.xlu0 %4771
        %4773 = vrot.lane.b32.xlu0 %v4566, 36
        %v4774 = vpop.permute.xlu0 %4773
        %4775 = vrot.lane.b32.xlu0 %v4568, 36
        %v4776 = vpop.permute.xlu0 %4775
        %4777 = vrot.lane.b32.xlu0 %v4570, 36
        %v4778 = vpop.permute.xlu0 %4777
        %4779 = vrot.lane.b32.xlu0 %v4572, 36
        %v4780 = vpop.permute.xlu0 %4779
        %4781 = vrot.lane.b32.xlu0 %v4574, 36
        %v4782 = vpop.permute.xlu0 %4781
        %4783 = vrot.lane.b32.xlu0 %v4576, 36
        %v4784 = vpop.permute.xlu0 %4783
        %4785 = vrot.lane.b32.xlu0 %v4578, 36
        %v4786 = vpop.permute.xlu0 %4785
        %4787 = vrot.lane.b32.xlu0 %v4580, 36
        %v4788 = vpop.permute.xlu0 %4787
        %4789 = vrot.lane.b32.xlu0 %v4582, 36
        %v4790 = vpop.permute.xlu0 %4789
        %4791 = vrot.lane.b32.xlu0 %v4584, 36
        %v4792 = vpop.permute.xlu0 %4791
        %4793 = vrot.lane.b32.xlu0 %v4586, 36
        %v4794 = vpop.permute.xlu0 %4793
        %4795 = vrot.lane.b32.xlu0 %v4588, 36
        %v4796 = vpop.permute.xlu0 %4795
        %4797 = vrot.lane.b32.xlu0 %v4590, 36
        %v4798 = vpop.permute.xlu0 %4797
        %4799 = vrot.lane.b32.xlu0 %v4592, 36
        %v4800 = vpop.permute.xlu0 %4799
        %4801 = vrot.lane.b32.xlu0 %v4594, 36
        %v4802 = vpop.permute.xlu0 %4801
        %4803 = vrot.lane.b32.xlu0 %v4596, 36
        %v4804 = vpop.permute.xlu0 %4803
        %4805 = vrot.lane.b32.xlu0 %v4598, 36
        %v4806 = vpop.permute.xlu0 %4805
        %4807 = vrot.lane.b32.xlu0 %v4600, 36
        %v4808 = vpop.permute.xlu0 %4807
        %4809 = vrot.lane.b32.xlu0 %v4602, 36
        %v4810 = vpop.permute.xlu0 %4809
        %4811 = vrot.lane.b32.xlu0 %v4604, 36
        %v4812 = vpop.permute.xlu0 %4811
        %4813 = vrot.lane.b32.xlu0 %v4606, 36
        %v4814 = vpop.permute.xlu0 %4813
        %4815 = vrot.lane.b32.xlu0 %v4608, 36
        %v4816 = vpop.permute.xlu0 %4815
        %4817 = vrot.lane.b32.xlu0 %v4610, 36
        %v4818 = vpop.permute.xlu0 %4817
        %4819 = vrot.lane.b32.xlu0 %v4612, 36
        %v4820 = vpop.permute.xlu0 %4819
        %4821 = vrot.lane.b32.xlu0 %v4614, 36
        %v4822 = vpop.permute.xlu0 %4821
        %4823 = vrot.lane.b32.xlu0 %v4616, 36
        %v4824 = vpop.permute.xlu0 %4823
        %4825 = vrot.lane.b32.xlu0 %v4618, 36
        %v4826 = vpop.permute.xlu0 %4825
        %4827 = vrot.lane.b32.xlu0 %v4620, 36
        %v4828 = vpop.permute.xlu0 %4827
        %4829 = vrot.lane.b32.xlu0 %v4622, 36
        %v4830 = vpop.permute.xlu0 %4829
        %4831 = vrot.lane.b32.xlu0 %v4624, 36
        %v4832 = vpop.permute.xlu0 %4831
        %4833 = vrot.lane.b32.xlu0 %v4626, 36
        %v4834 = vpop.permute.xlu0 %4833
        %4835 = vrot.lane.b32.xlu0 %v4628, 36
        %v4836 = vpop.permute.xlu0 %4835
        %4837 = vrot.lane.b32.xlu0 %v4630, 36
        %v4838 = vpop.permute.xlu0 %4837
        %4839 = vrot.lane.b32.xlu0 %v4632, 36
        %v4840 = vpop.permute.xlu0 %4839
        %4849 = vrot.lane.b32.xlu0 %v4522, 72
        %v4850 = vpop.permute.xlu0 %4849
        %4851 = vrot.lane.b32.xlu0 %v4524, 72
        %v4852 = vpop.permute.xlu0 %4851
        %4853 = vrot.lane.b32.xlu0 %v4526, 72
        %v4854 = vpop.permute.xlu0 %4853
        %4855 = vrot.lane.b32.xlu0 %v4528, 72
        %v4856 = vpop.permute.xlu0 %4855
        %4857 = vrot.lane.b32.xlu0 %v4530, 72
        %v4858 = vpop.permute.xlu0 %4857
        %4859 = vrot.lane.b32.xlu0 %v4532, 72
        %v4860 = vpop.permute.xlu0 %4859
        %4861 = vrot.lane.b32.xlu0 %v4534, 72
        %v4862 = vpop.permute.xlu0 %4861
        %4863 = vrot.lane.b32.xlu0 %v4536, 72
        %v4864 = vpop.permute.xlu0 %4863
        %4865 = vrot.lane.b32.xlu0 %v4538, 72
        %v4866 = vpop.permute.xlu0 %4865
        %4867 = vrot.lane.b32.xlu0 %v4540, 72
        %v4868 = vpop.permute.xlu0 %4867
        %4869 = vrot.lane.b32.xlu0 %v4542, 72
        %v4870 = vpop.permute.xlu0 %4869
        %4871 = vrot.lane.b32.xlu0 %v4544, 72
        %v4872 = vpop.permute.xlu0 %4871
        %4873 = vrot.lane.b32.xlu0 %v4546, 72
        %v4874 = vpop.permute.xlu0 %4873
        %4875 = vrot.lane.b32.xlu0 %v4548, 72
        %v4876 = vpop.permute.xlu0 %4875
        %4877 = vrot.lane.b32.xlu0 %v4550, 72
        %v4878 = vpop.permute.xlu0 %4877
        %4879 = vrot.lane.b32.xlu0 %v4552, 72
        %v4880 = vpop.permute.xlu0 %4879
        %4881 = vrot.lane.b32.xlu0 %v4554, 72
        %v4882 = vpop.permute.xlu0 %4881
        %4883 = vrot.lane.b32.xlu0 %v4556, 72
        %v4884 = vpop.permute.xlu0 %4883
        %4885 = vrot.lane.b32.xlu0 %v4558, 72
        %v4886 = vpop.permute.xlu0 %4885
        %4887 = vrot.lane.b32.xlu0 %v4560, 72
        %v4888 = vpop.permute.xlu0 %4887
        %4889 = vrot.lane.b32.xlu0 %v4562, 72
        %v4890 = vpop.permute.xlu0 %4889
        %4891 = vrot.lane.b32.xlu0 %v4564, 72
        %v4892 = vpop.permute.xlu0 %4891
        %4893 = vrot.lane.b32.xlu0 %v4566, 72
        %v4894 = vpop.permute.xlu0 %4893
        %4895 = vrot.lane.b32.xlu0 %v4568, 72
        %v4896 = vpop.permute.xlu0 %4895
        %4897 = vrot.lane.b32.xlu0 %v4570, 72
        %v4898 = vpop.permute.xlu0 %4897
        %4899 = vrot.lane.b32.xlu0 %v4572, 72
        %v4900 = vpop.permute.xlu0 %4899
        %4901 = vrot.lane.b32.xlu0 %v4574, 72
        %v4902 = vpop.permute.xlu0 %4901
        %4903 = vrot.lane.b32.xlu0 %v4576, 72
        %v4904 = vpop.permute.xlu0 %4903
        %4905 = vrot.lane.b32.xlu0 %v4578, 72
        %v4906 = vpop.permute.xlu0 %4905
        %4907 = vrot.lane.b32.xlu0 %v4580, 72
        %v4908 = vpop.permute.xlu0 %4907
        %4909 = vrot.lane.b32.xlu0 %v4582, 72
        %v4910 = vpop.permute.xlu0 %4909
        %4911 = vrot.lane.b32.xlu0 %v4584, 72
        %v4912 = vpop.permute.xlu0 %4911
        %4913 = vrot.lane.b32.xlu0 %v4586, 72
        %v4914 = vpop.permute.xlu0 %4913
        %4915 = vrot.lane.b32.xlu0 %v4588, 72
        %v4916 = vpop.permute.xlu0 %4915
        %4917 = vrot.lane.b32.xlu0 %v4590, 72
        %v4918 = vpop.permute.xlu0 %4917
        %4919 = vrot.lane.b32.xlu0 %v4592, 72
        %v4920 = vpop.permute.xlu0 %4919
        %4921 = vrot.lane.b32.xlu0 %v4594, 72
        %v4922 = vpop.permute.xlu0 %4921
        %4923 = vrot.lane.b32.xlu0 %v4596, 72
        %v4924 = vpop.permute.xlu0 %4923
        %4925 = vrot.lane.b32.xlu0 %v4598, 72
        %v4926 = vpop.permute.xlu0 %4925
        %4927 = vrot.lane.b32.xlu0 %v4600, 72
        %v4928 = vpop.permute.xlu0 %4927
        %4929 = vrot.lane.b32.xlu0 %v4602, 72
        %v4930 = vpop.permute.xlu0 %4929
        %4931 = vrot.lane.b32.xlu0 %v4604, 72
        %v4932 = vpop.permute.xlu0 %4931
        %4933 = vrot.lane.b32.xlu0 %v4606, 72
        %v4934 = vpop.permute.xlu0 %4933
        %4935 = vrot.lane.b32.xlu0 %v4608, 72
        %v4936 = vpop.permute.xlu0 %4935
        %4937 = vrot.lane.b32.xlu0 %v4610, 72
        %v4938 = vpop.permute.xlu0 %4937
        %4939 = vrot.lane.b32.xlu0 %v4612, 72
        %v4940 = vpop.permute.xlu0 %4939
        %4941 = vrot.lane.b32.xlu0 %v4614, 72
        %v4942 = vpop.permute.xlu0 %4941
        %4943 = vrot.lane.b32.xlu0 %v4616, 72
        %v4944 = vpop.permute.xlu0 %4943
        %4945 = vrot.lane.b32.xlu0 %v4618, 72
        %v4946 = vpop.permute.xlu0 %4945
        %4947 = vrot.lane.b32.xlu0 %v4620, 72
        %v4948 = vpop.permute.xlu0 %4947
        %4949 = vrot.lane.b32.xlu0 %v4622, 72
        %v4950 = vpop.permute.xlu0 %4949
        %4951 = vrot.lane.b32.xlu0 %v4624, 72
        %v4952 = vpop.permute.xlu0 %4951
        %4953 = vrot.lane.b32.xlu0 %v4626, 72
        %v4954 = vpop.permute.xlu0 %4953
        %4955 = vrot.lane.b32.xlu0 %v4628, 72
        %v4956 = vpop.permute.xlu0 %4955
        %4957 = vrot.lane.b32.xlu0 %v4630, 72
        %v4958 = vpop.permute.xlu0 %4957
        %4959 = vrot.lane.b32.xlu0 %v4632, 72
        %v4960 = vpop.permute.xlu0 %4959
        %4961 = vrot.lane.b32.xlu0 %v4634, 72
        %v4962 = vpop.permute.xlu0 %4961
        %4963 = vrot.lane.b32.xlu0 %v4636, 72
        %v4964 = vpop.permute.xlu0 %4963
        %4965 = vrot.lane.b32.xlu0 %v4638, 72
        %v4966 = vpop.permute.xlu0 %4965
        %4967 = vrot.lane.b32.xlu0 %v4640, 72
        %v4968 = vpop.permute.xlu0 %4967
        %4969 = vrot.lane.b32.xlu0 %v4642, 72
        %v4970 = vpop.permute.xlu0 %4969
        %4971 = vrot.lane.b32.xlu0 %v4644, 72
        %v4972 = vpop.permute.xlu0 %4971
        %4973 = vrot.lane.b32.xlu0 %v4646, 72
        %v4974 = vpop.permute.xlu0 %4973
        %4975 = vrot.lane.b32.xlu0 %v4648, 72
        %v4976 = vpop.permute.xlu0 %4975
        %vm4977 = vcmask 293888
        %v4979 = vsel %vm4977, %v4490, %v4714
        %v4981 = vsel %vm4977, %v4492, %v4716
        %v4983 = vsel %vm4977, %v4494, %v4718
        %v4985 = vsel %vm4977, %v4496, %v4720
        %v4987 = vsel %vm4977, %v4498, %v4722
        %v4989 = vsel %vm4977, %v4500, %v4724
        %v4991 = vsel %vm4977, %v4502, %v4726
        %v4993 = vsel %vm4977, %v4504, %v4728
        %v4995 = vsel %vm4977, %v4506, %v4730
        %v4997 = vsel %vm4977, %v4508, %v4732
        %v4999 = vsel %vm4977, %v4510, %v4734
        %v5001 = vsel %vm4977, %v4512, %v4736
        %v5003 = vsel %vm4977, %v4514, %v4738
        %v5005 = vsel %vm4977, %v4516, %v4740
        %v5007 = vsel %vm4977, %v4518, %v4742
        %v5009 = vsel %vm4977, %v4520, %v4744
        %v5011 = vsel %vm4977, %v4522, %v4746
        %v5013 = vsel %vm4977, %v4524, %v4748
        %v5015 = vsel %vm4977, %v4526, %v4750
        %v5017 = vsel %vm4977, %v4528, %v4752
        %v5019 = vsel %vm4977, %v4530, %v4754
        %v5021 = vsel %vm4977, %v4532, %v4756
        %v5023 = vsel %vm4977, %v4534, %v4758
        %v5025 = vsel %vm4977, %v4536, %v4760
        %v5027 = vsel %vm4977, %v4538, %v4762
        %v5029 = vsel %vm4977, %v4540, %v4764
        %v5031 = vsel %vm4977, %v4542, %v4766
        %v5033 = vsel %vm4977, %v4544, %v4768
        %v5035 = vsel %vm4977, %v4546, %v4770
        %v5037 = vsel %vm4977, %v4548, %v4772
        %v5039 = vsel %vm4977, %v4550, %v4774
        %v5041 = vsel %vm4977, %v4552, %v4776
        %v5043 = vsel %vm4977, %v4554, %v4778
        %v5045 = vsel %vm4977, %v4556, %v4780
        %v5047 = vsel %vm4977, %v4558, %v4782
        %v5049 = vsel %vm4977, %v4560, %v4784
        %v5051 = vsel %vm4977, %v4562, %v4786
        %v5053 = vsel %vm4977, %v4564, %v4788
        %v5055 = vsel %vm4977, %v4566, %v4790
        %v5057 = vsel %vm4977, %v4568, %v4792
        %v5059 = vsel %vm4977, %v4570, %v4794
        %v5061 = vsel %vm4977, %v4572, %v4796
        %v5063 = vsel %vm4977, %v4574, %v4798
        %v5065 = vsel %vm4977, %v4576, %v4800
        %v5067 = vsel %vm4977, %v4578, %v4802
        %v5069 = vsel %vm4977, %v4580, %v4804
        %v5071 = vsel %vm4977, %v4582, %v4806
        %v5073 = vsel %vm4977, %v4584, %v4808
        %v5075 = vsel %vm4977, %v4586, %v4810
        %v5077 = vsel %vm4977, %v4588, %v4812
        %v5079 = vsel %vm4977, %v4590, %v4814
        %v5081 = vsel %vm4977, %v4592, %v4816
        %v5083 = vsel %vm4977, %v4594, %v4818
        %v5085 = vsel %vm4977, %v4596, %v4820
        %v5087 = vsel %vm4977, %v4598, %v4822
        %v5089 = vsel %vm4977, %v4600, %v4824
        %v5091 = vsel %vm4977, %v4602, %v4826
        %v5093 = vsel %vm4977, %v4604, %v4828
        %v5095 = vsel %vm4977, %v4606, %v4830
        %v5097 = vsel %vm4977, %v4608, %v4832
        %v5099 = vsel %vm4977, %v4610, %v4834
        %v5101 = vsel %vm4977, %v4612, %v4836
        %v5103 = vsel %vm4977, %v4614, %v4838
        %v5105 = vsel %vm4977, %v4616, %v4840
        %vm5106 = vcmask 588800
        %v5108 = vsel %vm5106, %v4979, %v4850
        %v5110 = vsel %vm5106, %v4981, %v4852
        %v5112 = vsel %vm5106, %v4983, %v4854
        %v5114 = vsel %vm5106, %v4985, %v4856
        %v5116 = vsel %vm5106, %v4987, %v4858
        %v5118 = vsel %vm5106, %v4989, %v4860
        %v5120 = vsel %vm5106, %v4991, %v4862
        %v5122 = vsel %vm5106, %v4993, %v4864
        %v5124 = vsel %vm5106, %v4995, %v4866
        %v5126 = vsel %vm5106, %v4997, %v4868
        %v5128 = vsel %vm5106, %v4999, %v4870
        %v5130 = vsel %vm5106, %v5001, %v4872
        %v5132 = vsel %vm5106, %v5003, %v4874
        %v5134 = vsel %vm5106, %v5005, %v4876
        %v5136 = vsel %vm5106, %v5007, %v4878
        %v5138 = vsel %vm5106, %v5009, %v4880
        %v5140 = vsel %vm5106, %v5011, %v4882
        %v5142 = vsel %vm5106, %v5013, %v4884
        %v5144 = vsel %vm5106, %v5015, %v4886
        %v5146 = vsel %vm5106, %v5017, %v4888
        %v5148 = vsel %vm5106, %v5019, %v4890
        %v5150 = vsel %vm5106, %v5021, %v4892
        %v5152 = vsel %vm5106, %v5023, %v4894
        %v5154 = vsel %vm5106, %v5025, %v4896
        %v5156 = vsel %vm5106, %v5027, %v4898
        %v5158 = vsel %vm5106, %v5029, %v4900
        %v5160 = vsel %vm5106, %v5031, %v4902
        %v5162 = vsel %vm5106, %v5033, %v4904
        %v5164 = vsel %vm5106, %v5035, %v4906
        %v5166 = vsel %vm5106, %v5037, %v4908
        %v5168 = vsel %vm5106, %v5039, %v4910
        %v5170 = vsel %vm5106, %v5041, %v4912
        %v5172 = vsel %vm5106, %v5043, %v4914
        %v5174 = vsel %vm5106, %v5045, %v4916
        %v5176 = vsel %vm5106, %v5047, %v4918
        %v5178 = vsel %vm5106, %v5049, %v4920
        %v5180 = vsel %vm5106, %v5051, %v4922
        %v5182 = vsel %vm5106, %v5053, %v4924
        %v5184 = vsel %vm5106, %v5055, %v4926
        %v5186 = vsel %vm5106, %v5057, %v4928
        %v5188 = vsel %vm5106, %v5059, %v4930
        %v5190 = vsel %vm5106, %v5061, %v4932
        %v5192 = vsel %vm5106, %v5063, %v4934
        %v5194 = vsel %vm5106, %v5065, %v4936
        %v5196 = vsel %vm5106, %v5067, %v4938
        %v5198 = vsel %vm5106, %v5069, %v4940
        %v5200 = vsel %vm5106, %v5071, %v4942
        %v5202 = vsel %vm5106, %v5073, %v4944
        %v5204 = vsel %vm5106, %v5075, %v4946
        %v5206 = vsel %vm5106, %v5077, %v4948
        %v5208 = vsel %vm5106, %v5079, %v4950
        %v5210 = vsel %vm5106, %v5081, %v4952
        %v5212 = vsel %vm5106, %v5083, %v4954
        %v5214 = vsel %vm5106, %v5085, %v4956
        %v5216 = vsel %vm5106, %v5087, %v4958
        %v5218 = vsel %vm5106, %v5089, %v4960
        %v5220 = vsel %vm5106, %v5091, %v4962
        %v5222 = vsel %vm5106, %v5093, %v4964
        %v5224 = vsel %vm5106, %v5095, %v4966
        %v5226 = vsel %vm5106, %v5097, %v4968
        %v5228 = vsel %vm5106, %v5099, %v4970
        %v5230 = vsel %vm5106, %v5101, %v4972
        %v5232 = vsel %vm5106, %v5103, %v4974
        %v5234 = vsel %vm5106, %v5105, %v4976
        %v5235 = vld [vmem:[%s3] sm:$0xf]
        %v5300 = vunpack.c.l.b16 %v5108
        %v5301 = vunpack.c.l.b16 %v5110
        %v5302 = vunpack.c.l.b16 %v5112
        %v5303 = vunpack.c.l.b16 %v5114
        %v5304 = vunpack.c.l.b16 %v5116
        %v5305 = vunpack.c.l.b16 %v5118
        %v5306 = vunpack.c.l.b16 %v5120
        %v5307 = vunpack.c.l.b16 %v5122
        %v5308 = vunpack.c.l.b16 %v5124
        %v5309 = vunpack.c.l.b16 %v5126
        %v5310 = vunpack.c.l.b16 %v5128
        %v5311 = vunpack.c.l.b16 %v5130
        %v5312 = vunpack.c.l.b16 %v5132
        %v5313 = vunpack.c.l.b16 %v5134
        %v5314 = vunpack.c.l.b16 %v5136
        %v5315 = vunpack.c.l.b16 %v5138
        %v5316 = vunpack.c.l.b16 %v5140
        %v5317 = vunpack.c.l.b16 %v5142
        %v5318 = vunpack.c.l.b16 %v5144
        %v5319 = vunpack.c.l.b16 %v5146
        %v5320 = vunpack.c.l.b16 %v5148
        %v5321 = vunpack.c.l.b16 %v5150
        %v5322 = vunpack.c.l.b16 %v5152
        %v5323 = vunpack.c.l.b16 %v5154
        %v5324 = vunpack.c.l.b16 %v5156
        %v5325 = vunpack.c.l.b16 %v5158
        %v5326 = vunpack.c.l.b16 %v5160
        %v5327 = vunpack.c.l.b16 %v5162
        %v5328 = vunpack.c.l.b16 %v5164
        %v5329 = vunpack.c.l.b16 %v5166
        %v5330 = vunpack.c.l.b16 %v5168
        %v5331 = vunpack.c.l.b16 %v5170
        %v5332 = vunpack.c.l.b16 %v5172
        %v5333 = vunpack.c.l.b16 %v5174
        %v5334 = vunpack.c.l.b16 %v5176
        %v5335 = vunpack.c.l.b16 %v5178
        %v5336 = vunpack.c.l.b16 %v5180
        %v5337 = vunpack.c.l.b16 %v5182
        %v5338 = vunpack.c.l.b16 %v5184
        %v5339 = vunpack.c.l.b16 %v5186
        %v5340 = vunpack.c.l.b16 %v5188
        %v5341 = vunpack.c.l.b16 %v5190
        %v5342 = vunpack.c.l.b16 %v5192
        %v5343 = vunpack.c.l.b16 %v5194
        %v5344 = vunpack.c.l.b16 %v5196
        %v5345 = vunpack.c.l.b16 %v5198
        %v5346 = vunpack.c.l.b16 %v5200
        %v5347 = vunpack.c.l.b16 %v5202
        %v5348 = vunpack.c.l.b16 %v5204
        %v5349 = vunpack.c.l.b16 %v5206
        %v5350 = vunpack.c.l.b16 %v5208
        %v5351 = vunpack.c.l.b16 %v5210
        %v5352 = vunpack.c.l.b16 %v5212
        %v5353 = vunpack.c.l.b16 %v5214
        %v5354 = vunpack.c.l.b16 %v5216
        %v5355 = vunpack.c.l.b16 %v5218
        %v5356 = vunpack.c.l.b16 %v5220
        %v5357 = vunpack.c.l.b16 %v5222
        %v5358 = vunpack.c.l.b16 %v5224
        %v5359 = vunpack.c.l.b16 %v5226
        %v5360 = vunpack.c.l.b16 %v5228
        %v5361 = vunpack.c.l.b16 %v5230
        %v5362 = vunpack.c.l.b16 %v5232
        %v5363 = vunpack.c.l.b16 %v5234
        %v5364 = vpack.c.b16 %v5301, %v5300
        %v5365 = vpack.c.b16 %v5303, %v5302
        %v5366 = vpack.c.b16 %v5305, %v5304
        %v5367 = vpack.c.b16 %v5307, %v5306
        %v5368 = vpack.c.b16 %v5309, %v5308
        %v5369 = vpack.c.b16 %v5311, %v5310
        %v5370 = vpack.c.b16 %v5313, %v5312
        %v5371 = vpack.c.b16 %v5315, %v5314
        %v5372 = vpack.c.b16 %v5317, %v5316
        %v5373 = vpack.c.b16 %v5319, %v5318
        %v5374 = vpack.c.b16 %v5321, %v5320
        %v5375 = vpack.c.b16 %v5323, %v5322
        %v5376 = vpack.c.b16 %v5325, %v5324
        %v5377 = vpack.c.b16 %v5327, %v5326
        %v5378 = vpack.c.b16 %v5329, %v5328
        %v5379 = vpack.c.b16 %v5331, %v5330
        %v5380 = vpack.c.b16 %v5333, %v5332
        %v5381 = vpack.c.b16 %v5335, %v5334
        %v5382 = vpack.c.b16 %v5337, %v5336
        %v5383 = vpack.c.b16 %v5339, %v5338
        %v5384 = vpack.c.b16 %v5341, %v5340
        %v5385 = vpack.c.b16 %v5343, %v5342
        %v5386 = vpack.c.b16 %v5345, %v5344
        %v5387 = vpack.c.b16 %v5347, %v5346
        %v5388 = vpack.c.b16 %v5349, %v5348
        %v5389 = vpack.c.b16 %v5351, %v5350
        %v5390 = vpack.c.b16 %v5353, %v5352
        %v5391 = vpack.c.b16 %v5355, %v5354
        %v5392 = vpack.c.b16 %v5357, %v5356
        %v5393 = vpack.c.b16 %v5359, %v5358
        %v5394 = vpack.c.b16 %v5361, %v5360
        %v5395 = vpack.c.b16 %v5363, %v5362
        %vm5396 = vcmask 883712
        %v5398 = vsel %vm5396, %v5235, 0
        %v5401 = vsel %vm5396, %v5364, 0
        %v5404 = vsel %vm5396, %v5365, 0
        %v5407 = vsel %vm5396, %v5366, 0
        %v5410 = vsel %vm5396, %v5367, 0
        %v5413 = vsel %vm5396, %v5368, 0
        %v5416 = vsel %vm5396, %v5369, 0
        %v5419 = vsel %vm5396, %v5370, 0
        %v5422 = vsel %vm5396, %v5371, 0
        %v5425 = vsel %vm5396, %v5372, 0
        %v5428 = vsel %vm5396, %v5373, 0
        %v5431 = vsel %vm5396, %v5374, 0
        %v5434 = vsel %vm5396, %v5375, 0
        %v5437 = vsel %vm5396, %v5376, 0
        %v5440 = vsel %vm5396, %v5377, 0
        %v5443 = vsel %vm5396, %v5378, 0
        %v5446 = vsel %vm5396, %v5379, 0
        %v5449 = vsel %vm5396, %v5380, 0
        %v5452 = vsel %vm5396, %v5381, 0
        %v5455 = vsel %vm5396, %v5382, 0
        %v5458 = vsel %vm5396, %v5383, 0
        %v5461 = vsel %vm5396, %v5384, 0
        %v5464 = vsel %vm5396, %v5385, 0
        %v5467 = vsel %vm5396, %v5386, 0
        %v5470 = vsel %vm5396, %v5387, 0
        %v5473 = vsel %vm5396, %v5388, 0
        %v5476 = vsel %vm5396, %v5389, 0
        %v5479 = vsel %vm5396, %v5390, 0
        %v5482 = vsel %vm5396, %v5391, 0
        %v5485 = vsel %vm5396, %v5392, 0
        %v5488 = vsel %vm5396, %v5393, 0
        %v5491 = vsel %vm5396, %v5394, 0
        %v5494 = vsel %vm5396, %v5395, 0
        %5496 = vmatprep.subr.bf16.mxu0 0
        %5497 = vmatpush1.bf16.xpose.msra.mxu0 %v5401
        %5498 = vmatprep.subr.bf16.mxu0 0
        %5499 = vmatpush1.bf16.xpose.msra.mxu0 %v5404
        %5500 = vmatprep.subr.bf16.mxu0 0
        %5501 = vmatpush1.bf16.xpose.msra.mxu0 %v5407
        %5502 = vmatprep.subr.bf16.mxu0 0
        %5503 = vmatpush1.bf16.xpose.msra.mxu0 %v5410
        %5504 = vmatprep.subr.bf16.mxu0 0
        %5505 = vmatpush1.bf16.xpose.msra.mxu0 %v5413
        %5506 = vmatprep.subr.bf16.mxu0 0
        %5507 = vmatpush1.bf16.xpose.msra.mxu0 %v5416
        %5508 = vmatprep.subr.bf16.mxu0 0
        %5509 = vmatpush1.bf16.xpose.msra.mxu0 %v5419
        %5510 = vmatprep.subr.bf16.mxu0 0
        %5511 = vmatpush1.bf16.xpose.msra.mxu0 %v5422
        %5512 = vmatprep.subr.bf16.mxu0 0
        %5513 = vmatpush1.bf16.xpose.msra.mxu0 %v5425
        %5514 = vmatprep.subr.bf16.mxu0 0
        %5515 = vmatpush1.bf16.xpose.msra.mxu0 %v5428
        %5516 = vmatprep.subr.bf16.mxu0 0
        %5517 = vmatpush1.bf16.xpose.msra.mxu0 %v5431
        %5518 = vmatprep.subr.bf16.mxu0 0
        %5519 = vmatpush1.bf16.xpose.msra.mxu0 %v5434
        %5520 = vmatprep.subr.bf16.mxu0 0
        %5521 = vmatpush1.bf16.xpose.msra.mxu0 %v5437
        %5522 = vmatprep.subr.bf16.mxu0 0
        %5523 = vmatpush1.bf16.xpose.msra.mxu0 %v5440
        %5524 = vmatprep.subr.bf16.mxu0 0
        %5525 = vmatpush1.bf16.xpose.msra.mxu0 %v5443
        %5526 = vmatprep.subr.bf16.mxu0 0
        %5527 = vmatpush1.bf16.xpose.msra.mxu0 %v5446
        %5528 = vmatprep.mubr.bf16.mxu0 0
        %5529 = vmatmul.mubr.bf16.gmra.mrb[0].mxu0 %v5398
        %v5530 = vpop.f32.mrb[0].mxu0
        %v5531 = vadd.f32 0.0, %v5530
        %v5532 = vpop.f32.mrb[0].mxu0
        %v5533 = vadd.f32 0.0, %v5532
        %v5534 = vpop.f32.mrb[0].mxu0
        %v5535 = vpop.f32.mrb[0].mxu0
        %5536 = vdwg.mxu0
        %5537 = vmatprep.subr.bf16.mxu0 0
        %5538 = vmatpush1.bf16.xpose.msra.mxu0 %v5449
        %5539 = vmatprep.subr.bf16.mxu0 0
        %5540 = vmatpush1.bf16.xpose.msra.mxu0 %v5452
        %5541 = vmatprep.subr.bf16.mxu0 0
        %5542 = vmatpush1.bf16.xpose.msra.mxu0 %v5455
        %5543 = vmatprep.subr.bf16.mxu0 0
        %5544 = vmatpush1.bf16.xpose.msra.mxu0 %v5458
        %5545 = vmatprep.subr.bf16.mxu0 0
        %5546 = vmatpush1.bf16.xpose.msra.mxu0 %v5461
        %5547 = vmatprep.subr.bf16.mxu0 0
        %5548 = vmatpush1.bf16.xpose.msra.mxu0 %v5464
        %5549 = vmatprep.subr.bf16.mxu0 0
        %5550 = vmatpush1.bf16.xpose.msra.mxu0 %v5467
        %5551 = vmatprep.subr.bf16.mxu0 0
        %5552 = vmatpush1.bf16.xpose.msra.mxu0 %v5470
        %5553 = vmatprep.subr.bf16.mxu0 0
        %5554 = vmatpush1.bf16.xpose.msra.mxu0 %v5473
        %5555 = vmatprep.subr.bf16.mxu0 0
        %5556 = vmatpush1.bf16.xpose.msra.mxu0 %v5476
        %5557 = vmatprep.subr.bf16.mxu0 0
        %5558 = vmatpush1.bf16.xpose.msra.mxu0 %v5479
        %5559 = vmatprep.subr.bf16.mxu0 0
        %5560 = vmatpush1.bf16.xpose.msra.mxu0 %v5482
        %5561 = vmatprep.subr.bf16.mxu0 0
        %5562 = vmatpush1.bf16.xpose.msra.mxu0 %v5485
        %5563 = vmatprep.subr.bf16.mxu0 0
        %5564 = vmatpush1.bf16.xpose.msra.mxu0 %v5488
        %5565 = vmatprep.subr.bf16.mxu0 0
        %5566 = vmatpush1.bf16.xpose.msra.mxu0 %v5491
        %5567 = vmatprep.subr.bf16.mxu0 0
        %5568 = vmatpush1.bf16.xpose.msra.mxu0 %v5494
        %5569 = vmatprep.mubr.bf16.mxu0 0
        %5570 = vmatmul.mubr.bf16.gmra.mrb[0].mxu0 %v5398
        %v5571 = vpop.f32.mrb[0].mxu0
        %v5572 = vadd.f32 0.0, %v5571
        %v5573 = vpop.f32.mrb[0].mxu0
        %v5574 = vadd.f32 0.0, %v5573
        %v5575 = vpop.f32.mrb[0].mxu0
        %v5576 = vpop.f32.mrb[0].mxu0
        %5577 = vdwg.mxu0
        %v5578 = vld [vmem:[%s4] sm:$0xff]
        %5580 = vset.pattern.permute.xlu0 0
        %5581 = vperm.xlu0 %5580, %v5578
        %v5582 = vpop.permute.xlu0 %5581
        %v5584 = vmul.f32 %v5531, %v5582
        %v5585 = vmul.f32 %v5533, %v5582
        %v5586 = vmul.f32 %v5572, %v5582
        %v5587 = vmul.f32 %v5574, %v5582
        %v5588 = vld [vmem:[%s5] sm:$0xff]
        %5590 = vset.pattern.permute.xlu0 0
        %5591 = vperm.xlu0 %5590, %v5588
        %v5592 = vpop.permute.xlu0 %5591
        %v5594 = vadd.f32 %v5584, %v5592
        %v5595 = vadd.f32 %v5585, %v5592
        %v5596 = vadd.f32 %v5586, %v5592
        %v5597 = vadd.f32 %v5587, %v5592
        %v5598 = vmax.f32 %v5594, 0.0
        %v5599 = vmax.f32 %v5595, 0.0
        %v5600 = vmax.f32 %v5596, 0.0
        %v5601 = vmax.f32 %v5597, 0.0
        %v5602 = vpack.c.bf16 %v5598, %v5598
        %v5603 = vpack.c.bf16 %v5599, %v5599
        %v5604 = vpack.c.bf16 %v5600, %v5600
        %v5605 = vpack.c.bf16 %v5601, %v5601
        %v5610 = vunpack.c.l.b16 %v5602
        %v5611 = vunpack.c.l.b16 %v5603
        %v5612 = vunpack.c.l.b16 %v5604
        %v5613 = vunpack.c.l.b16 %v5605
        %v5614 = vpack.c.b16 %v5611, %v5610
        %v5615 = vpack.c.b16 %v5613, %v5612
        %5618 = vst [vmem:[%s359] sm:$0xff] %v5614
        %5619 = vst [vmem:[%s359 + $0x8] sm:$0xff] %v5615
        %s5620 = sand.u32 %s197, 1
        %s5621 = scalar_lea.sflag [#allocation3], %s5620
        %s5622 = sand.u32 %s197, 1
        %s5623 = smul.addr %s5622, 16
        %s5624 = scalar_lea.vmem [#allocation2], %s5623
        // Predicated region
        $region45: #{tpu_custom_call.1} parent=43 // pred_check
          %p5625 = pneg %p207
        $region46: #{tpu_custom_call.1} parent=43 // pred_check_branch
          %5627 = sbr.rel (%p5625) target = $region48
        $region47: #{tpu_custom_call.1} parent=43 // pred_region
          %s5628 = smul.u32 4, %s25
          %s5630 = ssub.s32 256, 256
          %5631 = vsyncadd %s5621, %s5630
          %s5632 = smul.addr %s24, 4
          %s5633 = sadd.s32 %s5628, %s5632
          %s5634 = smul.addr %s5633, 64
          %s5635 = scalar_lea.hbm %s6, %s5634
          %s5637 = sshll.u32 %s5624, 4
          %s5638 = int_to_ptr.vmem [resolvable:$true] %s5637
          %5640 = dma.vmem_to_hbm [thread:$0]  %s5638, 256, %s5635, %s5621
        $region48: #{tpu_custom_call.1} parent=43 // pred_fallthru
          _
      $region44: #{tpu_custom_call.1} parent=5 // pred_fallthru
        _
      %p5641 = scmp.le.s32.totalorder 2, %s15
      // Predicated region
      $region49: #{tpu_custom_call.1} parent=5 // pred_check
        %p5642 = pneg %p5641
      $region50: #{tpu_custom_call.1} parent=5 // pred_check_branch
        %5644 = sbr.rel (%p5642) target = $region52
      $region51: #{tpu_custom_call.1} parent=5 // pred_region
        %s5645 = ssub.s32 %s15, 2
        // Predicated region
        $region53: #{tpu_custom_call.1} parent=51 // pred_check
          %p5646 = pneg %p213
        $region54: #{tpu_custom_call.1} parent=51 // pred_check_branch
          %5648 = sbr.rel (%p5646) target = $region56
        $region55: #{tpu_custom_call.1} parent=51 // pred_region
          %s5649 = sand.u32 %s198, 1
          %s5650 = scalar_lea.sflag [#allocation3], %s5649
          %s5651 = sand.u32 %s198, 1
          %s5652 = smul.addr %s5651, 16
          %s5653 = scalar_lea.vmem [#allocation2], %s5652
          %5654 = dma.done %s5650, 256
        $region56: #{tpu_custom_call.1} parent=51 // pred_fallthru
          _
      $region52: #{tpu_custom_call.1} parent=5 // pred_fallthru
        _
    $region6: #{tpu_custom_call.1} parent=1 // loop_footer
      %s19 = sadd.s32 1, %s15
    $region7: #{tpu_custom_call.1} parent=1 // loop_footer_branch
      %14 = sbr.rel target = $region3
    $region8: #{tpu_custom_call.1} parent=1 // loop_exit
      _
    %5655 = vsyncpa [#allocation3], 1
    %s5656 = scalar_lea.sflag [#allocation3], 1
    %5657 = vsyncpa %s5656, 1

</llo_original>
